<compile_context>
chip_gen: v6e
topology: v6e:2x2x1
jax: 0.10.0
libtpu: 0.0.40
codegen_flags: <defaults>
</compile_context>

<pallas_src>
import jax
import jax.numpy as jnp
from jax.experimental import pallas as pl
from jax.experimental.pallas import tpu as pltpu


# ---------------------------------------------------------------------------
# Kernel
# ---------------------------------------------------------------------------
def _make_attention_kernel(lane_dense_out, mxu_dtype):
    def attention_kernel(x_ref, w1_ref, b1_ref, w2_ref, b2_ref, o_ref):
        # x_ref : (Bt, L, Din) f32 block of batch elements
        # w1_ref: (Din, Dd) mxu_dtype (pre-transposed);  b1_ref: (1, Dd) f32
        # w2_ref: (Dd, H)   mxu_dtype (pre-transposed);  b2_ref: (1, H)  f32
        # o_ref : (Bt, H, L) if lane_dense_out else (Bt, L, H)
        bt, seq, din = x_ref.shape
        n_heads = w2_ref.shape[1]

        # Flatten (Bt, L, Din) -> (Bt*L, Din) so both Linear layers run as one
        # big MXU slab.  This is a pure-layout reshape only when L % 8 == 0
        # (each batch element spans whole sublane tiles); for other L, Mosaic
        # materialises a copy each step -- pad L upstream if that matters.
        x2d = x_ref[...].reshape(bt * seq, din)

        # fc1 + tanh.  Matmul operands in mxu_dtype (bf16 by default -> native
        # MXU throughput, half the weight DMA bytes); accumulation and all
        # elementwise math in f32 (v5e has no bf16 VALU/EUP).
        h = jnp.tanh(
            jnp.dot(x2d.astype(mxu_dtype), w1_ref[...],
                    preferred_element_type=jnp.float32)
            + b1_ref[...])                                    # (Bt*L, Dd) f32

        # fc2.  tanh output is bounded in [-1, 1], safe to cast down.
        z2d = (jnp.dot(h.astype(mxu_dtype), w2_ref[...],
                       preferred_element_type=jnp.float32)
               + b2_ref[...])                                 # (Bt*L, H) f32

        # Softmax over the sequence axis, per batch element / head.
        # NOTE: only valid because the whole sequence L lives in this block;
        # tiling L across the grid would need an online (running max/sum) form.
        z3 = z2d.reshape(bt, seq, n_heads)                    # (Bt, L, H)
        if lane_dense_out:
            # Transpose to (Bt, H, L) *before* the softmax: elementwise
            # exp/sub/mul then run on the compact H-sublane / L-lane layout
            # (H pads to 8 sublanes instead of padding H up to 128 lanes), and
            # the store is lane-dense in L.
            zt = jnp.swapaxes(z3, 1, 2)                       # (Bt, H, L)
            m = jnp.max(zt, axis=-1, keepdims=True)
            e = jnp.exp(zt - m)
            denom = jnp.sum(e, axis=-1, keepdims=True)
            o_ref[...] = (e * (1.0 / denom)).astype(o_ref.dtype)
        else:
            m = jnp.max(z3, axis=1, keepdims=True)
            e = jnp.exp(z3 - m)
            denom = jnp.sum(e, axis=1, keepdims=True)
            o_ref[...] = (e * (1.0 / denom)).astype(o_ref.dtype)

    return attention_kernel


# ---------------------------------------------------------------------------
# Padded-size VMEM budgeting + generation-aware block selection
# ---------------------------------------------------------------------------
def _round_up(v, m):
    return -(-v // m) * m


def _padded_tile_bytes(outer, sub, lane, itemsize):
    """VMEM bytes of an (outer, sub, lane) tile after TPU padding:
    lane dim -> multiple of 128; sublane dim -> multiple of 8 (f32) / 16 (bf16)."""
    sub_mult = 8 * (4 // itemsize)
    return outer * _round_up(sub, sub_mult) * _round_up(lane, 128) * itemsize


def _block_vmem_bytes(block_b, L, Din, H, x_itemsize):
    x_b = _padded_tile_bytes(block_b, L, Din, x_itemsize)
    out_dense = _padded_tile_bytes(block_b, H, L, 4)      # (Bt, H, L) output
    out_wide = _padded_tile_bytes(block_b, L, H, 4)       # fallback (Bt, L, H)
    return x_b + max(out_dense, out_wide)


def _weights_vmem_bytes(Din, Dd, H, w_itemsize):
    return (_padded_tile_bytes(1, Din, Dd, w_itemsize)
            + _padded_tile_bytes(1, Dd, H, w_itemsize)
            + _padded_tile_bytes(1, 1, Dd, 4)
            + _padded_tile_bytes(1, 1, H, 4))


def _tpu_config():
    """Returns (n_tensorcores, per-core VMEM working budget in bytes)."""
    gen = None
    try:
        kind = jax.devices()[0].device_kind.lower()
        if "v4" in kind:
            gen = 4
        elif "v5" in kind:
            gen = 5
        elif "v6" in kind:
            gen = 6
        elif "7" in kind:
            gen = 7
    except Exception:
        gen = None
    if gen == 7:
        return 2, 48 << 20    # 2 TCs; 64 MiB per-TC VMEM minus headroom
    if gen in (4, 5, 6):
        return 1, 96 << 20    # 1 TC; 128 MiB VMEM minus headroom
    return 1, 40 << 20        # unknown generation: conservative


def _pick_block_b(B, L, Din, Dd, H, x_itemsize, w_itemsize, n_cores,
                  vmem_budget, target_rows=768):
    """Largest sensible batch block: padded tiles (double-buffered) must fit
    the per-generation VMEM budget; on 1-TC chips prefer a single grid step;
    on 2-TC chips prefer an even number of >=2 parallel steps; bias Bt*L
    toward the 512-1024 row range (measured HBM-roofline sweet spot)."""
    weights = 2 * _weights_vmem_bytes(Din, Dd, H, w_itemsize)   # worst case
    avail = vmem_budget - weights - (2 << 20)
    divisors = [d for d in range(1, B + 1) if B % d == 0]
    fits = [d for d in divisors
            if 2 * _block_vmem_bytes(d, L, Din, H, x_itemsize) <= avail]
    if not fits:
        # Even one batch element over-fills the budget (huge L*Din).  The
        # softmax needs the full sequence resident, so take block_b=1 and let
        # vmem_limit_bytes grow; the compiler will complain if it cannot fit.
        return 1

    def score(d):
        steps = B // d
        rows = d * L
        rows_score = -abs(rows - target_rows)
        if n_cores > 1:
            balanced = (steps >= n_cores) and (steps % n_cores == 0)
            return (balanced, rows_score, -steps)
        # Single TensorCore: extra grid steps are pure overhead -> fewest
        # steps first (ideally one), then the row target.
        return (-steps, rows_score)

    return max(fits, key=score)


# ---------------------------------------------------------------------------
# Wrapper
# ---------------------------------------------------------------------------
def attention_forward(x, w1, b1, w2, b2, *, block_b=None,
                      mxu_dtype=jnp.bfloat16):
    """x: (B, L, Din) f32; w1: (Dd, Din); b1: (Dd,); w2: (H, Dd); b2: (H,).
    Returns (B, H, L), matching the PyTorch module.  mxu_dtype controls the
    matmul-operand precision (bf16 default; pass jnp.float32 for exact f32
    parity with the reference module)."""
    B, L, Din = x.shape
    Dd = w1.shape[0]
    H = w2.shape[0]

    w_itemsize = jnp.dtype(mxu_dtype).itemsize
    n_cores, vmem_budget = _tpu_config()
    if block_b is None:
        block_b = _pick_block_b(B, L, Din, Dd, H, x.dtype.itemsize,
                                w_itemsize, n_cores, vmem_budget)
    if B % block_b != 0:
        raise ValueError("block_b must divide the batch size")
    grid = (B // block_b,)

    # vmem_limit from the *padded* need (double-buffered blocks + weights).
    need = (2 * _block_vmem_bytes(block_b, L, Din, H, x.dtype.itemsize)
            + 2 * _weights_vmem_bytes(Din, Dd, H, w_itemsize)
            + (4 << 20))
    vmem_limit = int(max(32 << 20, need))

    # Glue (cheap, once): pre-transpose weights, cast them to the MXU dtype;
    # biases stay f32 (all non-matmul math is f32).
    w1_t = jnp.transpose(w1).astype(mxu_dtype)          # (Din, Dd)
    w2_t = jnp.transpose(w2).astype(mxu_dtype)          # (Dd, H)
    b1_2d = b1.reshape(1, Dd).astype(jnp.float32)
    b2_2d = b2.reshape(1, H).astype(jnp.float32)

    cost = pl.CostEstimate(
        flops=2 * B * L * (Din * Dd + Dd * H),
        transcendentals=B * L * (Dd + H),                # tanh + exp
        bytes_accessed=int(B * L * Din * x.dtype.itemsize
                           + (Din * Dd + Dd * H) * w_itemsize
                           + (Dd + H) * 4
                           + B * H * L * 4),
    )

    def run(lane_dense_out, single_buffer_weights):
        # Grid-invariant weights/biases: single-buffered (index_map constant,
        # double-buffering them only burns VMEM).
        wkw = ({"pipeline_mode": pl.Buffered(1)}
               if single_buffer_weights else {})
        in_specs = [
            pl.BlockSpec((block_b, L, Din), lambda b: (b, 0, 0)),
            pl.BlockSpec((Din, Dd), lambda b: (0, 0), **wkw),
            pl.BlockSpec((1, Dd), lambda b: (0, 0), **wkw),
            pl.BlockSpec((Dd, H), lambda b: (0, 0), **wkw),
            pl.BlockSpec((1, H), lambda b: (0, 0), **wkw),
        ]
        if lane_dense_out:
            out_shape = jax.ShapeDtypeStruct((B, H, L), jnp.float32)
            out_spec = pl.BlockSpec((block_b, H, L), lambda b: (b, 0, 0))
        else:
            out_shape = jax.ShapeDtypeStruct((B, L, H), jnp.float32)
            out_spec = pl.BlockSpec((block_b, L, H), lambda b: (b, 0, 0))

        out = pl.pallas_call(
            _make_attention_kernel(lane_dense_out, mxu_dtype),
            out_shape=out_shape,
            grid_spec=pltpu.PrefetchScalarGridSpec(
                num_scalar_prefetch=0,
                grid=grid,
                in_specs=in_specs,
                out_specs=out_spec,
            ),
            compiler_params=pltpu.CompilerParams(
                dimension_semantics=("parallel",),       # megacore-shardable
                vmem_limit_bytes=vmem_limit,
            ),
            cost_estimate=cost,
        )(x, w1_t, b1_2d, w2_t, b2_2d)

        if not lane_dense_out:
            # Compatibility path: transpose hoisted to the wrapper.
            out = jnp.transpose(out, (0, 2, 1))
        return out

    try:
        # Preferred path: lane-dense (B, H, L) output via an in-kernel
        # minor-dim transpose + single-buffered resident weights.
        return run(lane_dense_out=True, single_buffer_weights=True)
    except Exception:
        # Fallback for toolchains that reject the in-kernel transpose or
        # Buffered(1): the previously-validated (B, L, H) + wrapper-transpose
        # structure with default double-buffering.
        return run(lane_dense_out=False, single_buffer_weights=False)


# ---------------------------------------------------------------------------
# Pure-JAX reference (mirrors the PyTorch forward)
# ---------------------------------------------------------------------------
def attention_reference(x, w1, b1, w2, b2, *, mxu_dtype=None):
    """If mxu_dtype is given, matmul operands are cast the same way the kernel
    does, so the comparison isolates kernel structure from bf16 rounding."""
    def c(a):
        return a if mxu_dtype is None else a.astype(mxu_dtype)
    h = jnp.tanh(jnp.einsum("bld,kd->blk", c(x), c(w1),
                            preferred_element_type=jnp.float32) + b1)
    z = jnp.einsum("blk,hk->blh", c(h), c(w2),
                   preferred_element_type=jnp.float32) + b2
    s = jax.nn.softmax(z, axis=1)                          # softmax over L
    return jnp.transpose(s, (0, 2, 1))                     # (B, H, L)


if __name__ == "__main__":
    # Small shapes consistent with the module's forward:
    #   input_dim=32, dense_dim=16, n_heads=4, seq=8, batch=32
    B, L = 32, 8
    input_dim, dense_dim, n_heads = 32, 16, 4

    key = jax.random.PRNGKey(0)
    kx, kw1, kb1, kw2, kb2 = jax.random.split(key, 5)

    x = jax.random.normal(kx, (B, L, input_dim), dtype=jnp.float32)

    # Deterministic parameter init (uniform, like nn.Linear's default range).
    bound1 = 1.0 / (input_dim ** 0.5)
    w1 = jax.random.uniform(kw1, (dense_dim, input_dim), jnp.float32, -bound1, bound1)
    b1 = jax.random.uniform(kb1, (dense_dim,), jnp.float32, -bound1, bound1)
    bound2 = 1.0 / (dense_dim ** 0.5)
    w2 = jax.random.uniform(kw2, (n_heads, dense_dim), jnp.float32, -bound2, bound2)
    b2 = jax.random.uniform(kb2, (n_heads,), jnp.float32, -bound2, bound2)

    out = attention_forward(x, w1, b1, w2, b2)
    out = jax.block_until_ready(out)
    assert out.shape == (B, n_heads, L)

    # Tight check against a reference using the same bf16 MXU-operand casts.
    ref_matched = attention_reference(x, w1, b1, w2, b2, mxu_dtype=jnp.bfloat16)
    assert jnp.allclose(out, ref_matched, atol=2e-4, rtol=2e-4), \
        "mismatch vs bf16-matched reference"

    # Loose check against the exact-f32 PyTorch-equivalent reference
    # (bf16 MXU operands are the only deviation from f32 semantics).
    ref_f32 = attention_reference(x, w1, b1, w2, b2)
    assert jnp.allclose(out, ref_f32, atol=2e-2, rtol=2e-2), \
        "mismatch vs f32 reference"

    print("KERNEL_OK")
</pallas_src>

<mosaic_0001>
module attributes {stable_mosaic.version = 11 : i64} {
  func.func @attention_kernel(%arg0: i32, %arg1: memref<32x8x32xf32, #tpu.memory_space<vmem>>, %arg2: memref<32x16xbf16, #tpu.memory_space<vmem>>, %arg3: memref<1x16xf32, #tpu.memory_space<vmem>>, %arg4: memref<16x4xbf16, #tpu.memory_space<vmem>>, %arg5: memref<1x4xf32, #tpu.memory_space<vmem>>, %arg6: memref<32x4x8xf32, #tpu.memory_space<vmem>>) attributes {dimension_semantics = [#tpu.dimension_semantics<parallel>], iteration_bounds = array<i64: 1>, scalar_prefetch = 0 : i64, scratch_operands = 0 : i64, tpu.core_type = #tpu.core_type<tc>, window_params = [{transform_indices = @transform_0, window_bounds = array<i64: 32, 8, 32>}, {pipeline_mode = #tpu.pipeline_mode<synchronous>, transform_indices = @transform_1, window_bounds = array<i64: 32, 16>}, {pipeline_mode = #tpu.pipeline_mode<synchronous>, transform_indices = @transform_2, window_bounds = array<i64: 1, 16>}, {pipeline_mode = #tpu.pipeline_mode<synchronous>, transform_indices = @transform_3, window_bounds = array<i64: 16, 4>}, {pipeline_mode = #tpu.pipeline_mode<synchronous>, transform_indices = @transform_4, window_bounds = array<i64: 1, 4>}, {transform_indices = @transform_5, window_bounds = array<i64: 32, 4, 8>}]} {
    %c0 = arith.constant 0 : index
    %c0_0 = arith.constant 0 : index
    %c0_1 = arith.constant 0 : index
    %0 = vector.load %arg1[%c0, %c0_0, %c0_1] : memref<32x8x32xf32, #tpu.memory_space<vmem>>, vector<32x8x32xf32>
    %1 = vector.shape_cast %0 : vector<32x8x32xf32> to vector<256x32xf32>
    %2 = arith.truncf %1 : vector<256x32xf32> to vector<256x32xbf16>
    %c0_2 = arith.constant 0 : index
    %c0_3 = arith.constant 0 : index
    %3 = vector.load %arg2[%c0_2, %c0_3] : memref<32x16xbf16, #tpu.memory_space<vmem>>, vector<32x16xbf16>
    %cst = arith.constant dense<0.000000e+00> : vector<256x16xf32>
    %4 = tpu.matmul %2, %3, %cst {dimension_numbers = #tpu.dot_dimension_numbers<[1], [0], [0], [1], [0, 0, 1, 1], [], []>} : vector<256x32xbf16>, vector<32x16xbf16>, vector<256x16xf32> -> vector<256x16xf32>
    %c0_4 = arith.constant 0 : index
    %c0_5 = arith.constant 0 : index
    %5 = vector.load %arg3[%c0_4, %c0_5] : memref<1x16xf32, #tpu.memory_space<vmem>>, vector<1x16xf32>
    %6 = vector.broadcast %5 : vector<1x16xf32> to vector<256x16xf32>
    %7 = arith.addf %4, %6 : vector<256x16xf32>
    %8 = math.tanh %7 : vector<256x16xf32>
    %9 = arith.truncf %8 : vector<256x16xf32> to vector<256x16xbf16>
    %c0_6 = arith.constant 0 : index
    %c0_7 = arith.constant 0 : index
    %10 = vector.load %arg4[%c0_6, %c0_7] : memref<16x4xbf16, #tpu.memory_space<vmem>>, vector<16x4xbf16>
    %cst_8 = arith.constant dense<0.000000e+00> : vector<256x4xf32>
    %11 = tpu.matmul %9, %10, %cst_8 {dimension_numbers = #tpu.dot_dimension_numbers<[1], [0], [0], [1], [0, 0, 1, 1], [], []>} : vector<256x16xbf16>, vector<16x4xbf16>, vector<256x4xf32> -> vector<256x4xf32>
    %c0_9 = arith.constant 0 : index
    %c0_10 = arith.constant 0 : index
    %12 = vector.load %arg5[%c0_9, %c0_10] : memref<1x4xf32, #tpu.memory_space<vmem>>, vector<1x4xf32>
    %13 = vector.broadcast %12 : vector<1x4xf32> to vector<256x4xf32>
    %14 = arith.addf %11, %13 : vector<256x4xf32>
    %15 = vector.shape_cast %14 : vector<256x4xf32> to vector<32x8x4xf32>
    %16 = tpu.transpose %15, [0, 2, 1] : vector<32x8x4xf32> -> vector<32x4x8xf32>
    %cst_11 = arith.constant dense<0xFF800000> : vector<32x4xf32>
    %17 = vector.multi_reduction <maximumf>, %16, %cst_11 [2] : vector<32x4x8xf32> to vector<32x4xf32>
    %18 = vector.shape_cast %17 : vector<32x4xf32> to vector<32x4x1xf32>
    %19 = vector.broadcast %18 : vector<32x4x1xf32> to vector<32x4x8xf32>
    %20 = arith.subf %16, %19 : vector<32x4x8xf32>
    %21 = math.exp %20 : vector<32x4x8xf32>
    %cst_12 = arith.constant dense<0.000000e+00> : vector<32x4xf32>
    %22 = vector.multi_reduction <add>, %21, %cst_12 [2] : vector<32x4x8xf32> to vector<32x4xf32>
    %23 = vector.shape_cast %22 : vector<32x4xf32> to vector<32x4x1xf32>
    %cst_13 = arith.constant 1.000000e+00 : f32
    %24 = vector.broadcast %cst_13 : f32 to vector<32x4x1xf32>
    %25 = arith.divf %24, %23 : vector<32x4x1xf32>
    %26 = vector.broadcast %25 : vector<32x4x1xf32> to vector<32x4x8xf32>
    %27 = arith.mulf %21, %26 : vector<32x4x8xf32>
    %c0_14 = arith.constant 0 : index
    %c0_15 = arith.constant 0 : index
    %c0_16 = arith.constant 0 : index
    %28 = vector.load %arg6[%c0_14, %c0_15, %c0_16] : memref<32x4x8xf32, #tpu.memory_space<vmem>>, vector<32x4x8xf32>
    tpu.vector_store %arg6[%c0_14, %c0_15, %c0_16], %27 {strides = array<i32>} : memref<32x4x8xf32, #tpu.memory_space<vmem>>, vector<32x4x8xf32>,
    return
  }
  func.func @transform_0(%arg0: i32) -> (i32, i32, i32) {
    %c0_i32 = arith.constant 0 : i32
    %c0_i32_0 = arith.constant 0 : i32
    %c0_i32_1 = arith.constant 0 : i32
    return %arg0, %c0_i32, %c0_i32_0 : i32, i32, i32
  }
  func.func @transform_1(%arg0: i32) -> (i32, i32) {
    %c0_i32 = arith.constant 0 : i32
    %c0_i32_0 = arith.constant 0 : i32
    %c0_i32_1 = arith.constant 0 : i32
    return %c0_i32, %c0_i32_0 : i32, i32
  }
  func.func @transform_2(%arg0: i32) -> (i32, i32) {
    %c0_i32 = arith.constant 0 : i32
    %c0_i32_0 = arith.constant 0 : i32
    %c0_i32_1 = arith.constant 0 : i32
    return %c0_i32, %c0_i32_0 : i32, i32
  }
  func.func @transform_3(%arg0: i32) -> (i32, i32) {
    %c0_i32 = arith.constant 0 : i32
    %c0_i32_0 = arith.constant 0 : i32
    %c0_i32_1 = arith.constant 0 : i32
    return %c0_i32, %c0_i32_0 : i32, i32
  }
  func.func @transform_4(%arg0: i32) -> (i32, i32) {
    %c0_i32 = arith.constant 0 : i32
    %c0_i32_0 = arith.constant 0 : i32
    %c0_i32_1 = arith.constant 0 : i32
    return %c0_i32, %c0_i32_0 : i32, i32
  }
  func.func @transform_5(%arg0: i32) -> (i32, i32, i32) {
    %c0_i32 = arith.constant 0 : i32
    %c0_i32_0 = arith.constant 0 : i32
    %c0_i32_1 = arith.constant 0 : i32
    return %arg0, %c0_i32, %c0_i32_0 : i32, i32, i32
  }
}

module attributes {stable_mosaic.version = 11 : i64} {
  func.func @attention_kernel(%arg0: i32, %arg1: memref<32x8x32xf32, #tpu.memory_space<vmem>>, %arg2: memref<32x16xbf16, #tpu.memory_space<vmem>>, %arg3: memref<1x16xf32, #tpu.memory_space<vmem>>, %arg4: memref<16x4xbf16, #tpu.memory_space<vmem>>, %arg5: memref<1x4xf32, #tpu.memory_space<vmem>>, %arg6: memref<32x8x4xf32, #tpu.memory_space<vmem>>) attributes {dimension_semantics = [#tpu.dimension_semantics<parallel>], iteration_bounds = array<i64: 1>, scalar_prefetch = 0 : i64, scratch_operands = 0 : i64, tpu.core_type = #tpu.core_type<tc>, window_params = [{transform_indices = @transform_0, window_bounds = array<i64: 32, 8, 32>}, {pipeline_mode = #tpu.pipeline_mode<synchronous>, transform_indices = @transform_1, window_bounds = array<i64: 32, 16>}, {pipeline_mode = #tpu.pipeline_mode<synchronous>, transform_indices = @transform_2, window_bounds = array<i64: 1, 16>}, {pipeline_mode = #tpu.pipeline_mode<synchronous>, transform_indices = @transform_3, window_bounds = array<i64: 16, 4>}, {pipeline_mode = #tpu.pipeline_mode<synchronous>, transform_indices = @transform_4, window_bounds = array<i64: 1, 4>}, {transform_indices = @transform_5, window_bounds = array<i64: 32, 8, 4>}]} {
    %c0 = arith.constant 0 : index
    %c0_0 = arith.constant 0 : index
    %c0_1 = arith.constant 0 : index
    %0 = vector.load %arg1[%c0, %c0_0, %c0_1] : memref<32x8x32xf32, #tpu.memory_space<vmem>>, vector<32x8x32xf32>
    %1 = vector.shape_cast %0 : vector<32x8x32xf32> to vector<256x32xf32>
    %2 = arith.truncf %1 : vector<256x32xf32> to vector<256x32xbf16>
    %c0_2 = arith.constant 0 : index
    %c0_3 = arith.constant 0 : index
    %3 = vector.load %arg2[%c0_2, %c0_3] : memref<32x16xbf16, #tpu.memory_space<vmem>>, vector<32x16xbf16>
    %cst = arith.constant dense<0.000000e+00> : vector<256x16xf32>
    %4 = tpu.matmul %2, %3, %cst {dimension_numbers = #tpu.dot_dimension_numbers<[1], [0], [0], [1], [0, 0, 1, 1], [], []>} : vector<256x32xbf16>, vector<32x16xbf16>, vector<256x16xf32> -> vector<256x16xf32>
    %c0_4 = arith.constant 0 : index
    %c0_5 = arith.constant 0 : index
    %5 = vector.load %arg3[%c0_4, %c0_5] : memref<1x16xf32, #tpu.memory_space<vmem>>, vector<1x16xf32>
    %6 = vector.broadcast %5 : vector<1x16xf32> to vector<256x16xf32>
    %7 = arith.addf %4, %6 : vector<256x16xf32>
    %8 = math.tanh %7 : vector<256x16xf32>
    %9 = arith.truncf %8 : vector<256x16xf32> to vector<256x16xbf16>
    %c0_6 = arith.constant 0 : index
    %c0_7 = arith.constant 0 : index
    %10 = vector.load %arg4[%c0_6, %c0_7] : memref<16x4xbf16, #tpu.memory_space<vmem>>, vector<16x4xbf16>
    %cst_8 = arith.constant dense<0.000000e+00> : vector<256x4xf32>
    %11 = tpu.matmul %9, %10, %cst_8 {dimension_numbers = #tpu.dot_dimension_numbers<[1], [0], [0], [1], [0, 0, 1, 1], [], []>} : vector<256x16xbf16>, vector<16x4xbf16>, vector<256x4xf32> -> vector<256x4xf32>
    %c0_9 = arith.constant 0 : index
    %c0_10 = arith.constant 0 : index
    %12 = vector.load %arg5[%c0_9, %c0_10] : memref<1x4xf32, #tpu.memory_space<vmem>>, vector<1x4xf32>
    %13 = vector.broadcast %12 : vector<1x4xf32> to vector<256x4xf32>
    %14 = arith.addf %11, %13 : vector<256x4xf32>
    %15 = vector.shape_cast %14 : vector<256x4xf32> to vector<32x8x4xf32>
    %cst_11 = arith.constant dense<0xFF800000> : vector<32x4xf32>
    %16 = vector.multi_reduction <maximumf>, %15, %cst_11 [1] : vector<32x8x4xf32> to vector<32x4xf32>
    %17 = vector.shape_cast %16 : vector<32x4xf32> to vector<32x1x4xf32>
    %18 = vector.broadcast %17 : vector<32x1x4xf32> to vector<32x8x4xf32>
    %19 = arith.subf %15, %18 : vector<32x8x4xf32>
    %20 = math.exp %19 : vector<32x8x4xf32>
    %cst_12 = arith.constant dense<0.000000e+00> : vector<32x4xf32>
    %21 = vector.multi_reduction <add>, %20, %cst_12 [1] : vector<32x8x4xf32> to vector<32x4xf32>
    %22 = vector.shape_cast %21 : vector<32x4xf32> to vector<32x1x4xf32>
    %cst_13 = arith.constant 1.000000e+00 : f32
    %23 = vector.broadcast %cst_13 : f32 to vector<32x1x4xf32>
    %24 = arith.divf %23, %22 : vector<32x1x4xf32>
    %25 = vector.broadcast %24 : vector<32x1x4xf32> to vector<32x8x4xf32>
    %26 = arith.mulf %20, %25 : vector<32x8x4xf32>
    %c0_14 = arith.constant 0 : index
    %c0_15 = arith.constant 0 : index
    %c0_16 = arith.constant 0 : index
    %27 = vector.load %arg6[%c0_14, %c0_15, %c0_16] : memref<32x8x4xf32, #tpu.memory_space<vmem>>, vector<32x8x4xf32>
    tpu.vector_store %arg6[%c0_14, %c0_15, %c0_16], %26 {strides = array<i32>} : memref<32x8x4xf32, #tpu.memory_space<vmem>>, vector<32x8x4xf32>,
    return
  }
  func.func @transform_0(%arg0: i32) -> (i32, i32, i32) {
    %c0_i32 = arith.constant 0 : i32
    %c0_i32_0 = arith.constant 0 : i32
    %c0_i32_1 = arith.constant 0 : i32
    return %arg0, %c0_i32, %c0_i32_0 : i32, i32, i32
  }
  func.func @transform_1(%arg0: i32) -> (i32, i32) {
    %c0_i32 = arith.constant 0 : i32
    %c0_i32_0 = arith.constant 0 : i32
    %c0_i32_1 = arith.constant 0 : i32
    return %c0_i32, %c0_i32_0 : i32, i32
  }
  func.func @transform_2(%arg0: i32) -> (i32, i32) {
    %c0_i32 = arith.constant 0 : i32
    %c0_i32_0 = arith.constant 0 : i32
    %c0_i32_1 = arith.constant 0 : i32
    return %c0_i32, %c0_i32_0 : i32, i32
  }
  func.func @transform_3(%arg0: i32) -> (i32, i32) {
    %c0_i32 = arith.constant 0 : i32
    %c0_i32_0 = arith.constant 0 : i32
    %c0_i32_1 = arith.constant 0 : i32
    return %c0_i32, %c0_i32_0 : i32, i32
  }
  func.func @transform_4(%arg0: i32) -> (i32, i32) {
    %c0_i32 = arith.constant 0 : i32
    %c0_i32_0 = arith.constant 0 : i32
    %c0_i32_1 = arith.constant 0 : i32
    return %c0_i32, %c0_i32_0 : i32, i32
  }
  func.func @transform_5(%arg0: i32) -> (i32, i32, i32) {
    %c0_i32 = arith.constant 0 : i32
    %c0_i32_0 = arith.constant 0 : i32
    %c0_i32_1 = arith.constant 0 : i32
    return %arg0, %c0_i32, %c0_i32_0 : i32, i32, i32
  }
}

</mosaic_0001>

<llo_original>
// kernel: tpu_custom_call.1
$region0: #{tpu_custom_call.1}
  #allocation0 [shape = 'u32[]', space=smem, size = 0x4, offset = 0x4, fixed_abs, tag = 'smem constant byte address 0x4 - core index']
  #allocation1 [shape = 'u32[144,128]{1,0:T(1,128)}', space=vmem, size = 0x12000, scoped, tag = 'internal scratch']
  %s0 = inlined_call_operand.hbm [shape: f32[32,8,32], index: 0, kind: input, shape index: {}]
  %s1 = inlined_call_operand.vmem [shape: bf16[32,16], index: 1, kind: input, shape index: {}]
  %s2 = inlined_call_operand.vmem [shape: f32[1,16], index: 2, kind: input, shape index: {}]
  %s3 = inlined_call_operand.vmem [shape: bf16[16,4], index: 3, kind: input, shape index: {}]
  %s4 = inlined_call_operand.vmem [shape: f32[1,4], index: 4, kind: input, shape index: {}]
  %s5 = inlined_call_operand.vmem [shape: f32[32,4,8], index: 5, kind: output, shape index: {}]
  %s6 = sld [smem:[#allocation0]]
  $region34: #{tpu_custom_call.1} parent=0
    _
  %s8 = ssub.s32 1, %s6
  %s9 = scalar_select 0, %s8, %s6
  $region1: #{tpu_custom_call.1} parent=0
    #allocation2 [shape = 'u8[131072]{0}', space=vmem, size = 0x20000, scoped, tag = 'input window, operand 0, single buffered']
    #allocation3 [shape = 's32[1]{0}', space=sflag, size = 0x4, scoped, tag = 'scoped memory for tpu_custom_call.1']
    %10 = vsyncpa [#allocation3], 0
    // Predicated region
    $region2: #{tpu_custom_call.1} parent=1 // pred_check
      _
    $region3: #{tpu_custom_call.1} parent=1 // pred_check_branch
      %12 = sbr.rel (0) target = $region5
    $region4: #{tpu_custom_call.1} parent=1 // pred_region
      %s14 = ssub.s32 4096, 4096
      %15 = vsyncadd [#allocation3], %s14
      %s16 = sshll.u32 [#allocation2], 4
      %s17 = int_to_ptr.vmem [resolvable:$true] %s16
      %22 = dma.hbm_to_vmem [thread:$0]  %s0, 4096, %s17, [#allocation3], 128, 128, 8
    $region5: #{tpu_custom_call.1} parent=1 // pred_fallthru
      _
    // Predicated region
    $region6: #{tpu_custom_call.1} parent=1 // pred_check
      _
    $region7: #{tpu_custom_call.1} parent=1 // pred_check_branch
      %24 = sbr.rel (0) target = $region9
    $region8: #{tpu_custom_call.1} parent=1 // pred_region
      _
    $region9: #{tpu_custom_call.1} parent=1 // pred_fallthru
      _
    // Predicated region
    $region10: #{tpu_custom_call.1} parent=1 // pred_check
      _
    $region11: #{tpu_custom_call.1} parent=1 // pred_check_branch
      %26 = sbr.rel (0) target = $region13
    $region12: #{tpu_custom_call.1} parent=1 // pred_region
      _
    $region13: #{tpu_custom_call.1} parent=1 // pred_fallthru
      _
    // Predicated region
    $region14: #{tpu_custom_call.1} parent=1 // pred_check
      _
    $region15: #{tpu_custom_call.1} parent=1 // pred_check_branch
      %28 = sbr.rel (0) target = $region17
    $region16: #{tpu_custom_call.1} parent=1 // pred_region
      _
    $region17: #{tpu_custom_call.1} parent=1 // pred_fallthru
      _
    // Predicated region
    $region18: #{tpu_custom_call.1} parent=1 // pred_check
      _
    $region19: #{tpu_custom_call.1} parent=1 // pred_check_branch
      %30 = sbr.rel (0) target = $region21
    $region20: #{tpu_custom_call.1} parent=1 // pred_region
      _
    $region21: #{tpu_custom_call.1} parent=1 // pred_fallthru
      _
    // Predicated region
    $region22: #{tpu_custom_call.1} parent=1 // pred_check
      _
    $region23: #{tpu_custom_call.1} parent=1 // pred_check_branch
      %32 = sbr.rel (0) target = $region25
    $region24: #{tpu_custom_call.1} parent=1 // pred_region
      %33 = dma.done [#allocation3], 4096
    $region25: #{tpu_custom_call.1} parent=1 // pred_fallthru
      _
    %v35 = vld [vmem:[#allocation2] sm:$0xff]
    %v36 = vld [vmem:[#allocation2 + $0x8] sm:$0xff]
    %v37 = vld [vmem:[#allocation2 + $0x10] sm:$0xff]
    %v38 = vld [vmem:[#allocation2 + $0x18] sm:$0xff]
    %v39 = vld [vmem:[#allocation2 + $0x20] sm:$0xff]
    %v40 = vld [vmem:[#allocation2 + $0x28] sm:$0xff]
    %v41 = vld [vmem:[#allocation2 + $0x30] sm:$0xff]
    %v42 = vld [vmem:[#allocation2 + $0x38] sm:$0xff]
    %v43 = vld [vmem:[#allocation2 + $0x40] sm:$0xff]
    %v44 = vld [vmem:[#allocation2 + $0x48] sm:$0xff]
    %v45 = vld [vmem:[#allocation2 + $0x50] sm:$0xff]
    %v46 = vld [vmem:[#allocation2 + $0x58] sm:$0xff]
    %v47 = vld [vmem:[#allocation2 + $0x60] sm:$0xff]
    %v48 = vld [vmem:[#allocation2 + $0x68] sm:$0xff]
    %v49 = vld [vmem:[#allocation2 + $0x70] sm:$0xff]
    %v50 = vld [vmem:[#allocation2 + $0x78] sm:$0xff]
    %v51 = vld [vmem:[#allocation2 + $0x80] sm:$0xff]
    %v52 = vld [vmem:[#allocation2 + $0x88] sm:$0xff]
    %v53 = vld [vmem:[#allocation2 + $0x90] sm:$0xff]
    %v54 = vld [vmem:[#allocation2 + $0x98] sm:$0xff]
    %v55 = vld [vmem:[#allocation2 + $0xa0] sm:$0xff]
    %v56 = vld [vmem:[#allocation2 + $0xa8] sm:$0xff]
    %v57 = vld [vmem:[#allocation2 + $0xb0] sm:$0xff]
    %v58 = vld [vmem:[#allocation2 + $0xb8] sm:$0xff]
    %v59 = vld [vmem:[#allocation2 + $0xc0] sm:$0xff]
    %v60 = vld [vmem:[#allocation2 + $0xc8] sm:$0xff]
    %v61 = vld [vmem:[#allocation2 + $0xd0] sm:$0xff]
    %v62 = vld [vmem:[#allocation2 + $0xd8] sm:$0xff]
    %v63 = vld [vmem:[#allocation2 + $0xe0] sm:$0xff]
    %v64 = vld [vmem:[#allocation2 + $0xe8] sm:$0xff]
    %v65 = vld [vmem:[#allocation2 + $0xf0] sm:$0xff]
    %v66 = vld [vmem:[#allocation2 + $0xf8] sm:$0xff]
    %v67 = vpack.c.bf16 %v36, %v35
    %v68 = vpack.c.bf16 %v38, %v37
    %v69 = vpack.c.bf16 %v40, %v39
    %v70 = vpack.c.bf16 %v42, %v41
    %v71 = vpack.c.bf16 %v44, %v43
    %v72 = vpack.c.bf16 %v46, %v45
    %v73 = vpack.c.bf16 %v48, %v47
    %v74 = vpack.c.bf16 %v50, %v49
    %v75 = vpack.c.bf16 %v52, %v51
    %v76 = vpack.c.bf16 %v54, %v53
    %v77 = vpack.c.bf16 %v56, %v55
    %v78 = vpack.c.bf16 %v58, %v57
    %v79 = vpack.c.bf16 %v60, %v59
    %v80 = vpack.c.bf16 %v62, %v61
    %v81 = vpack.c.bf16 %v64, %v63
    %v82 = vpack.c.bf16 %v66, %v65
    %v83 = vld [vmem:[%s1] sm:$0xf]
    %v84 = vld [vmem:[%s1 + $0x4] sm:$0xf]
    %v85 = vld [vmem:[%s1 + $0x8] sm:$0xf]
    %v86 = vld [vmem:[%s1 + $0xc] sm:$0xf]
    %v87 = vld [vmem:[%s2] sm:$0x1]
    %v89 = vlaneseq
    %v90 = vshrl.u32 %v89, 7
    %v91 = vsub.s32 0, %v90
    %v92 = vrot.slane %v87, %v91
    %v98 = vunpack.c.l.b16 %v83
    %v99 = vunpack.c.l.b16 %v84
    %v100 = vunpack.c.l.b16 %v85
    %v101 = vunpack.c.l.b16 %v86
    %v102 = vpack.c.b16 %v99, %v98
    %v103 = vpack.c.b16 %v101, %v100
    %vm106 = vcmask 261120
    %v108 = vsel %vm106, %v67, 0
    %v111 = vsel %vm106, %v68, 0
    %v114 = vsel %vm106, %v69, 0
    %v117 = vsel %vm106, %v70, 0
    %v120 = vsel %vm106, %v71, 0
    %v123 = vsel %vm106, %v72, 0
    %v126 = vsel %vm106, %v73, 0
    %v129 = vsel %vm106, %v74, 0
    %v132 = vsel %vm106, %v75, 0
    %v135 = vsel %vm106, %v76, 0
    %v138 = vsel %vm106, %v77, 0
    %v141 = vsel %vm106, %v78, 0
    %v144 = vsel %vm106, %v79, 0
    %v147 = vsel %vm106, %v80, 0
    %v150 = vsel %vm106, %v81, 0
    %v153 = vsel %vm106, %v82, 0
    %155 = vmatprep.subr.bf16.mxu0 0
    %156 = vmatpush1.bf16.msra.mxu0 0
    %157 = vmatprep.subr.bf16.mxu0 0
    %158 = vmatpush1.bf16.msra.mxu0 0
    %159 = vmatprep.subr.bf16.mxu0 0
    %160 = vmatpush1.bf16.msra.mxu0 0
    %161 = vmatprep.subr.bf16.mxu0 0
    %162 = vmatpush1.bf16.msra.mxu0 0
    %163 = vmatprep.subr.bf16.mxu0 0
    %164 = vmatpush1.bf16.msra.mxu0 0
    %165 = vmatprep.subr.bf16.mxu0 0
    %166 = vmatpush1.bf16.msra.mxu0 0
    %167 = vmatprep.subr.bf16.mxu0 0
    %168 = vmatpush1.bf16.msra.mxu0 %v103
    %169 = vmatprep.subr.bf16.mxu0 0
    %170 = vmatpush1.bf16.msra.mxu0 %v102
    %171 = vmatprep.subr.bf16.mxu0 0
    %172 = vmatpush2.bf16.msra.mxu0 0
    %173 = vmatprep.subr.bf16.mxu0 0
    %174 = vmatpush2.bf16.msra.mxu0 0
    %175 = vmatprep.subr.bf16.mxu0 0
    %176 = vmatpush2.bf16.msra.mxu0 0
    %177 = vmatprep.subr.bf16.mxu0 0
    %178 = vmatpush2.bf16.msra.mxu0 0
    %179 = vmatprep.subr.bf16.mxu0 0
    %180 = vmatpush2.bf16.msra.mxu0 0
    %181 = vmatprep.subr.bf16.mxu0 0
    %182 = vmatpush2.bf16.msra.mxu0 0
    %183 = vmatprep.subr.bf16.mxu0 0
    %184 = vmatpush2.bf16.msra.mxu0 0
    %185 = vmatprep.subr.bf16.mxu0 0
    %186 = vmatpush2.bf16.msra.mxu0 0
    %187 = vmatprep.mubr.bf16.mxu0 0
    %188 = vmatmul.mubr.bf16.gmra.mxu0 %v108
    %v189 = vpop.f32.mrf.mxu0
    %v190 = vadd.f32 %v92, %v189
    %v191 = vpop.f32.mrf.mxu0
    %v192 = vpop.f32.mrf.mxu0
    %v193 = vadd.f32 %v92, %v192
    %v194 = vpop.f32.mrf.mxu0
    %195 = vmatprep.mubr.bf16.mxu0 0
    %196 = vmatmul.mubr.bf16.gmra.mxu0 %v111
    %v197 = vpop.f32.mrf.mxu0
    %v198 = vadd.f32 %v92, %v197
    %v199 = vpop.f32.mrf.mxu0
    %v200 = vpop.f32.mrf.mxu0
    %v201 = vadd.f32 %v92, %v200
    %v202 = vpop.f32.mrf.mxu0
    %203 = vmatprep.mubr.bf16.mxu0 0
    %204 = vmatmul.mubr.bf16.gmra.mxu0 %v114
    %v205 = vpop.f32.mrf.mxu0
    %v206 = vadd.f32 %v92, %v205
    %v207 = vpop.f32.mrf.mxu0
    %v208 = vpop.f32.mrf.mxu0
    %v209 = vadd.f32 %v92, %v208
    %v210 = vpop.f32.mrf.mxu0
    %211 = vmatprep.mubr.bf16.mxu0 0
    %212 = vmatmul.mubr.bf16.gmra.mxu0 %v117
    %v213 = vpop.f32.mrf.mxu0
    %v214 = vadd.f32 %v92, %v213
    %v215 = vpop.f32.mrf.mxu0
    %v216 = vpop.f32.mrf.mxu0
    %v217 = vadd.f32 %v92, %v216
    %v218 = vpop.f32.mrf.mxu0
    %219 = vmatprep.mubr.bf16.mxu0 0
    %220 = vmatmul.mubr.bf16.gmra.mxu0 %v120
    %v221 = vpop.f32.mrf.mxu0
    %v222 = vadd.f32 %v92, %v221
    %v223 = vpop.f32.mrf.mxu0
    %v224 = vpop.f32.mrf.mxu0
    %v225 = vadd.f32 %v92, %v224
    %v226 = vpop.f32.mrf.mxu0
    %227 = vmatprep.mubr.bf16.mxu0 0
    %228 = vmatmul.mubr.bf16.gmra.mxu0 %v123
    %v229 = vpop.f32.mrf.mxu0
    %v230 = vadd.f32 %v92, %v229
    %v231 = vpop.f32.mrf.mxu0
    %v232 = vpop.f32.mrf.mxu0
    %v233 = vadd.f32 %v92, %v232
    %v234 = vpop.f32.mrf.mxu0
    %235 = vmatprep.mubr.bf16.mxu0 0
    %236 = vmatmul.mubr.bf16.gmra.mxu0 %v126
    %v237 = vpop.f32.mrf.mxu0
    %v238 = vadd.f32 %v92, %v237
    %v239 = vpop.f32.mrf.mxu0
    %v240 = vpop.f32.mrf.mxu0
    %v241 = vadd.f32 %v92, %v240
    %v242 = vpop.f32.mrf.mxu0
    %243 = vmatprep.mubr.bf16.mxu0 0
    %244 = vmatmul.mubr.bf16.gmra.mxu0 %v129
    %v245 = vpop.f32.mrf.mxu0
    %v246 = vadd.f32 %v92, %v245
    %v247 = vpop.f32.mrf.mxu0
    %v248 = vpop.f32.mrf.mxu0
    %v249 = vadd.f32 %v92, %v248
    %v250 = vpop.f32.mrf.mxu0
    %251 = vmatprep.mubr.bf16.mxu0 0
    %252 = vmatmul.mubr.bf16.gmra.mxu0 %v132
    %v253 = vpop.f32.mrf.mxu0
    %v254 = vadd.f32 %v92, %v253
    %v255 = vpop.f32.mrf.mxu0
    %v256 = vpop.f32.mrf.mxu0
    %v257 = vadd.f32 %v92, %v256
    %v258 = vpop.f32.mrf.mxu0
    %259 = vmatprep.mubr.bf16.mxu0 0
    %260 = vmatmul.mubr.bf16.gmra.mxu0 %v135
    %v261 = vpop.f32.mrf.mxu0
    %v262 = vadd.f32 %v92, %v261
    %v263 = vpop.f32.mrf.mxu0
    %v264 = vpop.f32.mrf.mxu0
    %v265 = vadd.f32 %v92, %v264
    %v266 = vpop.f32.mrf.mxu0
    %267 = vmatprep.mubr.bf16.mxu0 0
    %268 = vmatmul.mubr.bf16.gmra.mxu0 %v138
    %v269 = vpop.f32.mrf.mxu0
    %v270 = vadd.f32 %v92, %v269
    %v271 = vpop.f32.mrf.mxu0
    %v272 = vpop.f32.mrf.mxu0
    %v273 = vadd.f32 %v92, %v272
    %v274 = vpop.f32.mrf.mxu0
    %275 = vmatprep.mubr.bf16.mxu0 0
    %276 = vmatmul.mubr.bf16.gmra.mxu0 %v141
    %v277 = vpop.f32.mrf.mxu0
    %v278 = vadd.f32 %v92, %v277
    %v279 = vpop.f32.mrf.mxu0
    %v280 = vpop.f32.mrf.mxu0
    %v281 = vadd.f32 %v92, %v280
    %v282 = vpop.f32.mrf.mxu0
    %283 = vmatprep.mubr.bf16.mxu0 0
    %284 = vmatmul.mubr.bf16.gmra.mxu0 %v144
    %v285 = vpop.f32.mrf.mxu0
    %v286 = vadd.f32 %v92, %v285
    %v287 = vpop.f32.mrf.mxu0
    %v288 = vpop.f32.mrf.mxu0
    %v289 = vadd.f32 %v92, %v288
    %v290 = vpop.f32.mrf.mxu0
    %291 = vmatprep.mubr.bf16.mxu0 0
    %292 = vmatmul.mubr.bf16.gmra.mxu0 %v147
    %v293 = vpop.f32.mrf.mxu0
    %v294 = vadd.f32 %v92, %v293
    %v295 = vpop.f32.mrf.mxu0
    %v296 = vpop.f32.mrf.mxu0
    %v297 = vadd.f32 %v92, %v296
    %v298 = vpop.f32.mrf.mxu0
    %299 = vmatprep.mubr.bf16.mxu0 0
    %300 = vmatmul.mubr.bf16.gmra.mxu0 %v150
    %v301 = vpop.f32.mrf.mxu0
    %v302 = vadd.f32 %v92, %v301
    %v303 = vpop.f32.mrf.mxu0
    %v304 = vpop.f32.mrf.mxu0
    %v305 = vadd.f32 %v92, %v304
    %v306 = vpop.f32.mrf.mxu0
    %307 = vmatprep.mubr.bf16.mxu0 0
    %308 = vmatmul.mubr.bf16.gmra.mxu0 %v153
    %v309 = vpop.f32.mrf.mxu0
    %v310 = vadd.f32 %v92, %v309
    %v311 = vpop.f32.mrf.mxu0
    %v312 = vpop.f32.mrf.mxu0
    %v313 = vadd.f32 %v92, %v312
    %v314 = vpop.f32.mrf.mxu0
    %315 = vdwg.mxu0
    %v316 = vtanh.pop %v190
    %v317 = vtanh.pop %v193
    %v318 = vtanh.pop %v198
    %v319 = vtanh.pop %v201
    %v320 = vtanh.pop %v206
    %v321 = vtanh.pop %v209
    %v322 = vtanh.pop %v214
    %v323 = vtanh.pop %v217
    %v324 = vtanh.pop %v222
    %v325 = vtanh.pop %v225
    %v326 = vtanh.pop %v230
    %v327 = vtanh.pop %v233
    %v328 = vtanh.pop %v238
    %v329 = vtanh.pop %v241
    %v330 = vtanh.pop %v246
    %v331 = vtanh.pop %v249
    %v332 = vtanh.pop %v254
    %v333 = vtanh.pop %v257
    %v334 = vtanh.pop %v262
    %v335 = vtanh.pop %v265
    %v336 = vtanh.pop %v270
    %v337 = vtanh.pop %v273
    %v338 = vtanh.pop %v278
    %v339 = vtanh.pop %v281
    %v340 = vtanh.pop %v286
    %v341 = vtanh.pop %v289
    %v342 = vtanh.pop %v294
    %v343 = vtanh.pop %v297
    %v344 = vtanh.pop %v302
    %v345 = vtanh.pop %v305
    %v346 = vtanh.pop %v310
    %v347 = vtanh.pop %v313
    %v348 = vpack.c.bf16 %v317, %v316
    %v349 = vpack.c.bf16 %v319, %v318
    %v350 = vpack.c.bf16 %v321, %v320
    %v351 = vpack.c.bf16 %v323, %v322
    %v352 = vpack.c.bf16 %v325, %v324
    %v353 = vpack.c.bf16 %v327, %v326
    %v354 = vpack.c.bf16 %v329, %v328
    %v355 = vpack.c.bf16 %v331, %v330
    %v356 = vpack.c.bf16 %v333, %v332
    %v357 = vpack.c.bf16 %v335, %v334
    %v358 = vpack.c.bf16 %v337, %v336
    %v359 = vpack.c.bf16 %v339, %v338
    %v360 = vpack.c.bf16 %v341, %v340
    %v361 = vpack.c.bf16 %v343, %v342
    %v362 = vpack.c.bf16 %v345, %v344
    %v363 = vpack.c.bf16 %v347, %v346
    %v364 = vld [vmem:[%s3] sm:$0xf]
    %v365 = vld [vmem:[%s3 + $0x4] sm:$0xf]
    %v366 = vld [vmem:[%s4] sm:$0x1]
    %v368 = vlaneseq
    %v369 = vshrl.u32 %v368, 7
    %v370 = vsub.s32 0, %v369
    %v371 = vrot.slane %v366, %v370
    %v375 = vunpack.c.l.b16 %v364
    %v376 = vunpack.c.l.b16 %v365
    %v377 = vpack.c.b16 %v376, %v375
    %vm379 = vcmask 130048
    %v381 = vsel %vm379, %v348, 0
    %v384 = vsel %vm379, %v349, 0
    %v387 = vsel %vm379, %v350, 0
    %v390 = vsel %vm379, %v351, 0
    %v393 = vsel %vm379, %v352, 0
    %v396 = vsel %vm379, %v353, 0
    %v399 = vsel %vm379, %v354, 0
    %v402 = vsel %vm379, %v355, 0
    %v405 = vsel %vm379, %v356, 0
    %v408 = vsel %vm379, %v357, 0
    %v411 = vsel %vm379, %v358, 0
    %v414 = vsel %vm379, %v359, 0
    %v417 = vsel %vm379, %v360, 0
    %v420 = vsel %vm379, %v361, 0
    %v423 = vsel %vm379, %v362, 0
    %v426 = vsel %vm379, %v363, 0
    %428 = vmatprep.subr.bf16.mxu0 0
    %429 = vmatpush1.bf16.msra.mxu0 0
    %430 = vmatprep.subr.bf16.mxu0 0
    %431 = vmatpush1.bf16.msra.mxu0 0
    %432 = vmatprep.subr.bf16.mxu0 0
    %433 = vmatpush1.bf16.msra.mxu0 0
    %434 = vmatprep.subr.bf16.mxu0 0
    %435 = vmatpush1.bf16.msra.mxu0 0
    %436 = vmatprep.subr.bf16.mxu0 0
    %437 = vmatpush1.bf16.msra.mxu0 0
    %438 = vmatprep.subr.bf16.mxu0 0
    %439 = vmatpush1.bf16.msra.mxu0 0
    %440 = vmatprep.subr.bf16.mxu0 0
    %441 = vmatpush1.bf16.msra.mxu0 0
    %442 = vmatprep.subr.bf16.mxu0 0
    %443 = vmatpush1.bf16.msra.mxu0 %v377
    %444 = vmatprep.subr.bf16.mxu0 0
    %445 = vmatpush2.bf16.msra.mxu0 0
    %446 = vmatprep.subr.bf16.mxu0 0
    %447 = vmatpush2.bf16.msra.mxu0 0
    %448 = vmatprep.subr.bf16.mxu0 0
    %449 = vmatpush2.bf16.msra.mxu0 0
    %450 = vmatprep.subr.bf16.mxu0 0
    %451 = vmatpush2.bf16.msra.mxu0 0
    %452 = vmatprep.subr.bf16.mxu0 0
    %453 = vmatpush2.bf16.msra.mxu0 0
    %454 = vmatprep.subr.bf16.mxu0 0
    %455 = vmatpush2.bf16.msra.mxu0 0
    %456 = vmatprep.subr.bf16.mxu0 0
    %457 = vmatpush2.bf16.msra.mxu0 0
    %458 = vmatprep.subr.bf16.mxu0 0
    %459 = vmatpush2.bf16.msra.mxu0 0
    %460 = vmatprep.mubr.bf16.mxu0 0
    %461 = vmatmul.mubr.bf16.gmra.mxu0 %v381
    %v462 = vpop.f32.mrf.mxu0
    %v463 = vadd.f32 %v371, %v462
    %v464 = vpop.f32.mrf.mxu0
    %v465 = vpop.f32.mrf.mxu0
    %v466 = vadd.f32 %v371, %v465
    %v467 = vpop.f32.mrf.mxu0
    %468 = vmatprep.mubr.bf16.mxu0 0
    %469 = vmatmul.mubr.bf16.gmra.mxu0 %v384
    %v470 = vpop.f32.mrf.mxu0
    %v471 = vadd.f32 %v371, %v470
    %v472 = vpop.f32.mrf.mxu0
    %v473 = vpop.f32.mrf.mxu0
    %v474 = vadd.f32 %v371, %v473
    %v475 = vpop.f32.mrf.mxu0
    %476 = vmatprep.mubr.bf16.mxu0 0
    %477 = vmatmul.mubr.bf16.gmra.mxu0 %v387
    %v478 = vpop.f32.mrf.mxu0
    %v479 = vadd.f32 %v371, %v478
    %v480 = vpop.f32.mrf.mxu0
    %v481 = vpop.f32.mrf.mxu0
    %v482 = vadd.f32 %v371, %v481
    %v483 = vpop.f32.mrf.mxu0
    %484 = vmatprep.mubr.bf16.mxu0 0
    %485 = vmatmul.mubr.bf16.gmra.mxu0 %v390
    %v486 = vpop.f32.mrf.mxu0
    %v487 = vadd.f32 %v371, %v486
    %v488 = vpop.f32.mrf.mxu0
    %v489 = vpop.f32.mrf.mxu0
    %v490 = vadd.f32 %v371, %v489
    %v491 = vpop.f32.mrf.mxu0
    %492 = vmatprep.mubr.bf16.mxu0 0
    %493 = vmatmul.mubr.bf16.gmra.mxu0 %v393
    %v494 = vpop.f32.mrf.mxu0
    %v495 = vadd.f32 %v371, %v494
    %v496 = vpop.f32.mrf.mxu0
    %v497 = vpop.f32.mrf.mxu0
    %v498 = vadd.f32 %v371, %v497
    %v499 = vpop.f32.mrf.mxu0
    %500 = vmatprep.mubr.bf16.mxu0 0
    %501 = vmatmul.mubr.bf16.gmra.mxu0 %v396
    %v502 = vpop.f32.mrf.mxu0
    %v503 = vadd.f32 %v371, %v502
    %v504 = vpop.f32.mrf.mxu0
    %v505 = vpop.f32.mrf.mxu0
    %v506 = vadd.f32 %v371, %v505
    %v507 = vpop.f32.mrf.mxu0
    %508 = vmatprep.mubr.bf16.mxu0 0
    %509 = vmatmul.mubr.bf16.gmra.mxu0 %v399
    %v510 = vpop.f32.mrf.mxu0
    %v511 = vadd.f32 %v371, %v510
    %v512 = vpop.f32.mrf.mxu0
    %v513 = vpop.f32.mrf.mxu0
    %v514 = vadd.f32 %v371, %v513
    %v515 = vpop.f32.mrf.mxu0
    %516 = vmatprep.mubr.bf16.mxu0 0
    %517 = vmatmul.mubr.bf16.gmra.mxu0 %v402
    %v518 = vpop.f32.mrf.mxu0
    %v519 = vadd.f32 %v371, %v518
    %v520 = vpop.f32.mrf.mxu0
    %v521 = vpop.f32.mrf.mxu0
    %v522 = vadd.f32 %v371, %v521
    %v523 = vpop.f32.mrf.mxu0
    %524 = vmatprep.mubr.bf16.mxu0 0
    %525 = vmatmul.mubr.bf16.gmra.mxu0 %v405
    %v526 = vpop.f32.mrf.mxu0
    %v527 = vadd.f32 %v371, %v526
    %v528 = vpop.f32.mrf.mxu0
    %v529 = vpop.f32.mrf.mxu0
    %v530 = vadd.f32 %v371, %v529
    %v531 = vpop.f32.mrf.mxu0
    %532 = vmatprep.mubr.bf16.mxu0 0
    %533 = vmatmul.mubr.bf16.gmra.mxu0 %v408
    %v534 = vpop.f32.mrf.mxu0
    %v535 = vadd.f32 %v371, %v534
    %v536 = vpop.f32.mrf.mxu0
    %v537 = vpop.f32.mrf.mxu0
    %v538 = vadd.f32 %v371, %v537
    %v539 = vpop.f32.mrf.mxu0
    %540 = vmatprep.mubr.bf16.mxu0 0
    %541 = vmatmul.mubr.bf16.gmra.mxu0 %v411
    %v542 = vpop.f32.mrf.mxu0
    %v543 = vadd.f32 %v371, %v542
    %v544 = vpop.f32.mrf.mxu0
    %v545 = vpop.f32.mrf.mxu0
    %v546 = vadd.f32 %v371, %v545
    %v547 = vpop.f32.mrf.mxu0
    %548 = vmatprep.mubr.bf16.mxu0 0
    %549 = vmatmul.mubr.bf16.gmra.mxu0 %v414
    %v550 = vpop.f32.mrf.mxu0
    %v551 = vadd.f32 %v371, %v550
    %v552 = vpop.f32.mrf.mxu0
    %v553 = vpop.f32.mrf.mxu0
    %v554 = vadd.f32 %v371, %v553
    %v555 = vpop.f32.mrf.mxu0
    %556 = vmatprep.mubr.bf16.mxu0 0
    %557 = vmatmul.mubr.bf16.gmra.mxu0 %v417
    %v558 = vpop.f32.mrf.mxu0
    %v559 = vadd.f32 %v371, %v558
    %v560 = vpop.f32.mrf.mxu0
    %v561 = vpop.f32.mrf.mxu0
    %v562 = vadd.f32 %v371, %v561
    %v563 = vpop.f32.mrf.mxu0
    %564 = vmatprep.mubr.bf16.mxu0 0
    %565 = vmatmul.mubr.bf16.gmra.mxu0 %v420
    %v566 = vpop.f32.mrf.mxu0
    %v567 = vadd.f32 %v371, %v566
    %v568 = vpop.f32.mrf.mxu0
    %v569 = vpop.f32.mrf.mxu0
    %v570 = vadd.f32 %v371, %v569
    %v571 = vpop.f32.mrf.mxu0
    %572 = vmatprep.mubr.bf16.mxu0 0
    %573 = vmatmul.mubr.bf16.gmra.mxu0 %v423
    %v574 = vpop.f32.mrf.mxu0
    %v575 = vadd.f32 %v371, %v574
    %v576 = vpop.f32.mrf.mxu0
    %v577 = vpop.f32.mrf.mxu0
    %v578 = vadd.f32 %v371, %v577
    %v579 = vpop.f32.mrf.mxu0
    %580 = vmatprep.mubr.bf16.mxu0 0
    %581 = vmatmul.mubr.bf16.gmra.mxu0 %v426
    %v582 = vpop.f32.mrf.mxu0
    %v583 = vadd.f32 %v371, %v582
    %v584 = vpop.f32.mrf.mxu0
    %v585 = vpop.f32.mrf.mxu0
    %v586 = vadd.f32 %v371, %v585
    %v587 = vpop.f32.mrf.mxu0
    %588 = vdwg.mxu0
    %589 = vxpose.xlu0.b32.start [1/16] %v463, 128
    %590 = vxpose.xlu0.b32.cont [2/16] 0.0, 128
    %591 = vxpose.xlu0.b32.cont [3/16] 0.0, 128
    %592 = vxpose.xlu0.b32.cont [4/16] 0.0, 128
    %593 = vxpose.xlu0.b32.cont [5/16] 0.0, 128
    %594 = vxpose.xlu0.b32.cont [6/16] 0.0, 128
    %595 = vxpose.xlu0.b32.cont [7/16] 0.0, 128
    %596 = vxpose.xlu0.b32.cont [8/16] 0.0, 128
    %597 = vxpose.xlu0.b32.cont [9/16] 0.0, 128
    %598 = vxpose.xlu0.b32.cont [10/16] 0.0, 128
    %599 = vxpose.xlu0.b32.cont [11/16] 0.0, 128
    %600 = vxpose.xlu0.b32.cont [12/16] 0.0, 128
    %601 = vxpose.xlu0.b32.cont [13/16] 0.0, 128
    %602 = vxpose.xlu0.b32.cont [14/16] 0.0, 128
    %603 = vxpose.xlu0.b32.cont [15/16] 0.0, 128
    %604 = vxpose.xlu0.b32.end [16/16] 0.0, 128
    %v605 = vpop.trf.xlu0
    %v606 = vpop.trf.xlu0
    %v607 = vpop.trf.xlu0
    %v608 = vpop.trf.xlu0
    %v609 = vpop.trf.xlu0
    %v610 = vpop.trf.xlu0
    %v611 = vpop.trf.xlu0
    %v612 = vpop.trf.xlu0
    %v613 = vpop.trf.xlu0
    %v614 = vpop.trf.xlu0
    %v615 = vpop.trf.xlu0
    %v616 = vpop.trf.xlu0
    %v617 = vpop.trf.xlu0
    %v618 = vpop.trf.xlu0
    %v619 = vpop.trf.xlu0
    %v620 = vpop.trf.xlu0
    %621 = vxpose.xlu0.b32.start [1/16] %v466, 128
    %622 = vxpose.xlu0.b32.cont [2/16] 0.0, 128
    %623 = vxpose.xlu0.b32.cont [3/16] 0.0, 128
    %624 = vxpose.xlu0.b32.cont [4/16] 0.0, 128
    %625 = vxpose.xlu0.b32.cont [5/16] 0.0, 128
    %626 = vxpose.xlu0.b32.cont [6/16] 0.0, 128
    %627 = vxpose.xlu0.b32.cont [7/16] 0.0, 128
    %628 = vxpose.xlu0.b32.cont [8/16] 0.0, 128
    %629 = vxpose.xlu0.b32.cont [9/16] 0.0, 128
    %630 = vxpose.xlu0.b32.cont [10/16] 0.0, 128
    %631 = vxpose.xlu0.b32.cont [11/16] 0.0, 128
    %632 = vxpose.xlu0.b32.cont [12/16] 0.0, 128
    %633 = vxpose.xlu0.b32.cont [13/16] 0.0, 128
    %634 = vxpose.xlu0.b32.cont [14/16] 0.0, 128
    %635 = vxpose.xlu0.b32.cont [15/16] 0.0, 128
    %636 = vxpose.xlu0.b32.end [16/16] 0.0, 128
    %v637 = vpop.trf.xlu0
    %v638 = vpop.trf.xlu0
    %v639 = vpop.trf.xlu0
    %v640 = vpop.trf.xlu0
    %v641 = vpop.trf.xlu0
    %v642 = vpop.trf.xlu0
    %v643 = vpop.trf.xlu0
    %v644 = vpop.trf.xlu0
    %v645 = vpop.trf.xlu0
    %v646 = vpop.trf.xlu0
    %v647 = vpop.trf.xlu0
    %v648 = vpop.trf.xlu0
    %v649 = vpop.trf.xlu0
    %v650 = vpop.trf.xlu0
    %v651 = vpop.trf.xlu0
    %v652 = vpop.trf.xlu0
    %653 = vxpose.xlu0.b32.start [1/16] %v471, 128
    %654 = vxpose.xlu0.b32.cont [2/16] 0.0, 128
    %655 = vxpose.xlu0.b32.cont [3/16] 0.0, 128
    %656 = vxpose.xlu0.b32.cont [4/16] 0.0, 128
    %657 = vxpose.xlu0.b32.cont [5/16] 0.0, 128
    %658 = vxpose.xlu0.b32.cont [6/16] 0.0, 128
    %659 = vxpose.xlu0.b32.cont [7/16] 0.0, 128
    %660 = vxpose.xlu0.b32.cont [8/16] 0.0, 128
    %661 = vxpose.xlu0.b32.cont [9/16] 0.0, 128
    %662 = vxpose.xlu0.b32.cont [10/16] 0.0, 128
    %663 = vxpose.xlu0.b32.cont [11/16] 0.0, 128
    %664 = vxpose.xlu0.b32.cont [12/16] 0.0, 128
    %665 = vxpose.xlu0.b32.cont [13/16] 0.0, 128
    %666 = vxpose.xlu0.b32.cont [14/16] 0.0, 128
    %667 = vxpose.xlu0.b32.cont [15/16] 0.0, 128
    %668 = vxpose.xlu0.b32.end [16/16] 0.0, 128
    %v669 = vpop.trf.xlu0
    %v670 = vpop.trf.xlu0
    %v671 = vpop.trf.xlu0
    %v672 = vpop.trf.xlu0
    %v673 = vpop.trf.xlu0
    %v674 = vpop.trf.xlu0
    %v675 = vpop.trf.xlu0
    %v676 = vpop.trf.xlu0
    %v677 = vpop.trf.xlu0
    %v678 = vpop.trf.xlu0
    %v679 = vpop.trf.xlu0
    %v680 = vpop.trf.xlu0
    %v681 = vpop.trf.xlu0
    %v682 = vpop.trf.xlu0
    %v683 = vpop.trf.xlu0
    %v684 = vpop.trf.xlu0
    %685 = vxpose.xlu0.b32.start [1/16] %v474, 128
    %686 = vxpose.xlu0.b32.cont [2/16] 0.0, 128
    %687 = vxpose.xlu0.b32.cont [3/16] 0.0, 128
    %688 = vxpose.xlu0.b32.cont [4/16] 0.0, 128
    %689 = vxpose.xlu0.b32.cont [5/16] 0.0, 128
    %690 = vxpose.xlu0.b32.cont [6/16] 0.0, 128
    %691 = vxpose.xlu0.b32.cont [7/16] 0.0, 128
    %692 = vxpose.xlu0.b32.cont [8/16] 0.0, 128
    %693 = vxpose.xlu0.b32.cont [9/16] 0.0, 128
    %694 = vxpose.xlu0.b32.cont [10/16] 0.0, 128
    %695 = vxpose.xlu0.b32.cont [11/16] 0.0, 128
    %696 = vxpose.xlu0.b32.cont [12/16] 0.0, 128
    %697 = vxpose.xlu0.b32.cont [13/16] 0.0, 128
    %698 = vxpose.xlu0.b32.cont [14/16] 0.0, 128
    %699 = vxpose.xlu0.b32.cont [15/16] 0.0, 128
    %700 = vxpose.xlu0.b32.end [16/16] 0.0, 128
    %v701 = vpop.trf.xlu0
    %v702 = vpop.trf.xlu0
    %v703 = vpop.trf.xlu0
    %v704 = vpop.trf.xlu0
    %v705 = vpop.trf.xlu0
    %v706 = vpop.trf.xlu0
    %v707 = vpop.trf.xlu0
    %v708 = vpop.trf.xlu0
    %v709 = vpop.trf.xlu0
    %v710 = vpop.trf.xlu0
    %v711 = vpop.trf.xlu0
    %v712 = vpop.trf.xlu0
    %v713 = vpop.trf.xlu0
    %v714 = vpop.trf.xlu0
    %v715 = vpop.trf.xlu0
    %v716 = vpop.trf.xlu0
    %717 = vxpose.xlu0.b32.start [1/16] %v479, 128
    %718 = vxpose.xlu0.b32.cont [2/16] 0.0, 128
    %719 = vxpose.xlu0.b32.cont [3/16] 0.0, 128
    %720 = vxpose.xlu0.b32.cont [4/16] 0.0, 128
    %721 = vxpose.xlu0.b32.cont [5/16] 0.0, 128
    %722 = vxpose.xlu0.b32.cont [6/16] 0.0, 128
    %723 = vxpose.xlu0.b32.cont [7/16] 0.0, 128
    %724 = vxpose.xlu0.b32.cont [8/16] 0.0, 128
    %725 = vxpose.xlu0.b32.cont [9/16] 0.0, 128
    %726 = vxpose.xlu0.b32.cont [10/16] 0.0, 128
    %727 = vxpose.xlu0.b32.cont [11/16] 0.0, 128
    %728 = vxpose.xlu0.b32.cont [12/16] 0.0, 128
    %729 = vxpose.xlu0.b32.cont [13/16] 0.0, 128
    %730 = vxpose.xlu0.b32.cont [14/16] 0.0, 128
    %731 = vxpose.xlu0.b32.cont [15/16] 0.0, 128
    %732 = vxpose.xlu0.b32.end [16/16] 0.0, 128
    %v733 = vpop.trf.xlu0
    %v734 = vpop.trf.xlu0
    %v735 = vpop.trf.xlu0
    %v736 = vpop.trf.xlu0
    %v737 = vpop.trf.xlu0
    %v738 = vpop.trf.xlu0
    %v739 = vpop.trf.xlu0
    %v740 = vpop.trf.xlu0
    %v741 = vpop.trf.xlu0
    %v742 = vpop.trf.xlu0
    %v743 = vpop.trf.xlu0
    %v744 = vpop.trf.xlu0
    %v745 = vpop.trf.xlu0
    %v746 = vpop.trf.xlu0
    %v747 = vpop.trf.xlu0
    %v748 = vpop.trf.xlu0
    %749 = vxpose.xlu0.b32.start [1/16] %v482, 128
    %750 = vxpose.xlu0.b32.cont [2/16] 0.0, 128
    %751 = vxpose.xlu0.b32.cont [3/16] 0.0, 128
    %752 = vxpose.xlu0.b32.cont [4/16] 0.0, 128
    %753 = vxpose.xlu0.b32.cont [5/16] 0.0, 128
    %754 = vxpose.xlu0.b32.cont [6/16] 0.0, 128
    %755 = vxpose.xlu0.b32.cont [7/16] 0.0, 128
    %756 = vxpose.xlu0.b32.cont [8/16] 0.0, 128
    %757 = vxpose.xlu0.b32.cont [9/16] 0.0, 128
    %758 = vxpose.xlu0.b32.cont [10/16] 0.0, 128
    %759 = vxpose.xlu0.b32.cont [11/16] 0.0, 128
    %760 = vxpose.xlu0.b32.cont [12/16] 0.0, 128
    %761 = vxpose.xlu0.b32.cont [13/16] 0.0, 128
    %762 = vxpose.xlu0.b32.cont [14/16] 0.0, 128
    %763 = vxpose.xlu0.b32.cont [15/16] 0.0, 128
    %764 = vxpose.xlu0.b32.end [16/16] 0.0, 128
    %v765 = vpop.trf.xlu0
    %v766 = vpop.trf.xlu0
    %v767 = vpop.trf.xlu0
    %v768 = vpop.trf.xlu0
    %v769 = vpop.trf.xlu0
    %v770 = vpop.trf.xlu0
    %v771 = vpop.trf.xlu0
    %v772 = vpop.trf.xlu0
    %v773 = vpop.trf.xlu0
    %v774 = vpop.trf.xlu0
    %v775 = vpop.trf.xlu0
    %v776 = vpop.trf.xlu0
    %v777 = vpop.trf.xlu0
    %v778 = vpop.trf.xlu0
    %v779 = vpop.trf.xlu0
    %v780 = vpop.trf.xlu0
    %781 = vxpose.xlu0.b32.start [1/16] %v487, 128
    %782 = vxpose.xlu0.b32.cont [2/16] 0.0, 128
    %783 = vxpose.xlu0.b32.cont [3/16] 0.0, 128
    %784 = vxpose.xlu0.b32.cont [4/16] 0.0, 128
    %785 = vxpose.xlu0.b32.cont [5/16] 0.0, 128
    %786 = vxpose.xlu0.b32.cont [6/16] 0.0, 128
    %787 = vxpose.xlu0.b32.cont [7/16] 0.0, 128
    %788 = vxpose.xlu0.b32.cont [8/16] 0.0, 128
    %789 = vxpose.xlu0.b32.cont [9/16] 0.0, 128
    %790 = vxpose.xlu0.b32.cont [10/16] 0.0, 128
    %791 = vxpose.xlu0.b32.cont [11/16] 0.0, 128
    %792 = vxpose.xlu0.b32.cont [12/16] 0.0, 128
    %793 = vxpose.xlu0.b32.cont [13/16] 0.0, 128
    %794 = vxpose.xlu0.b32.cont [14/16] 0.0, 128
    %795 = vxpose.xlu0.b32.cont [15/16] 0.0, 128
    %796 = vxpose.xlu0.b32.end [16/16] 0.0, 128
    %v797 = vpop.trf.xlu0
    %v798 = vpop.trf.xlu0
    %v799 = vpop.trf.xlu0
    %v800 = vpop.trf.xlu0
    %v801 = vpop.trf.xlu0
    %v802 = vpop.trf.xlu0
    %v803 = vpop.trf.xlu0
    %v804 = vpop.trf.xlu0
    %v805 = vpop.trf.xlu0
    %v806 = vpop.trf.xlu0
    %v807 = vpop.trf.xlu0
    %v808 = vpop.trf.xlu0
    %v809 = vpop.trf.xlu0
    %v810 = vpop.trf.xlu0
    %v811 = vpop.trf.xlu0
    %v812 = vpop.trf.xlu0
    %813 = vxpose.xlu0.b32.start [1/16] %v490, 128
    %814 = vxpose.xlu0.b32.cont [2/16] 0.0, 128
    %815 = vxpose.xlu0.b32.cont [3/16] 0.0, 128
    %816 = vxpose.xlu0.b32.cont [4/16] 0.0, 128
    %817 = vxpose.xlu0.b32.cont [5/16] 0.0, 128
    %818 = vxpose.xlu0.b32.cont [6/16] 0.0, 128
    %819 = vxpose.xlu0.b32.cont [7/16] 0.0, 128
    %820 = vxpose.xlu0.b32.cont [8/16] 0.0, 128
    %821 = vxpose.xlu0.b32.cont [9/16] 0.0, 128
    %822 = vxpose.xlu0.b32.cont [10/16] 0.0, 128
    %823 = vxpose.xlu0.b32.cont [11/16] 0.0, 128
    %824 = vxpose.xlu0.b32.cont [12/16] 0.0, 128
    %825 = vxpose.xlu0.b32.cont [13/16] 0.0, 128
    %826 = vxpose.xlu0.b32.cont [14/16] 0.0, 128
    %827 = vxpose.xlu0.b32.cont [15/16] 0.0, 128
    %828 = vxpose.xlu0.b32.end [16/16] 0.0, 128
    %v829 = vpop.trf.xlu0
    %v830 = vpop.trf.xlu0
    %v831 = vpop.trf.xlu0
    %v832 = vpop.trf.xlu0
    %v833 = vpop.trf.xlu0
    %v834 = vpop.trf.xlu0
    %v835 = vpop.trf.xlu0
    %v836 = vpop.trf.xlu0
    %v837 = vpop.trf.xlu0
    %v838 = vpop.trf.xlu0
    %v839 = vpop.trf.xlu0
    %v840 = vpop.trf.xlu0
    %v841 = vpop.trf.xlu0
    %v842 = vpop.trf.xlu0
    %v843 = vpop.trf.xlu0
    %v844 = vpop.trf.xlu0
    %845 = vxpose.xlu0.b32.start [1/16] %v495, 128
    %846 = vxpose.xlu0.b32.cont [2/16] 0.0, 128
    %847 = vxpose.xlu0.b32.cont [3/16] 0.0, 128
    %848 = vxpose.xlu0.b32.cont [4/16] 0.0, 128
    %849 = vxpose.xlu0.b32.cont [5/16] 0.0, 128
    %850 = vxpose.xlu0.b32.cont [6/16] 0.0, 128
    %851 = vxpose.xlu0.b32.cont [7/16] 0.0, 128
    %852 = vxpose.xlu0.b32.cont [8/16] 0.0, 128
    %853 = vxpose.xlu0.b32.cont [9/16] 0.0, 128
    %854 = vxpose.xlu0.b32.cont [10/16] 0.0, 128
    %855 = vxpose.xlu0.b32.cont [11/16] 0.0, 128
    %856 = vxpose.xlu0.b32.cont [12/16] 0.0, 128
    %857 = vxpose.xlu0.b32.cont [13/16] 0.0, 128
    %858 = vxpose.xlu0.b32.cont [14/16] 0.0, 128
    %859 = vxpose.xlu0.b32.cont [15/16] 0.0, 128
    %860 = vxpose.xlu0.b32.end [16/16] 0.0, 128
    %v861 = vpop.trf.xlu0
    %v862 = vpop.trf.xlu0
    %v863 = vpop.trf.xlu0
    %v864 = vpop.trf.xlu0
    %v865 = vpop.trf.xlu0
    %v866 = vpop.trf.xlu0
    %v867 = vpop.trf.xlu0
    %v868 = vpop.trf.xlu0
    %v869 = vpop.trf.xlu0
    %v870 = vpop.trf.xlu0
    %v871 = vpop.trf.xlu0
    %v872 = vpop.trf.xlu0
    %v873 = vpop.trf.xlu0
    %v874 = vpop.trf.xlu0
    %v875 = vpop.trf.xlu0
    %v876 = vpop.trf.xlu0
    %877 = vxpose.xlu0.b32.start [1/16] %v498, 128
    %878 = vxpose.xlu0.b32.cont [2/16] 0.0, 128
    %879 = vxpose.xlu0.b32.cont [3/16] 0.0, 128
    %880 = vxpose.xlu0.b32.cont [4/16] 0.0, 128
    %881 = vxpose.xlu0.b32.cont [5/16] 0.0, 128
    %882 = vxpose.xlu0.b32.cont [6/16] 0.0, 128
    %883 = vxpose.xlu0.b32.cont [7/16] 0.0, 128
    %884 = vxpose.xlu0.b32.cont [8/16] 0.0, 128
    %885 = vxpose.xlu0.b32.cont [9/16] 0.0, 128
    %886 = vxpose.xlu0.b32.cont [10/16] 0.0, 128
    %887 = vxpose.xlu0.b32.cont [11/16] 0.0, 128
    %888 = vxpose.xlu0.b32.cont [12/16] 0.0, 128
    %889 = vxpose.xlu0.b32.cont [13/16] 0.0, 128
    %890 = vxpose.xlu0.b32.cont [14/16] 0.0, 128
    %891 = vxpose.xlu0.b32.cont [15/16] 0.0, 128
    %892 = vxpose.xlu0.b32.end [16/16] 0.0, 128
    %v893 = vpop.trf.xlu0
    %v894 = vpop.trf.xlu0
    %v895 = vpop.trf.xlu0
    %v896 = vpop.trf.xlu0
    %v897 = vpop.trf.xlu0
    %v898 = vpop.trf.xlu0
    %v899 = vpop.trf.xlu0
    %v900 = vpop.trf.xlu0
    %v901 = vpop.trf.xlu0
    %v902 = vpop.trf.xlu0
    %v903 = vpop.trf.xlu0
    %v904 = vpop.trf.xlu0
    %v905 = vpop.trf.xlu0
    %v906 = vpop.trf.xlu0
    %v907 = vpop.trf.xlu0
    %v908 = vpop.trf.xlu0
    %909 = vxpose.xlu0.b32.start [1/16] %v503, 128
    %910 = vxpose.xlu0.b32.cont [2/16] 0.0, 128
    %911 = vxpose.xlu0.b32.cont [3/16] 0.0, 128
    %912 = vxpose.xlu0.b32.cont [4/16] 0.0, 128
    %913 = vxpose.xlu0.b32.cont [5/16] 0.0, 128
    %914 = vxpose.xlu0.b32.cont [6/16] 0.0, 128
    %915 = vxpose.xlu0.b32.cont [7/16] 0.0, 128
    %916 = vxpose.xlu0.b32.cont [8/16] 0.0, 128
    %917 = vxpose.xlu0.b32.cont [9/16] 0.0, 128
    %918 = vxpose.xlu0.b32.cont [10/16] 0.0, 128
    %919 = vxpose.xlu0.b32.cont [11/16] 0.0, 128
    %920 = vxpose.xlu0.b32.cont [12/16] 0.0, 128
    %921 = vxpose.xlu0.b32.cont [13/16] 0.0, 128
    %922 = vxpose.xlu0.b32.cont [14/16] 0.0, 128
    %923 = vxpose.xlu0.b32.cont [15/16] 0.0, 128
    %924 = vxpose.xlu0.b32.end [16/16] 0.0, 128
    %v925 = vpop.trf.xlu0
    %v926 = vpop.trf.xlu0
    %v927 = vpop.trf.xlu0
    %v928 = vpop.trf.xlu0
    %v929 = vpop.trf.xlu0
    %v930 = vpop.trf.xlu0
    %v931 = vpop.trf.xlu0
    %v932 = vpop.trf.xlu0
    %v933 = vpop.trf.xlu0
    %v934 = vpop.trf.xlu0
    %v935 = vpop.trf.xlu0
    %v936 = vpop.trf.xlu0
    %v937 = vpop.trf.xlu0
    %v938 = vpop.trf.xlu0
    %v939 = vpop.trf.xlu0
    %v940 = vpop.trf.xlu0
    %941 = vxpose.xlu0.b32.start [1/16] %v506, 128
    %942 = vxpose.xlu0.b32.cont [2/16] 0.0, 128
    %943 = vxpose.xlu0.b32.cont [3/16] 0.0, 128
    %944 = vxpose.xlu0.b32.cont [4/16] 0.0, 128
    %945 = vxpose.xlu0.b32.cont [5/16] 0.0, 128
    %946 = vxpose.xlu0.b32.cont [6/16] 0.0, 128
    %947 = vxpose.xlu0.b32.cont [7/16] 0.0, 128
    %948 = vxpose.xlu0.b32.cont [8/16] 0.0, 128
    %949 = vxpose.xlu0.b32.cont [9/16] 0.0, 128
    %950 = vxpose.xlu0.b32.cont [10/16] 0.0, 128
    %951 = vxpose.xlu0.b32.cont [11/16] 0.0, 128
    %952 = vxpose.xlu0.b32.cont [12/16] 0.0, 128
    %953 = vxpose.xlu0.b32.cont [13/16] 0.0, 128
    %954 = vxpose.xlu0.b32.cont [14/16] 0.0, 128
    %955 = vxpose.xlu0.b32.cont [15/16] 0.0, 128
    %956 = vxpose.xlu0.b32.end [16/16] 0.0, 128
    %v957 = vpop.trf.xlu0
    %v958 = vpop.trf.xlu0
    %v959 = vpop.trf.xlu0
    %v960 = vpop.trf.xlu0
    %v961 = vpop.trf.xlu0
    %v962 = vpop.trf.xlu0
    %v963 = vpop.trf.xlu0
    %v964 = vpop.trf.xlu0
    %v965 = vpop.trf.xlu0
    %v966 = vpop.trf.xlu0
    %v967 = vpop.trf.xlu0
    %v968 = vpop.trf.xlu0
    %v969 = vpop.trf.xlu0
    %v970 = vpop.trf.xlu0
    %v971 = vpop.trf.xlu0
    %v972 = vpop.trf.xlu0
    %973 = vxpose.xlu0.b32.start [1/16] %v511, 128
    %974 = vxpose.xlu0.b32.cont [2/16] 0.0, 128
    %975 = vxpose.xlu0.b32.cont [3/16] 0.0, 128
    %976 = vxpose.xlu0.b32.cont [4/16] 0.0, 128
    %977 = vxpose.xlu0.b32.cont [5/16] 0.0, 128
    %978 = vxpose.xlu0.b32.cont [6/16] 0.0, 128
    %979 = vxpose.xlu0.b32.cont [7/16] 0.0, 128
    %980 = vxpose.xlu0.b32.cont [8/16] 0.0, 128
    %981 = vxpose.xlu0.b32.cont [9/16] 0.0, 128
    %982 = vxpose.xlu0.b32.cont [10/16] 0.0, 128
    %983 = vxpose.xlu0.b32.cont [11/16] 0.0, 128
    %984 = vxpose.xlu0.b32.cont [12/16] 0.0, 128
    %985 = vxpose.xlu0.b32.cont [13/16] 0.0, 128
    %986 = vxpose.xlu0.b32.cont [14/16] 0.0, 128
    %987 = vxpose.xlu0.b32.cont [15/16] 0.0, 128
    %988 = vxpose.xlu0.b32.end [16/16] 0.0, 128
    %v989 = vpop.trf.xlu0
    %v990 = vpop.trf.xlu0
    %v991 = vpop.trf.xlu0
    %v992 = vpop.trf.xlu0
    %v993 = vpop.trf.xlu0
    %v994 = vpop.trf.xlu0
    %v995 = vpop.trf.xlu0
    %v996 = vpop.trf.xlu0
    %v997 = vpop.trf.xlu0
    %v998 = vpop.trf.xlu0
    %v999 = vpop.trf.xlu0
    %v1000 = vpop.trf.xlu0
    %v1001 = vpop.trf.xlu0
    %v1002 = vpop.trf.xlu0
    %v1003 = vpop.trf.xlu0
    %v1004 = vpop.trf.xlu0
    %1005 = vxpose.xlu0.b32.start [1/16] %v514, 128
    %1006 = vxpose.xlu0.b32.cont [2/16] 0.0, 128
    %1007 = vxpose.xlu0.b32.cont [3/16] 0.0, 128
    %1008 = vxpose.xlu0.b32.cont [4/16] 0.0, 128
    %1009 = vxpose.xlu0.b32.cont [5/16] 0.0, 128
    %1010 = vxpose.xlu0.b32.cont [6/16] 0.0, 128
    %1011 = vxpose.xlu0.b32.cont [7/16] 0.0, 128
    %1012 = vxpose.xlu0.b32.cont [8/16] 0.0, 128
    %1013 = vxpose.xlu0.b32.cont [9/16] 0.0, 128
    %1014 = vxpose.xlu0.b32.cont [10/16] 0.0, 128
    %1015 = vxpose.xlu0.b32.cont [11/16] 0.0, 128
    %1016 = vxpose.xlu0.b32.cont [12/16] 0.0, 128
    %1017 = vxpose.xlu0.b32.cont [13/16] 0.0, 128
    %1018 = vxpose.xlu0.b32.cont [14/16] 0.0, 128
    %1019 = vxpose.xlu0.b32.cont [15/16] 0.0, 128
    %1020 = vxpose.xlu0.b32.end [16/16] 0.0, 128
    %v1021 = vpop.trf.xlu0
    %v1022 = vpop.trf.xlu0
    %v1023 = vpop.trf.xlu0
    %v1024 = vpop.trf.xlu0
    %v1025 = vpop.trf.xlu0
    %v1026 = vpop.trf.xlu0
    %v1027 = vpop.trf.xlu0
    %v1028 = vpop.trf.xlu0
    %v1029 = vpop.trf.xlu0
    %v1030 = vpop.trf.xlu0
    %v1031 = vpop.trf.xlu0
    %v1032 = vpop.trf.xlu0
    %v1033 = vpop.trf.xlu0
    %v1034 = vpop.trf.xlu0
    %v1035 = vpop.trf.xlu0
    %v1036 = vpop.trf.xlu0
    %1037 = vxpose.xlu0.b32.start [1/16] %v519, 128
    %1038 = vxpose.xlu0.b32.cont [2/16] 0.0, 128
    %1039 = vxpose.xlu0.b32.cont [3/16] 0.0, 128
    %1040 = vxpose.xlu0.b32.cont [4/16] 0.0, 128
    %1041 = vxpose.xlu0.b32.cont [5/16] 0.0, 128
    %1042 = vxpose.xlu0.b32.cont [6/16] 0.0, 128
    %1043 = vxpose.xlu0.b32.cont [7/16] 0.0, 128
    %1044 = vxpose.xlu0.b32.cont [8/16] 0.0, 128
    %1045 = vxpose.xlu0.b32.cont [9/16] 0.0, 128
    %1046 = vxpose.xlu0.b32.cont [10/16] 0.0, 128
    %1047 = vxpose.xlu0.b32.cont [11/16] 0.0, 128
    %1048 = vxpose.xlu0.b32.cont [12/16] 0.0, 128
    %1049 = vxpose.xlu0.b32.cont [13/16] 0.0, 128
    %1050 = vxpose.xlu0.b32.cont [14/16] 0.0, 128
    %1051 = vxpose.xlu0.b32.cont [15/16] 0.0, 128
    %1052 = vxpose.xlu0.b32.end [16/16] 0.0, 128
    %v1053 = vpop.trf.xlu0
    %v1054 = vpop.trf.xlu0
    %v1055 = vpop.trf.xlu0
    %v1056 = vpop.trf.xlu0
    %v1057 = vpop.trf.xlu0
    %v1058 = vpop.trf.xlu0
    %v1059 = vpop.trf.xlu0
    %v1060 = vpop.trf.xlu0
    %v1061 = vpop.trf.xlu0
    %v1062 = vpop.trf.xlu0
    %v1063 = vpop.trf.xlu0
    %v1064 = vpop.trf.xlu0
    %v1065 = vpop.trf.xlu0
    %v1066 = vpop.trf.xlu0
    %v1067 = vpop.trf.xlu0
    %v1068 = vpop.trf.xlu0
    %1069 = vxpose.xlu0.b32.start [1/16] %v522, 128
    %1070 = vxpose.xlu0.b32.cont [2/16] 0.0, 128
    %1071 = vxpose.xlu0.b32.cont [3/16] 0.0, 128
    %1072 = vxpose.xlu0.b32.cont [4/16] 0.0, 128
    %1073 = vxpose.xlu0.b32.cont [5/16] 0.0, 128
    %1074 = vxpose.xlu0.b32.cont [6/16] 0.0, 128
    %1075 = vxpose.xlu0.b32.cont [7/16] 0.0, 128
    %1076 = vxpose.xlu0.b32.cont [8/16] 0.0, 128
    %1077 = vxpose.xlu0.b32.cont [9/16] 0.0, 128
    %1078 = vxpose.xlu0.b32.cont [10/16] 0.0, 128
    %1079 = vxpose.xlu0.b32.cont [11/16] 0.0, 128
    %1080 = vxpose.xlu0.b32.cont [12/16] 0.0, 128
    %1081 = vxpose.xlu0.b32.cont [13/16] 0.0, 128
    %1082 = vxpose.xlu0.b32.cont [14/16] 0.0, 128
    %1083 = vxpose.xlu0.b32.cont [15/16] 0.0, 128
    %1084 = vxpose.xlu0.b32.end [16/16] 0.0, 128
    %v1085 = vpop.trf.xlu0
    %v1086 = vpop.trf.xlu0
    %v1087 = vpop.trf.xlu0
    %v1088 = vpop.trf.xlu0
    %v1089 = vpop.trf.xlu0
    %v1090 = vpop.trf.xlu0
    %v1091 = vpop.trf.xlu0
    %v1092 = vpop.trf.xlu0
    %v1093 = vpop.trf.xlu0
    %v1094 = vpop.trf.xlu0
    %v1095 = vpop.trf.xlu0
    %v1096 = vpop.trf.xlu0
    %v1097 = vpop.trf.xlu0
    %v1098 = vpop.trf.xlu0
    %v1099 = vpop.trf.xlu0
    %v1100 = vpop.trf.xlu0
    %1101 = vxpose.xlu0.b32.start [1/16] %v527, 128
    %1102 = vxpose.xlu0.b32.cont [2/16] 0.0, 128
    %1103 = vxpose.xlu0.b32.cont [3/16] 0.0, 128
    %1104 = vxpose.xlu0.b32.cont [4/16] 0.0, 128
    %1105 = vxpose.xlu0.b32.cont [5/16] 0.0, 128
    %1106 = vxpose.xlu0.b32.cont [6/16] 0.0, 128
    %1107 = vxpose.xlu0.b32.cont [7/16] 0.0, 128
    %1108 = vxpose.xlu0.b32.cont [8/16] 0.0, 128
    %1109 = vxpose.xlu0.b32.cont [9/16] 0.0, 128
    %1110 = vxpose.xlu0.b32.cont [10/16] 0.0, 128
    %1111 = vxpose.xlu0.b32.cont [11/16] 0.0, 128
    %1112 = vxpose.xlu0.b32.cont [12/16] 0.0, 128
    %1113 = vxpose.xlu0.b32.cont [13/16] 0.0, 128
    %1114 = vxpose.xlu0.b32.cont [14/16] 0.0, 128
    %1115 = vxpose.xlu0.b32.cont [15/16] 0.0, 128
    %1116 = vxpose.xlu0.b32.end [16/16] 0.0, 128
    %v1117 = vpop.trf.xlu0
    %v1118 = vpop.trf.xlu0
    %v1119 = vpop.trf.xlu0
    %v1120 = vpop.trf.xlu0
    %v1121 = vpop.trf.xlu0
    %v1122 = vpop.trf.xlu0
    %v1123 = vpop.trf.xlu0
    %v1124 = vpop.trf.xlu0
    %v1125 = vpop.trf.xlu0
    %v1126 = vpop.trf.xlu0
    %v1127 = vpop.trf.xlu0
    %v1128 = vpop.trf.xlu0
    %v1129 = vpop.trf.xlu0
    %v1130 = vpop.trf.xlu0
    %v1131 = vpop.trf.xlu0
    %v1132 = vpop.trf.xlu0
    %1133 = vxpose.xlu0.b32.start [1/16] %v530, 128
    %1134 = vxpose.xlu0.b32.cont [2/16] 0.0, 128
    %1135 = vxpose.xlu0.b32.cont [3/16] 0.0, 128
    %1136 = vxpose.xlu0.b32.cont [4/16] 0.0, 128
    %1137 = vxpose.xlu0.b32.cont [5/16] 0.0, 128
    %1138 = vxpose.xlu0.b32.cont [6/16] 0.0, 128
    %1139 = vxpose.xlu0.b32.cont [7/16] 0.0, 128
    %1140 = vxpose.xlu0.b32.cont [8/16] 0.0, 128
    %1141 = vxpose.xlu0.b32.cont [9/16] 0.0, 128
    %1142 = vxpose.xlu0.b32.cont [10/16] 0.0, 128
    %1143 = vxpose.xlu0.b32.cont [11/16] 0.0, 128
    %1144 = vxpose.xlu0.b32.cont [12/16] 0.0, 128
    %1145 = vxpose.xlu0.b32.cont [13/16] 0.0, 128
    %1146 = vxpose.xlu0.b32.cont [14/16] 0.0, 128
    %1147 = vxpose.xlu0.b32.cont [15/16] 0.0, 128
    %1148 = vxpose.xlu0.b32.end [16/16] 0.0, 128
    %v1149 = vpop.trf.xlu0
    %v1150 = vpop.trf.xlu0
    %v1151 = vpop.trf.xlu0
    %v1152 = vpop.trf.xlu0
    %v1153 = vpop.trf.xlu0
    %v1154 = vpop.trf.xlu0
    %v1155 = vpop.trf.xlu0
    %v1156 = vpop.trf.xlu0
    %v1157 = vpop.trf.xlu0
    %v1158 = vpop.trf.xlu0
    %v1159 = vpop.trf.xlu0
    %v1160 = vpop.trf.xlu0
    %v1161 = vpop.trf.xlu0
    %v1162 = vpop.trf.xlu0
    %v1163 = vpop.trf.xlu0
    %v1164 = vpop.trf.xlu0
    %1165 = vxpose.xlu0.b32.start [1/16] %v535, 128
    %1166 = vxpose.xlu0.b32.cont [2/16] 0.0, 128
    %1167 = vxpose.xlu0.b32.cont [3/16] 0.0, 128
    %1168 = vxpose.xlu0.b32.cont [4/16] 0.0, 128
    %1169 = vxpose.xlu0.b32.cont [5/16] 0.0, 128
    %1170 = vxpose.xlu0.b32.cont [6/16] 0.0, 128
    %1171 = vxpose.xlu0.b32.cont [7/16] 0.0, 128
    %1172 = vxpose.xlu0.b32.cont [8/16] 0.0, 128
    %1173 = vxpose.xlu0.b32.cont [9/16] 0.0, 128
    %1174 = vxpose.xlu0.b32.cont [10/16] 0.0, 128
    %1175 = vxpose.xlu0.b32.cont [11/16] 0.0, 128
    %1176 = vxpose.xlu0.b32.cont [12/16] 0.0, 128
    %1177 = vxpose.xlu0.b32.cont [13/16] 0.0, 128
    %1178 = vxpose.xlu0.b32.cont [14/16] 0.0, 128
    %1179 = vxpose.xlu0.b32.cont [15/16] 0.0, 128
    %1180 = vxpose.xlu0.b32.end [16/16] 0.0, 128
    %v1181 = vpop.trf.xlu0
    %v1182 = vpop.trf.xlu0
    %v1183 = vpop.trf.xlu0
    %v1184 = vpop.trf.xlu0
    %v1185 = vpop.trf.xlu0
    %v1186 = vpop.trf.xlu0
    %v1187 = vpop.trf.xlu0
    %v1188 = vpop.trf.xlu0
    %v1189 = vpop.trf.xlu0
    %v1190 = vpop.trf.xlu0
    %v1191 = vpop.trf.xlu0
    %v1192 = vpop.trf.xlu0
    %v1193 = vpop.trf.xlu0
    %v1194 = vpop.trf.xlu0
    %v1195 = vpop.trf.xlu0
    %v1196 = vpop.trf.xlu0
    %1197 = vxpose.xlu0.b32.start [1/16] %v538, 128
    %1198 = vxpose.xlu0.b32.cont [2/16] 0.0, 128
    %1199 = vxpose.xlu0.b32.cont [3/16] 0.0, 128
    %1200 = vxpose.xlu0.b32.cont [4/16] 0.0, 128
    %1201 = vxpose.xlu0.b32.cont [5/16] 0.0, 128
    %1202 = vxpose.xlu0.b32.cont [6/16] 0.0, 128
    %1203 = vxpose.xlu0.b32.cont [7/16] 0.0, 128
    %1204 = vxpose.xlu0.b32.cont [8/16] 0.0, 128
    %1205 = vxpose.xlu0.b32.cont [9/16] 0.0, 128
    %1206 = vxpose.xlu0.b32.cont [10/16] 0.0, 128
    %1207 = vxpose.xlu0.b32.cont [11/16] 0.0, 128
    %1208 = vxpose.xlu0.b32.cont [12/16] 0.0, 128
    %1209 = vxpose.xlu0.b32.cont [13/16] 0.0, 128
    %1210 = vxpose.xlu0.b32.cont [14/16] 0.0, 128
    %1211 = vxpose.xlu0.b32.cont [15/16] 0.0, 128
    %1212 = vxpose.xlu0.b32.end [16/16] 0.0, 128
    %v1213 = vpop.trf.xlu0
    %v1214 = vpop.trf.xlu0
    %v1215 = vpop.trf.xlu0
    %v1216 = vpop.trf.xlu0
    %v1217 = vpop.trf.xlu0
    %v1218 = vpop.trf.xlu0
    %v1219 = vpop.trf.xlu0
    %v1220 = vpop.trf.xlu0
    %v1221 = vpop.trf.xlu0
    %v1222 = vpop.trf.xlu0
    %v1223 = vpop.trf.xlu0
    %v1224 = vpop.trf.xlu0
    %v1225 = vpop.trf.xlu0
    %v1226 = vpop.trf.xlu0
    %v1227 = vpop.trf.xlu0
    %v1228 = vpop.trf.xlu0
    %1229 = vxpose.xlu0.b32.start [1/16] %v543, 128
    %1230 = vxpose.xlu0.b32.cont [2/16] 0.0, 128
    %1231 = vxpose.xlu0.b32.cont [3/16] 0.0, 128
    %1232 = vxpose.xlu0.b32.cont [4/16] 0.0, 128
    %1233 = vxpose.xlu0.b32.cont [5/16] 0.0, 128
    %1234 = vxpose.xlu0.b32.cont [6/16] 0.0, 128
    %1235 = vxpose.xlu0.b32.cont [7/16] 0.0, 128
    %1236 = vxpose.xlu0.b32.cont [8/16] 0.0, 128
    %1237 = vxpose.xlu0.b32.cont [9/16] 0.0, 128
    %1238 = vxpose.xlu0.b32.cont [10/16] 0.0, 128
    %1239 = vxpose.xlu0.b32.cont [11/16] 0.0, 128
    %1240 = vxpose.xlu0.b32.cont [12/16] 0.0, 128
    %1241 = vxpose.xlu0.b32.cont [13/16] 0.0, 128
    %1242 = vxpose.xlu0.b32.cont [14/16] 0.0, 128
    %1243 = vxpose.xlu0.b32.cont [15/16] 0.0, 128
    %1244 = vxpose.xlu0.b32.end [16/16] 0.0, 128
    %v1245 = vpop.trf.xlu0
    %v1246 = vpop.trf.xlu0
    %v1247 = vpop.trf.xlu0
    %v1248 = vpop.trf.xlu0
    %v1249 = vpop.trf.xlu0
    %v1250 = vpop.trf.xlu0
    %v1251 = vpop.trf.xlu0
    %v1252 = vpop.trf.xlu0
    %v1253 = vpop.trf.xlu0
    %v1254 = vpop.trf.xlu0
    %v1255 = vpop.trf.xlu0
    %v1256 = vpop.trf.xlu0
    %v1257 = vpop.trf.xlu0
    %v1258 = vpop.trf.xlu0
    %v1259 = vpop.trf.xlu0
    %v1260 = vpop.trf.xlu0
    %1261 = vxpose.xlu0.b32.start [1/16] %v546, 128
    %1262 = vxpose.xlu0.b32.cont [2/16] 0.0, 128
    %1263 = vxpose.xlu0.b32.cont [3/16] 0.0, 128
    %1264 = vxpose.xlu0.b32.cont [4/16] 0.0, 128
    %1265 = vxpose.xlu0.b32.cont [5/16] 0.0, 128
    %1266 = vxpose.xlu0.b32.cont [6/16] 0.0, 128
    %1267 = vxpose.xlu0.b32.cont [7/16] 0.0, 128
    %1268 = vxpose.xlu0.b32.cont [8/16] 0.0, 128
    %1269 = vxpose.xlu0.b32.cont [9/16] 0.0, 128
    %1270 = vxpose.xlu0.b32.cont [10/16] 0.0, 128
    %1271 = vxpose.xlu0.b32.cont [11/16] 0.0, 128
    %1272 = vxpose.xlu0.b32.cont [12/16] 0.0, 128
    %1273 = vxpose.xlu0.b32.cont [13/16] 0.0, 128
    %1274 = vxpose.xlu0.b32.cont [14/16] 0.0, 128
    %1275 = vxpose.xlu0.b32.cont [15/16] 0.0, 128
    %1276 = vxpose.xlu0.b32.end [16/16] 0.0, 128
    %v1277 = vpop.trf.xlu0
    %v1278 = vpop.trf.xlu0
    %v1279 = vpop.trf.xlu0
    %v1280 = vpop.trf.xlu0
    %v1281 = vpop.trf.xlu0
    %v1282 = vpop.trf.xlu0
    %v1283 = vpop.trf.xlu0
    %v1284 = vpop.trf.xlu0
    %v1285 = vpop.trf.xlu0
    %v1286 = vpop.trf.xlu0
    %v1287 = vpop.trf.xlu0
    %v1288 = vpop.trf.xlu0
    %v1289 = vpop.trf.xlu0
    %v1290 = vpop.trf.xlu0
    %v1291 = vpop.trf.xlu0
    %v1292 = vpop.trf.xlu0
    %1293 = vxpose.xlu0.b32.start [1/16] %v551, 128
    %1294 = vxpose.xlu0.b32.cont [2/16] 0.0, 128
    %1295 = vxpose.xlu0.b32.cont [3/16] 0.0, 128
    %1296 = vxpose.xlu0.b32.cont [4/16] 0.0, 128
    %1297 = vxpose.xlu0.b32.cont [5/16] 0.0, 128
    %1298 = vxpose.xlu0.b32.cont [6/16] 0.0, 128
    %1299 = vxpose.xlu0.b32.cont [7/16] 0.0, 128
    %1300 = vxpose.xlu0.b32.cont [8/16] 0.0, 128
    %1301 = vxpose.xlu0.b32.cont [9/16] 0.0, 128
    %1302 = vxpose.xlu0.b32.cont [10/16] 0.0, 128
    %1303 = vxpose.xlu0.b32.cont [11/16] 0.0, 128
    %1304 = vxpose.xlu0.b32.cont [12/16] 0.0, 128
    %1305 = vxpose.xlu0.b32.cont [13/16] 0.0, 128
    %1306 = vxpose.xlu0.b32.cont [14/16] 0.0, 128
    %1307 = vxpose.xlu0.b32.cont [15/16] 0.0, 128
    %1308 = vxpose.xlu0.b32.end [16/16] 0.0, 128
    %v1309 = vpop.trf.xlu0
    %v1310 = vpop.trf.xlu0
    %v1311 = vpop.trf.xlu0
    %v1312 = vpop.trf.xlu0
    %v1313 = vpop.trf.xlu0
    %v1314 = vpop.trf.xlu0
    %v1315 = vpop.trf.xlu0
    %v1316 = vpop.trf.xlu0
    %v1317 = vpop.trf.xlu0
    %v1318 = vpop.trf.xlu0
    %v1319 = vpop.trf.xlu0
    %v1320 = vpop.trf.xlu0
    %v1321 = vpop.trf.xlu0
    %v1322 = vpop.trf.xlu0
    %v1323 = vpop.trf.xlu0
    %v1324 = vpop.trf.xlu0
    %1325 = vxpose.xlu0.b32.start [1/16] %v554, 128
    %1326 = vxpose.xlu0.b32.cont [2/16] 0.0, 128
    %1327 = vxpose.xlu0.b32.cont [3/16] 0.0, 128
    %1328 = vxpose.xlu0.b32.cont [4/16] 0.0, 128
    %1329 = vxpose.xlu0.b32.cont [5/16] 0.0, 128
    %1330 = vxpose.xlu0.b32.cont [6/16] 0.0, 128
    %1331 = vxpose.xlu0.b32.cont [7/16] 0.0, 128
    %1332 = vxpose.xlu0.b32.cont [8/16] 0.0, 128
    %1333 = vxpose.xlu0.b32.cont [9/16] 0.0, 128
    %1334 = vxpose.xlu0.b32.cont [10/16] 0.0, 128
    %1335 = vxpose.xlu0.b32.cont [11/16] 0.0, 128
    %1336 = vxpose.xlu0.b32.cont [12/16] 0.0, 128
    %1337 = vxpose.xlu0.b32.cont [13/16] 0.0, 128
    %1338 = vxpose.xlu0.b32.cont [14/16] 0.0, 128
    %1339 = vxpose.xlu0.b32.cont [15/16] 0.0, 128
    %1340 = vxpose.xlu0.b32.end [16/16] 0.0, 128
    %v1341 = vpop.trf.xlu0
    %v1342 = vpop.trf.xlu0
    %v1343 = vpop.trf.xlu0
    %v1344 = vpop.trf.xlu0
    %v1345 = vpop.trf.xlu0
    %v1346 = vpop.trf.xlu0
    %v1347 = vpop.trf.xlu0
    %v1348 = vpop.trf.xlu0
    %v1349 = vpop.trf.xlu0
    %v1350 = vpop.trf.xlu0
    %v1351 = vpop.trf.xlu0
    %v1352 = vpop.trf.xlu0
    %v1353 = vpop.trf.xlu0
    %v1354 = vpop.trf.xlu0
    %v1355 = vpop.trf.xlu0
    %v1356 = vpop.trf.xlu0
    %1357 = vxpose.xlu0.b32.start [1/16] %v559, 128
    %1358 = vxpose.xlu0.b32.cont [2/16] 0.0, 128
    %1359 = vxpose.xlu0.b32.cont [3/16] 0.0, 128
    %1360 = vxpose.xlu0.b32.cont [4/16] 0.0, 128
    %1361 = vxpose.xlu0.b32.cont [5/16] 0.0, 128
    %1362 = vxpose.xlu0.b32.cont [6/16] 0.0, 128
    %1363 = vxpose.xlu0.b32.cont [7/16] 0.0, 128
    %1364 = vxpose.xlu0.b32.cont [8/16] 0.0, 128
    %1365 = vxpose.xlu0.b32.cont [9/16] 0.0, 128
    %1366 = vxpose.xlu0.b32.cont [10/16] 0.0, 128
    %1367 = vxpose.xlu0.b32.cont [11/16] 0.0, 128
    %1368 = vxpose.xlu0.b32.cont [12/16] 0.0, 128
    %1369 = vxpose.xlu0.b32.cont [13/16] 0.0, 128
    %1370 = vxpose.xlu0.b32.cont [14/16] 0.0, 128
    %1371 = vxpose.xlu0.b32.cont [15/16] 0.0, 128
    %1372 = vxpose.xlu0.b32.end [16/16] 0.0, 128
    %v1373 = vpop.trf.xlu0
    %v1374 = vpop.trf.xlu0
    %v1375 = vpop.trf.xlu0
    %v1376 = vpop.trf.xlu0
    %v1377 = vpop.trf.xlu0
    %v1378 = vpop.trf.xlu0
    %v1379 = vpop.trf.xlu0
    %v1380 = vpop.trf.xlu0
    %v1381 = vpop.trf.xlu0
    %v1382 = vpop.trf.xlu0
    %v1383 = vpop.trf.xlu0
    %v1384 = vpop.trf.xlu0
    %v1385 = vpop.trf.xlu0
    %v1386 = vpop.trf.xlu0
    %v1387 = vpop.trf.xlu0
    %v1388 = vpop.trf.xlu0
    %1389 = vxpose.xlu0.b32.start [1/16] %v562, 128
    %1390 = vxpose.xlu0.b32.cont [2/16] 0.0, 128
    %1391 = vxpose.xlu0.b32.cont [3/16] 0.0, 128
    %1392 = vxpose.xlu0.b32.cont [4/16] 0.0, 128
    %1393 = vxpose.xlu0.b32.cont [5/16] 0.0, 128
    %1394 = vxpose.xlu0.b32.cont [6/16] 0.0, 128
    %1395 = vxpose.xlu0.b32.cont [7/16] 0.0, 128
    %1396 = vxpose.xlu0.b32.cont [8/16] 0.0, 128
    %1397 = vxpose.xlu0.b32.cont [9/16] 0.0, 128
    %1398 = vxpose.xlu0.b32.cont [10/16] 0.0, 128
    %1399 = vxpose.xlu0.b32.cont [11/16] 0.0, 128
    %1400 = vxpose.xlu0.b32.cont [12/16] 0.0, 128
    %1401 = vxpose.xlu0.b32.cont [13/16] 0.0, 128
    %1402 = vxpose.xlu0.b32.cont [14/16] 0.0, 128
    %1403 = vxpose.xlu0.b32.cont [15/16] 0.0, 128
    %1404 = vxpose.xlu0.b32.end [16/16] 0.0, 128
    %v1405 = vpop.trf.xlu0
    %v1406 = vpop.trf.xlu0
    %v1407 = vpop.trf.xlu0
    %v1408 = vpop.trf.xlu0
    %v1409 = vpop.trf.xlu0
    %v1410 = vpop.trf.xlu0
    %v1411 = vpop.trf.xlu0
    %v1412 = vpop.trf.xlu0
    %v1413 = vpop.trf.xlu0
    %v1414 = vpop.trf.xlu0
    %v1415 = vpop.trf.xlu0
    %v1416 = vpop.trf.xlu0
    %v1417 = vpop.trf.xlu0
    %v1418 = vpop.trf.xlu0
    %v1419 = vpop.trf.xlu0
    %v1420 = vpop.trf.xlu0
    %1421 = vxpose.xlu0.b32.start [1/16] %v567, 128
    %1422 = vxpose.xlu0.b32.cont [2/16] 0.0, 128
    %1423 = vxpose.xlu0.b32.cont [3/16] 0.0, 128
    %1424 = vxpose.xlu0.b32.cont [4/16] 0.0, 128
    %1425 = vxpose.xlu0.b32.cont [5/16] 0.0, 128
    %1426 = vxpose.xlu0.b32.cont [6/16] 0.0, 128
    %1427 = vxpose.xlu0.b32.cont [7/16] 0.0, 128
    %1428 = vxpose.xlu0.b32.cont [8/16] 0.0, 128
    %1429 = vxpose.xlu0.b32.cont [9/16] 0.0, 128
    %1430 = vxpose.xlu0.b32.cont [10/16] 0.0, 128
    %1431 = vxpose.xlu0.b32.cont [11/16] 0.0, 128
    %1432 = vxpose.xlu0.b32.cont [12/16] 0.0, 128
    %1433 = vxpose.xlu0.b32.cont [13/16] 0.0, 128
    %1434 = vxpose.xlu0.b32.cont [14/16] 0.0, 128
    %1435 = vxpose.xlu0.b32.cont [15/16] 0.0, 128
    %1436 = vxpose.xlu0.b32.end [16/16] 0.0, 128
    %v1437 = vpop.trf.xlu0
    %v1438 = vpop.trf.xlu0
    %v1439 = vpop.trf.xlu0
    %v1440 = vpop.trf.xlu0
    %v1441 = vpop.trf.xlu0
    %v1442 = vpop.trf.xlu0
    %v1443 = vpop.trf.xlu0
    %v1444 = vpop.trf.xlu0
    %v1445 = vpop.trf.xlu0
    %v1446 = vpop.trf.xlu0
    %v1447 = vpop.trf.xlu0
    %v1448 = vpop.trf.xlu0
    %v1449 = vpop.trf.xlu0
    %v1450 = vpop.trf.xlu0
    %v1451 = vpop.trf.xlu0
    %v1452 = vpop.trf.xlu0
    %1453 = vxpose.xlu0.b32.start [1/16] %v570, 128
    %1454 = vxpose.xlu0.b32.cont [2/16] 0.0, 128
    %1455 = vxpose.xlu0.b32.cont [3/16] 0.0, 128
    %1456 = vxpose.xlu0.b32.cont [4/16] 0.0, 128
    %1457 = vxpose.xlu0.b32.cont [5/16] 0.0, 128
    %1458 = vxpose.xlu0.b32.cont [6/16] 0.0, 128
    %1459 = vxpose.xlu0.b32.cont [7/16] 0.0, 128
    %1460 = vxpose.xlu0.b32.cont [8/16] 0.0, 128
    %1461 = vxpose.xlu0.b32.cont [9/16] 0.0, 128
    %1462 = vxpose.xlu0.b32.cont [10/16] 0.0, 128
    %1463 = vxpose.xlu0.b32.cont [11/16] 0.0, 128
    %1464 = vxpose.xlu0.b32.cont [12/16] 0.0, 128
    %1465 = vxpose.xlu0.b32.cont [13/16] 0.0, 128
    %1466 = vxpose.xlu0.b32.cont [14/16] 0.0, 128
    %1467 = vxpose.xlu0.b32.cont [15/16] 0.0, 128
    %1468 = vxpose.xlu0.b32.end [16/16] 0.0, 128
    %v1469 = vpop.trf.xlu0
    %v1470 = vpop.trf.xlu0
    %v1471 = vpop.trf.xlu0
    %v1472 = vpop.trf.xlu0
    %v1473 = vpop.trf.xlu0
    %v1474 = vpop.trf.xlu0
    %v1475 = vpop.trf.xlu0
    %v1476 = vpop.trf.xlu0
    %v1477 = vpop.trf.xlu0
    %v1478 = vpop.trf.xlu0
    %v1479 = vpop.trf.xlu0
    %v1480 = vpop.trf.xlu0
    %v1481 = vpop.trf.xlu0
    %v1482 = vpop.trf.xlu0
    %v1483 = vpop.trf.xlu0
    %v1484 = vpop.trf.xlu0
    %1485 = vxpose.xlu0.b32.start [1/16] %v575, 128
    %1486 = vxpose.xlu0.b32.cont [2/16] 0.0, 128
    %1487 = vxpose.xlu0.b32.cont [3/16] 0.0, 128
    %1488 = vxpose.xlu0.b32.cont [4/16] 0.0, 128
    %1489 = vxpose.xlu0.b32.cont [5/16] 0.0, 128
    %1490 = vxpose.xlu0.b32.cont [6/16] 0.0, 128
    %1491 = vxpose.xlu0.b32.cont [7/16] 0.0, 128
    %1492 = vxpose.xlu0.b32.cont [8/16] 0.0, 128
    %1493 = vxpose.xlu0.b32.cont [9/16] 0.0, 128
    %1494 = vxpose.xlu0.b32.cont [10/16] 0.0, 128
    %1495 = vxpose.xlu0.b32.cont [11/16] 0.0, 128
    %1496 = vxpose.xlu0.b32.cont [12/16] 0.0, 128
    %1497 = vxpose.xlu0.b32.cont [13/16] 0.0, 128
    %1498 = vxpose.xlu0.b32.cont [14/16] 0.0, 128
    %1499 = vxpose.xlu0.b32.cont [15/16] 0.0, 128
    %1500 = vxpose.xlu0.b32.end [16/16] 0.0, 128
    %v1501 = vpop.trf.xlu0
    %v1502 = vpop.trf.xlu0
    %v1503 = vpop.trf.xlu0
    %v1504 = vpop.trf.xlu0
    %v1505 = vpop.trf.xlu0
    %v1506 = vpop.trf.xlu0
    %v1507 = vpop.trf.xlu0
    %v1508 = vpop.trf.xlu0
    %v1509 = vpop.trf.xlu0
    %v1510 = vpop.trf.xlu0
    %v1511 = vpop.trf.xlu0
    %v1512 = vpop.trf.xlu0
    %v1513 = vpop.trf.xlu0
    %v1514 = vpop.trf.xlu0
    %v1515 = vpop.trf.xlu0
    %v1516 = vpop.trf.xlu0
    %1517 = vxpose.xlu0.b32.start [1/16] %v578, 128
    %1518 = vxpose.xlu0.b32.cont [2/16] 0.0, 128
    %1519 = vxpose.xlu0.b32.cont [3/16] 0.0, 128
    %1520 = vxpose.xlu0.b32.cont [4/16] 0.0, 128
    %1521 = vxpose.xlu0.b32.cont [5/16] 0.0, 128
    %1522 = vxpose.xlu0.b32.cont [6/16] 0.0, 128
    %1523 = vxpose.xlu0.b32.cont [7/16] 0.0, 128
    %1524 = vxpose.xlu0.b32.cont [8/16] 0.0, 128
    %1525 = vxpose.xlu0.b32.cont [9/16] 0.0, 128
    %1526 = vxpose.xlu0.b32.cont [10/16] 0.0, 128
    %1527 = vxpose.xlu0.b32.cont [11/16] 0.0, 128
    %1528 = vxpose.xlu0.b32.cont [12/16] 0.0, 128
    %1529 = vxpose.xlu0.b32.cont [13/16] 0.0, 128
    %1530 = vxpose.xlu0.b32.cont [14/16] 0.0, 128
    %1531 = vxpose.xlu0.b32.cont [15/16] 0.0, 128
    %1532 = vxpose.xlu0.b32.end [16/16] 0.0, 128
    %v1533 = vpop.trf.xlu0
    %v1534 = vpop.trf.xlu0
    %v1535 = vpop.trf.xlu0
    %v1536 = vpop.trf.xlu0
    %v1537 = vpop.trf.xlu0
    %v1538 = vpop.trf.xlu0
    %v1539 = vpop.trf.xlu0
    %v1540 = vpop.trf.xlu0
    %v1541 = vpop.trf.xlu0
    %v1542 = vpop.trf.xlu0
    %v1543 = vpop.trf.xlu0
    %v1544 = vpop.trf.xlu0
    %v1545 = vpop.trf.xlu0
    %v1546 = vpop.trf.xlu0
    %v1547 = vpop.trf.xlu0
    %v1548 = vpop.trf.xlu0
    %1549 = vxpose.xlu0.b32.start [1/16] %v583, 128
    %1550 = vxpose.xlu0.b32.cont [2/16] 0.0, 128
    %1551 = vxpose.xlu0.b32.cont [3/16] 0.0, 128
    %1552 = vxpose.xlu0.b32.cont [4/16] 0.0, 128
    %1553 = vxpose.xlu0.b32.cont [5/16] 0.0, 128
    %1554 = vxpose.xlu0.b32.cont [6/16] 0.0, 128
    %1555 = vxpose.xlu0.b32.cont [7/16] 0.0, 128
    %1556 = vxpose.xlu0.b32.cont [8/16] 0.0, 128
    %1557 = vxpose.xlu0.b32.cont [9/16] 0.0, 128
    %1558 = vxpose.xlu0.b32.cont [10/16] 0.0, 128
    %1559 = vxpose.xlu0.b32.cont [11/16] 0.0, 128
    %1560 = vxpose.xlu0.b32.cont [12/16] 0.0, 128
    %1561 = vxpose.xlu0.b32.cont [13/16] 0.0, 128
    %1562 = vxpose.xlu0.b32.cont [14/16] 0.0, 128
    %1563 = vxpose.xlu0.b32.cont [15/16] 0.0, 128
    %1564 = vxpose.xlu0.b32.end [16/16] 0.0, 128
    %v1565 = vpop.trf.xlu0
    %v1566 = vpop.trf.xlu0
    %v1567 = vpop.trf.xlu0
    %v1568 = vpop.trf.xlu0
    %v1569 = vpop.trf.xlu0
    %v1570 = vpop.trf.xlu0
    %v1571 = vpop.trf.xlu0
    %v1572 = vpop.trf.xlu0
    %v1573 = vpop.trf.xlu0
    %v1574 = vpop.trf.xlu0
    %v1575 = vpop.trf.xlu0
    %v1576 = vpop.trf.xlu0
    %v1577 = vpop.trf.xlu0
    %v1578 = vpop.trf.xlu0
    %v1579 = vpop.trf.xlu0
    %v1580 = vpop.trf.xlu0
    %1581 = vxpose.xlu0.b32.start [1/16] %v586, 128
    %1582 = vxpose.xlu0.b32.cont [2/16] 0.0, 128
    %1583 = vxpose.xlu0.b32.cont [3/16] 0.0, 128
    %1584 = vxpose.xlu0.b32.cont [4/16] 0.0, 128
    %1585 = vxpose.xlu0.b32.cont [5/16] 0.0, 128
    %1586 = vxpose.xlu0.b32.cont [6/16] 0.0, 128
    %1587 = vxpose.xlu0.b32.cont [7/16] 0.0, 128
    %1588 = vxpose.xlu0.b32.cont [8/16] 0.0, 128
    %1589 = vxpose.xlu0.b32.cont [9/16] 0.0, 128
    %1590 = vxpose.xlu0.b32.cont [10/16] 0.0, 128
    %1591 = vxpose.xlu0.b32.cont [11/16] 0.0, 128
    %1592 = vxpose.xlu0.b32.cont [12/16] 0.0, 128
    %1593 = vxpose.xlu0.b32.cont [13/16] 0.0, 128
    %1594 = vxpose.xlu0.b32.cont [14/16] 0.0, 128
    %1595 = vxpose.xlu0.b32.cont [15/16] 0.0, 128
    %1596 = vxpose.xlu0.b32.end [16/16] 0.0, 128
    %v1597 = vpop.trf.xlu0
    %v1598 = vpop.trf.xlu0
    %v1599 = vpop.trf.xlu0
    %v1600 = vpop.trf.xlu0
    %v1601 = vpop.trf.xlu0
    %v1602 = vpop.trf.xlu0
    %v1603 = vpop.trf.xlu0
    %v1604 = vpop.trf.xlu0
    %v1605 = vpop.trf.xlu0
    %v1606 = vpop.trf.xlu0
    %v1607 = vpop.trf.xlu0
    %v1608 = vpop.trf.xlu0
    %v1609 = vpop.trf.xlu0
    %v1610 = vpop.trf.xlu0
    %v1611 = vpop.trf.xlu0
    %v1612 = vpop.trf.xlu0
    %vm1613 = vcmask 60416
    %v1614 = vsel %vm1613, %v605, -inf
    %1615 = vmax.xlane.f32.xlu0 %v1614
    %v1616 = vpop.xlane.xlu0 %1615
    %v1617 = vsel %vm1613, %v637, -inf
    %1618 = vmax.xlane.f32.xlu0 %v1617
    %v1619 = vpop.xlane.xlu0 %1618
    %v1620 = vsel %vm1613, %v669, -inf
    %1621 = vmax.xlane.f32.xlu0 %v1620
    %v1622 = vpop.xlane.xlu0 %1621
    %v1623 = vsel %vm1613, %v701, -inf
    %1624 = vmax.xlane.f32.xlu0 %v1623
    %v1625 = vpop.xlane.xlu0 %1624
    %v1626 = vsel %vm1613, %v733, -inf
    %1627 = vmax.xlane.f32.xlu0 %v1626
    %v1628 = vpop.xlane.xlu0 %1627
    %v1629 = vsel %vm1613, %v765, -inf
    %1630 = vmax.xlane.f32.xlu0 %v1629
    %v1631 = vpop.xlane.xlu0 %1630
    %v1632 = vsel %vm1613, %v797, -inf
    %1633 = vmax.xlane.f32.xlu0 %v1632
    %v1634 = vpop.xlane.xlu0 %1633
    %v1635 = vsel %vm1613, %v829, -inf
    %1636 = vmax.xlane.f32.xlu0 %v1635
    %v1637 = vpop.xlane.xlu0 %1636
    %v1638 = vsel %vm1613, %v861, -inf
    %1639 = vmax.xlane.f32.xlu0 %v1638
    %v1640 = vpop.xlane.xlu0 %1639
    %v1641 = vsel %vm1613, %v893, -inf
    %1642 = vmax.xlane.f32.xlu0 %v1641
    %v1643 = vpop.xlane.xlu0 %1642
    %v1644 = vsel %vm1613, %v925, -inf
    %1645 = vmax.xlane.f32.xlu0 %v1644
    %v1646 = vpop.xlane.xlu0 %1645
    %v1647 = vsel %vm1613, %v957, -inf
    %1648 = vmax.xlane.f32.xlu0 %v1647
    %v1649 = vpop.xlane.xlu0 %1648
    %v1650 = vsel %vm1613, %v989, -inf
    %1651 = vmax.xlane.f32.xlu0 %v1650
    %v1652 = vpop.xlane.xlu0 %1651
    %v1653 = vsel %vm1613, %v1021, -inf
    %1654 = vmax.xlane.f32.xlu0 %v1653
    %v1655 = vpop.xlane.xlu0 %1654
    %v1656 = vsel %vm1613, %v1053, -inf
    %1657 = vmax.xlane.f32.xlu0 %v1656
    %v1658 = vpop.xlane.xlu0 %1657
    %v1659 = vsel %vm1613, %v1085, -inf
    %1660 = vmax.xlane.f32.xlu0 %v1659
    %v1661 = vpop.xlane.xlu0 %1660
    %v1662 = vsel %vm1613, %v1117, -inf
    %1663 = vmax.xlane.f32.xlu0 %v1662
    %v1664 = vpop.xlane.xlu0 %1663
    %v1665 = vsel %vm1613, %v1149, -inf
    %1666 = vmax.xlane.f32.xlu0 %v1665
    %v1667 = vpop.xlane.xlu0 %1666
    %v1668 = vsel %vm1613, %v1181, -inf
    %1669 = vmax.xlane.f32.xlu0 %v1668
    %v1670 = vpop.xlane.xlu0 %1669
    %v1671 = vsel %vm1613, %v1213, -inf
    %1672 = vmax.xlane.f32.xlu0 %v1671
    %v1673 = vpop.xlane.xlu0 %1672
    %v1674 = vsel %vm1613, %v1245, -inf
    %1675 = vmax.xlane.f32.xlu0 %v1674
    %v1676 = vpop.xlane.xlu0 %1675
    %v1677 = vsel %vm1613, %v1277, -inf
    %1678 = vmax.xlane.f32.xlu0 %v1677
    %v1679 = vpop.xlane.xlu0 %1678
    %v1680 = vsel %vm1613, %v1309, -inf
    %1681 = vmax.xlane.f32.xlu0 %v1680
    %v1682 = vpop.xlane.xlu0 %1681
    %v1683 = vsel %vm1613, %v1341, -inf
    %1684 = vmax.xlane.f32.xlu0 %v1683
    %v1685 = vpop.xlane.xlu0 %1684
    %v1686 = vsel %vm1613, %v1373, -inf
    %1687 = vmax.xlane.f32.xlu0 %v1686
    %v1688 = vpop.xlane.xlu0 %1687
    %v1689 = vsel %vm1613, %v1405, -inf
    %1690 = vmax.xlane.f32.xlu0 %v1689
    %v1691 = vpop.xlane.xlu0 %1690
    %v1692 = vsel %vm1613, %v1437, -inf
    %1693 = vmax.xlane.f32.xlu0 %v1692
    %v1694 = vpop.xlane.xlu0 %1693
    %v1695 = vsel %vm1613, %v1469, -inf
    %1696 = vmax.xlane.f32.xlu0 %v1695
    %v1697 = vpop.xlane.xlu0 %1696
    %v1698 = vsel %vm1613, %v1501, -inf
    %1699 = vmax.xlane.f32.xlu0 %v1698
    %v1700 = vpop.xlane.xlu0 %1699
    %v1701 = vsel %vm1613, %v1533, -inf
    %1702 = vmax.xlane.f32.xlu0 %v1701
    %v1703 = vpop.xlane.xlu0 %1702
    %v1704 = vsel %vm1613, %v1565, -inf
    %1705 = vmax.xlane.f32.xlu0 %v1704
    %v1706 = vpop.xlane.xlu0 %1705
    %v1707 = vsel %vm1613, %v1597, -inf
    %1708 = vmax.xlane.f32.xlu0 %v1707
    %v1709 = vpop.xlane.xlu0 %1708
    %v1710 = vsub.f32 %v605, %v1616
    %v1711 = vsub.f32 %v637, %v1619
    %v1712 = vsub.f32 %v669, %v1622
    %v1713 = vsub.f32 %v701, %v1625
    %v1714 = vsub.f32 %v733, %v1628
    %v1715 = vsub.f32 %v765, %v1631
    %v1716 = vsub.f32 %v797, %v1634
    %v1717 = vsub.f32 %v829, %v1637
    %v1718 = vsub.f32 %v861, %v1640
    %v1719 = vsub.f32 %v893, %v1643
    %v1720 = vsub.f32 %v925, %v1646
    %v1721 = vsub.f32 %v957, %v1649
    %v1722 = vsub.f32 %v989, %v1652
    %v1723 = vsub.f32 %v1021, %v1655
    %v1724 = vsub.f32 %v1053, %v1658
    %v1725 = vsub.f32 %v1085, %v1661
    %v1726 = vsub.f32 %v1117, %v1664
    %v1727 = vsub.f32 %v1149, %v1667
    %v1728 = vsub.f32 %v1181, %v1670
    %v1729 = vsub.f32 %v1213, %v1673
    %v1730 = vsub.f32 %v1245, %v1676
    %v1731 = vsub.f32 %v1277, %v1679
    %v1732 = vsub.f32 %v1309, %v1682
    %v1733 = vsub.f32 %v1341, %v1685
    %v1734 = vsub.f32 %v1373, %v1688
    %v1735 = vsub.f32 %v1405, %v1691
    %v1736 = vsub.f32 %v1437, %v1694
    %v1737 = vsub.f32 %v1469, %v1697
    %v1738 = vsub.f32 %v1501, %v1700
    %v1739 = vsub.f32 %v1533, %v1703
    %v1740 = vsub.f32 %v1565, %v1706
    %v1741 = vsub.f32 %v1597, %v1709
    %v1742 = vmul.f32 %v1710, 1.442695
    %v1743 = vpow.pop %v1742
    %v1744 = vmul.f32 %v1711, 1.442695
    %v1745 = vpow.pop %v1744
    %v1746 = vmul.f32 %v1712, 1.442695
    %v1747 = vpow.pop %v1746
    %v1748 = vmul.f32 %v1713, 1.442695
    %v1749 = vpow.pop %v1748
    %v1750 = vmul.f32 %v1714, 1.442695
    %v1751 = vpow.pop %v1750
    %v1752 = vmul.f32 %v1715, 1.442695
    %v1753 = vpow.pop %v1752
    %v1754 = vmul.f32 %v1716, 1.442695
    %v1755 = vpow.pop %v1754
    %v1756 = vmul.f32 %v1717, 1.442695
    %v1757 = vpow.pop %v1756
    %v1758 = vmul.f32 %v1718, 1.442695
    %v1759 = vpow.pop %v1758
    %v1760 = vmul.f32 %v1719, 1.442695
    %v1761 = vpow.pop %v1760
    %v1762 = vmul.f32 %v1720, 1.442695
    %v1763 = vpow.pop %v1762
    %v1764 = vmul.f32 %v1721, 1.442695
    %v1765 = vpow.pop %v1764
    %v1766 = vmul.f32 %v1722, 1.442695
    %v1767 = vpow.pop %v1766
    %v1768 = vmul.f32 %v1723, 1.442695
    %v1769 = vpow.pop %v1768
    %v1770 = vmul.f32 %v1724, 1.442695
    %v1771 = vpow.pop %v1770
    %v1772 = vmul.f32 %v1725, 1.442695
    %v1773 = vpow.pop %v1772
    %v1774 = vmul.f32 %v1726, 1.442695
    %v1775 = vpow.pop %v1774
    %v1776 = vmul.f32 %v1727, 1.442695
    %v1777 = vpow.pop %v1776
    %v1778 = vmul.f32 %v1728, 1.442695
    %v1779 = vpow.pop %v1778
    %v1780 = vmul.f32 %v1729, 1.442695
    %v1781 = vpow.pop %v1780
    %v1782 = vmul.f32 %v1730, 1.442695
    %v1783 = vpow.pop %v1782
    %v1784 = vmul.f32 %v1731, 1.442695
    %v1785 = vpow.pop %v1784
    %v1786 = vmul.f32 %v1732, 1.442695
    %v1787 = vpow.pop %v1786
    %v1788 = vmul.f32 %v1733, 1.442695
    %v1789 = vpow.pop %v1788
    %v1790 = vmul.f32 %v1734, 1.442695
    %v1791 = vpow.pop %v1790
    %v1792 = vmul.f32 %v1735, 1.442695
    %v1793 = vpow.pop %v1792
    %v1794 = vmul.f32 %v1736, 1.442695
    %v1795 = vpow.pop %v1794
    %v1796 = vmul.f32 %v1737, 1.442695
    %v1797 = vpow.pop %v1796
    %v1798 = vmul.f32 %v1738, 1.442695
    %v1799 = vpow.pop %v1798
    %v1800 = vmul.f32 %v1739, 1.442695
    %v1801 = vpow.pop %v1800
    %v1802 = vmul.f32 %v1740, 1.442695
    %v1803 = vpow.pop %v1802
    %v1804 = vmul.f32 %v1741, 1.442695
    %v1805 = vpow.pop %v1804
    %v1806 = vsel %vm1613, %v1743, 0.0
    %1807 = vadd.xlane.f32.xlu0 %v1806
    %v1808 = vpop.xlane.xlu0 %1807
    %v1809 = vsel %vm1613, %v1745, 0.0
    %1810 = vadd.xlane.f32.xlu0 %v1809
    %v1811 = vpop.xlane.xlu0 %1810
    %v1812 = vsel %vm1613, %v1747, 0.0
    %1813 = vadd.xlane.f32.xlu0 %v1812
    %v1814 = vpop.xlane.xlu0 %1813
    %v1815 = vsel %vm1613, %v1749, 0.0
    %1816 = vadd.xlane.f32.xlu0 %v1815
    %v1817 = vpop.xlane.xlu0 %1816
    %v1818 = vsel %vm1613, %v1751, 0.0
    %1819 = vadd.xlane.f32.xlu0 %v1818
    %v1820 = vpop.xlane.xlu0 %1819
    %v1821 = vsel %vm1613, %v1753, 0.0
    %1822 = vadd.xlane.f32.xlu0 %v1821
    %v1823 = vpop.xlane.xlu0 %1822
    %v1824 = vsel %vm1613, %v1755, 0.0
    %1825 = vadd.xlane.f32.xlu0 %v1824
    %v1826 = vpop.xlane.xlu0 %1825
    %v1827 = vsel %vm1613, %v1757, 0.0
    %1828 = vadd.xlane.f32.xlu0 %v1827
    %v1829 = vpop.xlane.xlu0 %1828
    %v1830 = vsel %vm1613, %v1759, 0.0
    %1831 = vadd.xlane.f32.xlu0 %v1830
    %v1832 = vpop.xlane.xlu0 %1831
    %v1833 = vsel %vm1613, %v1761, 0.0
    %1834 = vadd.xlane.f32.xlu0 %v1833
    %v1835 = vpop.xlane.xlu0 %1834
    %v1836 = vsel %vm1613, %v1763, 0.0
    %1837 = vadd.xlane.f32.xlu0 %v1836
    %v1838 = vpop.xlane.xlu0 %1837
    %v1839 = vsel %vm1613, %v1765, 0.0
    %1840 = vadd.xlane.f32.xlu0 %v1839
    %v1841 = vpop.xlane.xlu0 %1840
    %v1842 = vsel %vm1613, %v1767, 0.0
    %1843 = vadd.xlane.f32.xlu0 %v1842
    %v1844 = vpop.xlane.xlu0 %1843
    %v1845 = vsel %vm1613, %v1769, 0.0
    %1846 = vadd.xlane.f32.xlu0 %v1845
    %v1847 = vpop.xlane.xlu0 %1846
    %v1848 = vsel %vm1613, %v1771, 0.0
    %1849 = vadd.xlane.f32.xlu0 %v1848
    %v1850 = vpop.xlane.xlu0 %1849
    %v1851 = vsel %vm1613, %v1773, 0.0
    %1852 = vadd.xlane.f32.xlu0 %v1851
    %v1853 = vpop.xlane.xlu0 %1852
    %v1854 = vsel %vm1613, %v1775, 0.0
    %1855 = vadd.xlane.f32.xlu0 %v1854
    %v1856 = vpop.xlane.xlu0 %1855
    %v1857 = vsel %vm1613, %v1777, 0.0
    %1858 = vadd.xlane.f32.xlu0 %v1857
    %v1859 = vpop.xlane.xlu0 %1858
    %v1860 = vsel %vm1613, %v1779, 0.0
    %1861 = vadd.xlane.f32.xlu0 %v1860
    %v1862 = vpop.xlane.xlu0 %1861
    %v1863 = vsel %vm1613, %v1781, 0.0
    %1864 = vadd.xlane.f32.xlu0 %v1863
    %v1865 = vpop.xlane.xlu0 %1864
    %v1866 = vsel %vm1613, %v1783, 0.0
    %1867 = vadd.xlane.f32.xlu0 %v1866
    %v1868 = vpop.xlane.xlu0 %1867
    %v1869 = vsel %vm1613, %v1785, 0.0
    %1870 = vadd.xlane.f32.xlu0 %v1869
    %v1871 = vpop.xlane.xlu0 %1870
    %v1872 = vsel %vm1613, %v1787, 0.0
    %1873 = vadd.xlane.f32.xlu0 %v1872
    %v1874 = vpop.xlane.xlu0 %1873
    %v1875 = vsel %vm1613, %v1789, 0.0
    %1876 = vadd.xlane.f32.xlu0 %v1875
    %v1877 = vpop.xlane.xlu0 %1876
    %v1878 = vsel %vm1613, %v1791, 0.0
    %1879 = vadd.xlane.f32.xlu0 %v1878
    %v1880 = vpop.xlane.xlu0 %1879
    %v1881 = vsel %vm1613, %v1793, 0.0
    %1882 = vadd.xlane.f32.xlu0 %v1881
    %v1883 = vpop.xlane.xlu0 %1882
    %v1884 = vsel %vm1613, %v1795, 0.0
    %1885 = vadd.xlane.f32.xlu0 %v1884
    %v1886 = vpop.xlane.xlu0 %1885
    %v1887 = vsel %vm1613, %v1797, 0.0
    %1888 = vadd.xlane.f32.xlu0 %v1887
    %v1889 = vpop.xlane.xlu0 %1888
    %v1890 = vsel %vm1613, %v1799, 0.0
    %1891 = vadd.xlane.f32.xlu0 %v1890
    %v1892 = vpop.xlane.xlu0 %1891
    %v1893 = vsel %vm1613, %v1801, 0.0
    %1894 = vadd.xlane.f32.xlu0 %v1893
    %v1895 = vpop.xlane.xlu0 %1894
    %v1896 = vsel %vm1613, %v1803, 0.0
    %1897 = vadd.xlane.f32.xlu0 %v1896
    %v1898 = vpop.xlane.xlu0 %1897
    %v1899 = vsel %vm1613, %v1805, 0.0
    %1900 = vadd.xlane.f32.xlu0 %v1899
    %v1901 = vpop.xlane.xlu0 %1900
    %v1902 = vrcp.pop %v1808
    %v1903 = vmul.f32 1.0, %v1902
    %v1904 = vrcp.pop %v1811
    %v1905 = vmul.f32 1.0, %v1904
    %v1906 = vrcp.pop %v1814
    %v1907 = vmul.f32 1.0, %v1906
    %v1908 = vrcp.pop %v1817
    %v1909 = vmul.f32 1.0, %v1908
    %v1910 = vrcp.pop %v1820
    %v1911 = vmul.f32 1.0, %v1910
    %v1912 = vrcp.pop %v1823
    %v1913 = vmul.f32 1.0, %v1912
    %v1914 = vrcp.pop %v1826
    %v1915 = vmul.f32 1.0, %v1914
    %v1916 = vrcp.pop %v1829
    %v1917 = vmul.f32 1.0, %v1916
    %v1918 = vrcp.pop %v1832
    %v1919 = vmul.f32 1.0, %v1918
    %v1920 = vrcp.pop %v1835
    %v1921 = vmul.f32 1.0, %v1920
    %v1922 = vrcp.pop %v1838
    %v1923 = vmul.f32 1.0, %v1922
    %v1924 = vrcp.pop %v1841
    %v1925 = vmul.f32 1.0, %v1924
    %v1926 = vrcp.pop %v1844
    %v1927 = vmul.f32 1.0, %v1926
    %v1928 = vrcp.pop %v1847
    %v1929 = vmul.f32 1.0, %v1928
    %v1930 = vrcp.pop %v1850
    %v1931 = vmul.f32 1.0, %v1930
    %v1932 = vrcp.pop %v1853
    %v1933 = vmul.f32 1.0, %v1932
    %v1934 = vrcp.pop %v1856
    %v1935 = vmul.f32 1.0, %v1934
    %v1936 = vrcp.pop %v1859
    %v1937 = vmul.f32 1.0, %v1936
    %v1938 = vrcp.pop %v1862
    %v1939 = vmul.f32 1.0, %v1938
    %v1940 = vrcp.pop %v1865
    %v1941 = vmul.f32 1.0, %v1940
    %v1942 = vrcp.pop %v1868
    %v1943 = vmul.f32 1.0, %v1942
    %v1944 = vrcp.pop %v1871
    %v1945 = vmul.f32 1.0, %v1944
    %v1946 = vrcp.pop %v1874
    %v1947 = vmul.f32 1.0, %v1946
    %v1948 = vrcp.pop %v1877
    %v1949 = vmul.f32 1.0, %v1948
    %v1950 = vrcp.pop %v1880
    %v1951 = vmul.f32 1.0, %v1950
    %v1952 = vrcp.pop %v1883
    %v1953 = vmul.f32 1.0, %v1952
    %v1954 = vrcp.pop %v1886
    %v1955 = vmul.f32 1.0, %v1954
    %v1956 = vrcp.pop %v1889
    %v1957 = vmul.f32 1.0, %v1956
    %v1958 = vrcp.pop %v1892
    %v1959 = vmul.f32 1.0, %v1958
    %v1960 = vrcp.pop %v1895
    %v1961 = vmul.f32 1.0, %v1960
    %v1962 = vrcp.pop %v1898
    %v1963 = vmul.f32 1.0, %v1962
    %v1964 = vrcp.pop %v1901
    %v1965 = vmul.f32 1.0, %v1964
    %v1966 = vmul.f32 %v1743, %v1903
    %v1967 = vmul.f32 %v1745, %v1905
    %v1968 = vmul.f32 %v1747, %v1907
    %v1969 = vmul.f32 %v1749, %v1909
    %v1970 = vmul.f32 %v1751, %v1911
    %v1971 = vmul.f32 %v1753, %v1913
    %v1972 = vmul.f32 %v1755, %v1915
    %v1973 = vmul.f32 %v1757, %v1917
    %v1974 = vmul.f32 %v1759, %v1919
    %v1975 = vmul.f32 %v1761, %v1921
    %v1976 = vmul.f32 %v1763, %v1923
    %v1977 = vmul.f32 %v1765, %v1925
    %v1978 = vmul.f32 %v1767, %v1927
    %v1979 = vmul.f32 %v1769, %v1929
    %v1980 = vmul.f32 %v1771, %v1931
    %v1981 = vmul.f32 %v1773, %v1933
    %v1982 = vmul.f32 %v1775, %v1935
    %v1983 = vmul.f32 %v1777, %v1937
    %v1984 = vmul.f32 %v1779, %v1939
    %v1985 = vmul.f32 %v1781, %v1941
    %v1986 = vmul.f32 %v1783, %v1943
    %v1987 = vmul.f32 %v1785, %v1945
    %v1988 = vmul.f32 %v1787, %v1947
    %v1989 = vmul.f32 %v1789, %v1949
    %v1990 = vmul.f32 %v1791, %v1951
    %v1991 = vmul.f32 %v1793, %v1953
    %v1992 = vmul.f32 %v1795, %v1955
    %v1993 = vmul.f32 %v1797, %v1957
    %v1994 = vmul.f32 %v1799, %v1959
    %v1995 = vmul.f32 %v1801, %v1961
    %v1996 = vmul.f32 %v1803, %v1963
    %v1997 = vmul.f32 %v1805, %v1965
    %1998 = vst.msk [vmem:[%s5] sm:$0xf] %vm1613, %v1966
    %1999 = vst.msk [vmem:[%s5 + $0x4] sm:$0xf] %vm1613, %v1967
    %2000 = vst.msk [vmem:[%s5 + $0x8] sm:$0xf] %vm1613, %v1968
    %2001 = vst.msk [vmem:[%s5 + $0xc] sm:$0xf] %vm1613, %v1969
    %2002 = vst.msk [vmem:[%s5 + $0x10] sm:$0xf] %vm1613, %v1970
    %2003 = vst.msk [vmem:[%s5 + $0x14] sm:$0xf] %vm1613, %v1971
    %2004 = vst.msk [vmem:[%s5 + $0x18] sm:$0xf] %vm1613, %v1972
    %2005 = vst.msk [vmem:[%s5 + $0x1c] sm:$0xf] %vm1613, %v1973
    %2006 = vst.msk [vmem:[%s5 + $0x20] sm:$0xf] %vm1613, %v1974
    %2007 = vst.msk [vmem:[%s5 + $0x24] sm:$0xf] %vm1613, %v1975
    %2008 = vst.msk [vmem:[%s5 + $0x28] sm:$0xf] %vm1613, %v1976
    %2009 = vst.msk [vmem:[%s5 + $0x2c] sm:$0xf] %vm1613, %v1977
    %2010 = vst.msk [vmem:[%s5 + $0x30] sm:$0xf] %vm1613, %v1978
    %2011 = vst.msk [vmem:[%s5 + $0x34] sm:$0xf] %vm1613, %v1979
    %2012 = vst.msk [vmem:[%s5 + $0x38] sm:$0xf] %vm1613, %v1980
    %2013 = vst.msk [vmem:[%s5 + $0x3c] sm:$0xf] %vm1613, %v1981
    %2014 = vst.msk [vmem:[%s5 + $0x40] sm:$0xf] %vm1613, %v1982
    %2015 = vst.msk [vmem:[%s5 + $0x44] sm:$0xf] %vm1613, %v1983
    %2016 = vst.msk [vmem:[%s5 + $0x48] sm:$0xf] %vm1613, %v1984
    %2017 = vst.msk [vmem:[%s5 + $0x4c] sm:$0xf] %vm1613, %v1985
    %2018 = vst.msk [vmem:[%s5 + $0x50] sm:$0xf] %vm1613, %v1986
    %2019 = vst.msk [vmem:[%s5 + $0x54] sm:$0xf] %vm1613, %v1987
    %2020 = vst.msk [vmem:[%s5 + $0x58] sm:$0xf] %vm1613, %v1988
    %2021 = vst.msk [vmem:[%s5 + $0x5c] sm:$0xf] %vm1613, %v1989
    %2022 = vst.msk [vmem:[%s5 + $0x60] sm:$0xf] %vm1613, %v1990
    %2023 = vst.msk [vmem:[%s5 + $0x64] sm:$0xf] %vm1613, %v1991
    %2024 = vst.msk [vmem:[%s5 + $0x68] sm:$0xf] %vm1613, %v1992
    %2025 = vst.msk [vmem:[%s5 + $0x6c] sm:$0xf] %vm1613, %v1993
    %2026 = vst.msk [vmem:[%s5 + $0x70] sm:$0xf] %vm1613, %v1994
    %2027 = vst.msk [vmem:[%s5 + $0x74] sm:$0xf] %vm1613, %v1995
    %2028 = vst.msk [vmem:[%s5 + $0x78] sm:$0xf] %vm1613, %v1996
    %2029 = vst.msk [vmem:[%s5 + $0x7c] sm:$0xf] %vm1613, %v1997
    // Predicated region
    $region26: #{tpu_custom_call.1} parent=1 // pred_check
      _
    $region27: #{tpu_custom_call.1} parent=1 // pred_check_branch
      %2031 = sbr.rel (0) target = $region29
    $region28: #{tpu_custom_call.1} parent=1 // pred_region
      _
    $region29: #{tpu_custom_call.1} parent=1 // pred_fallthru
      _
    // Predicated region
    $region30: #{tpu_custom_call.1} parent=1 // pred_check
      _
    $region31: #{tpu_custom_call.1} parent=1 // pred_check_branch
      %2033 = sbr.rel (0) target = $region33
    $region32: #{tpu_custom_call.1} parent=1 // pred_region
      _
    $region33: #{tpu_custom_call.1} parent=1 // pred_fallthru
      _
    %2034 = vsyncpa [#allocation3], 1

// kernel: tpu_custom_call.1
$region0: #{tpu_custom_call.1}
  #allocation0 [shape = 'u32[]', space=smem, size = 0x4, offset = 0x4, fixed_abs, tag = 'smem constant byte address 0x4 - core index']
  #allocation1 [shape = 'u32[144,128]{1,0:T(1,128)}', space=vmem, size = 0x12000, scoped, tag = 'internal scratch']
  %s0 = inlined_call_operand.hbm [shape: f32[32,8,32], index: 0, kind: input, shape index: {}]
  %s1 = inlined_call_operand.vmem [shape: bf16[32,16], index: 1, kind: input, shape index: {}]
  %s2 = inlined_call_operand.vmem [shape: f32[1,16], index: 2, kind: input, shape index: {}]
  %s3 = inlined_call_operand.vmem [shape: bf16[16,4], index: 3, kind: input, shape index: {}]
  %s4 = inlined_call_operand.vmem [shape: f32[1,4], index: 4, kind: input, shape index: {}]
  %s5 = inlined_call_operand.vmem [shape: f32[32,8,4], index: 5, kind: output, shape index: {}]
  %s6 = sld [smem:[#allocation0]]
  $region34: #{tpu_custom_call.1} parent=0
    _
  %s8 = ssub.s32 1, %s6
  %s9 = scalar_select 0, %s8, %s6
  $region1: #{tpu_custom_call.1} parent=0
    #allocation2 [shape = 'u8[131072]{0}', space=vmem, size = 0x20000, scoped, tag = 'input window, operand 0, single buffered']
    #allocation3 [shape = 's32[1]{0}', space=sflag, size = 0x4, scoped, tag = 'scoped memory for tpu_custom_call.1']
    %10 = vsyncpa [#allocation3], 0
    // Predicated region
    $region2: #{tpu_custom_call.1} parent=1 // pred_check
      _
    $region3: #{tpu_custom_call.1} parent=1 // pred_check_branch
      %12 = sbr.rel (0) target = $region5
    $region4: #{tpu_custom_call.1} parent=1 // pred_region
      %s14 = ssub.s32 4096, 4096
      %15 = vsyncadd [#allocation3], %s14
      %s16 = sshll.u32 [#allocation2], 4
      %s17 = int_to_ptr.vmem [resolvable:$true] %s16
      %22 = dma.hbm_to_vmem [thread:$0]  %s0, 4096, %s17, [#allocation3], 128, 128, 8
    $region5: #{tpu_custom_call.1} parent=1 // pred_fallthru
      _
    // Predicated region
    $region6: #{tpu_custom_call.1} parent=1 // pred_check
      _
    $region7: #{tpu_custom_call.1} parent=1 // pred_check_branch
      %24 = sbr.rel (0) target = $region9
    $region8: #{tpu_custom_call.1} parent=1 // pred_region
      _
    $region9: #{tpu_custom_call.1} parent=1 // pred_fallthru
      _
    // Predicated region
    $region10: #{tpu_custom_call.1} parent=1 // pred_check
      _
    $region11: #{tpu_custom_call.1} parent=1 // pred_check_branch
      %26 = sbr.rel (0) target = $region13
    $region12: #{tpu_custom_call.1} parent=1 // pred_region
      _
    $region13: #{tpu_custom_call.1} parent=1 // pred_fallthru
      _
    // Predicated region
    $region14: #{tpu_custom_call.1} parent=1 // pred_check
      _
    $region15: #{tpu_custom_call.1} parent=1 // pred_check_branch
      %28 = sbr.rel (0) target = $region17
    $region16: #{tpu_custom_call.1} parent=1 // pred_region
      _
    $region17: #{tpu_custom_call.1} parent=1 // pred_fallthru
      _
    // Predicated region
    $region18: #{tpu_custom_call.1} parent=1 // pred_check
      _
    $region19: #{tpu_custom_call.1} parent=1 // pred_check_branch
      %30 = sbr.rel (0) target = $region21
    $region20: #{tpu_custom_call.1} parent=1 // pred_region
      _
    $region21: #{tpu_custom_call.1} parent=1 // pred_fallthru
      _
    // Predicated region
    $region22: #{tpu_custom_call.1} parent=1 // pred_check
      _
    $region23: #{tpu_custom_call.1} parent=1 // pred_check_branch
      %32 = sbr.rel (0) target = $region25
    $region24: #{tpu_custom_call.1} parent=1 // pred_region
      %33 = dma.done [#allocation3], 4096
    $region25: #{tpu_custom_call.1} parent=1 // pred_fallthru
      _
    %v35 = vld [vmem:[#allocation2] sm:$0xff]
    %v36 = vld [vmem:[#allocation2 + $0x8] sm:$0xff]
    %v37 = vld [vmem:[#allocation2 + $0x10] sm:$0xff]
    %v38 = vld [vmem:[#allocation2 + $0x18] sm:$0xff]
    %v39 = vld [vmem:[#allocation2 + $0x20] sm:$0xff]
    %v40 = vld [vmem:[#allocation2 + $0x28] sm:$0xff]
    %v41 = vld [vmem:[#allocation2 + $0x30] sm:$0xff]
    %v42 = vld [vmem:[#allocation2 + $0x38] sm:$0xff]
    %v43 = vld [vmem:[#allocation2 + $0x40] sm:$0xff]
    %v44 = vld [vmem:[#allocation2 + $0x48] sm:$0xff]
    %v45 = vld [vmem:[#allocation2 + $0x50] sm:$0xff]
    %v46 = vld [vmem:[#allocation2 + $0x58] sm:$0xff]
    %v47 = vld [vmem:[#allocation2 + $0x60] sm:$0xff]
    %v48 = vld [vmem:[#allocation2 + $0x68] sm:$0xff]
    %v49 = vld [vmem:[#allocation2 + $0x70] sm:$0xff]
    %v50 = vld [vmem:[#allocation2 + $0x78] sm:$0xff]
    %v51 = vld [vmem:[#allocation2 + $0x80] sm:$0xff]
    %v52 = vld [vmem:[#allocation2 + $0x88] sm:$0xff]
    %v53 = vld [vmem:[#allocation2 + $0x90] sm:$0xff]
    %v54 = vld [vmem:[#allocation2 + $0x98] sm:$0xff]
    %v55 = vld [vmem:[#allocation2 + $0xa0] sm:$0xff]
    %v56 = vld [vmem:[#allocation2 + $0xa8] sm:$0xff]
    %v57 = vld [vmem:[#allocation2 + $0xb0] sm:$0xff]
    %v58 = vld [vmem:[#allocation2 + $0xb8] sm:$0xff]
    %v59 = vld [vmem:[#allocation2 + $0xc0] sm:$0xff]
    %v60 = vld [vmem:[#allocation2 + $0xc8] sm:$0xff]
    %v61 = vld [vmem:[#allocation2 + $0xd0] sm:$0xff]
    %v62 = vld [vmem:[#allocation2 + $0xd8] sm:$0xff]
    %v63 = vld [vmem:[#allocation2 + $0xe0] sm:$0xff]
    %v64 = vld [vmem:[#allocation2 + $0xe8] sm:$0xff]
    %v65 = vld [vmem:[#allocation2 + $0xf0] sm:$0xff]
    %v66 = vld [vmem:[#allocation2 + $0xf8] sm:$0xff]
    %v67 = vpack.c.bf16 %v36, %v35
    %v68 = vpack.c.bf16 %v38, %v37
    %v69 = vpack.c.bf16 %v40, %v39
    %v70 = vpack.c.bf16 %v42, %v41
    %v71 = vpack.c.bf16 %v44, %v43
    %v72 = vpack.c.bf16 %v46, %v45
    %v73 = vpack.c.bf16 %v48, %v47
    %v74 = vpack.c.bf16 %v50, %v49
    %v75 = vpack.c.bf16 %v52, %v51
    %v76 = vpack.c.bf16 %v54, %v53
    %v77 = vpack.c.bf16 %v56, %v55
    %v78 = vpack.c.bf16 %v58, %v57
    %v79 = vpack.c.bf16 %v60, %v59
    %v80 = vpack.c.bf16 %v62, %v61
    %v81 = vpack.c.bf16 %v64, %v63
    %v82 = vpack.c.bf16 %v66, %v65
    %v83 = vld [vmem:[%s1] sm:$0xf]
    %v84 = vld [vmem:[%s1 + $0x4] sm:$0xf]
    %v85 = vld [vmem:[%s1 + $0x8] sm:$0xf]
    %v86 = vld [vmem:[%s1 + $0xc] sm:$0xf]
    %v87 = vld [vmem:[%s2] sm:$0x1]
    %v89 = vlaneseq
    %v90 = vshrl.u32 %v89, 7
    %v91 = vsub.s32 0, %v90
    %v92 = vrot.slane %v87, %v91
    %v98 = vunpack.c.l.b16 %v83
    %v99 = vunpack.c.l.b16 %v84
    %v100 = vunpack.c.l.b16 %v85
    %v101 = vunpack.c.l.b16 %v86
    %v102 = vpack.c.b16 %v99, %v98
    %v103 = vpack.c.b16 %v101, %v100
    %vm106 = vcmask 261120
    %v108 = vsel %vm106, %v67, 0
    %v111 = vsel %vm106, %v68, 0
    %v114 = vsel %vm106, %v69, 0
    %v117 = vsel %vm106, %v70, 0
    %v120 = vsel %vm106, %v71, 0
    %v123 = vsel %vm106, %v72, 0
    %v126 = vsel %vm106, %v73, 0
    %v129 = vsel %vm106, %v74, 0
    %v132 = vsel %vm106, %v75, 0
    %v135 = vsel %vm106, %v76, 0
    %v138 = vsel %vm106, %v77, 0
    %v141 = vsel %vm106, %v78, 0
    %v144 = vsel %vm106, %v79, 0
    %v147 = vsel %vm106, %v80, 0
    %v150 = vsel %vm106, %v81, 0
    %v153 = vsel %vm106, %v82, 0
    %155 = vmatprep.subr.bf16.mxu0 0
    %156 = vmatpush1.bf16.msra.mxu0 0
    %157 = vmatprep.subr.bf16.mxu0 0
    %158 = vmatpush1.bf16.msra.mxu0 0
    %159 = vmatprep.subr.bf16.mxu0 0
    %160 = vmatpush1.bf16.msra.mxu0 0
    %161 = vmatprep.subr.bf16.mxu0 0
    %162 = vmatpush1.bf16.msra.mxu0 0
    %163 = vmatprep.subr.bf16.mxu0 0
    %164 = vmatpush1.bf16.msra.mxu0 0
    %165 = vmatprep.subr.bf16.mxu0 0
    %166 = vmatpush1.bf16.msra.mxu0 0
    %167 = vmatprep.subr.bf16.mxu0 0
    %168 = vmatpush1.bf16.msra.mxu0 %v103
    %169 = vmatprep.subr.bf16.mxu0 0
    %170 = vmatpush1.bf16.msra.mxu0 %v102
    %171 = vmatprep.subr.bf16.mxu0 0
    %172 = vmatpush2.bf16.msra.mxu0 0
    %173 = vmatprep.subr.bf16.mxu0 0
    %174 = vmatpush2.bf16.msra.mxu0 0
    %175 = vmatprep.subr.bf16.mxu0 0
    %176 = vmatpush2.bf16.msra.mxu0 0
    %177 = vmatprep.subr.bf16.mxu0 0
    %178 = vmatpush2.bf16.msra.mxu0 0
    %179 = vmatprep.subr.bf16.mxu0 0
    %180 = vmatpush2.bf16.msra.mxu0 0
    %181 = vmatprep.subr.bf16.mxu0 0
    %182 = vmatpush2.bf16.msra.mxu0 0
    %183 = vmatprep.subr.bf16.mxu0 0
    %184 = vmatpush2.bf16.msra.mxu0 0
    %185 = vmatprep.subr.bf16.mxu0 0
    %186 = vmatpush2.bf16.msra.mxu0 0
    %187 = vmatprep.mubr.bf16.mxu0 0
    %188 = vmatmul.mubr.bf16.gmra.mxu0 %v108
    %v189 = vpop.f32.mrf.mxu0
    %v190 = vadd.f32 %v92, %v189
    %v191 = vpop.f32.mrf.mxu0
    %v192 = vpop.f32.mrf.mxu0
    %v193 = vadd.f32 %v92, %v192
    %v194 = vpop.f32.mrf.mxu0
    %195 = vmatprep.mubr.bf16.mxu0 0
    %196 = vmatmul.mubr.bf16.gmra.mxu0 %v111
    %v197 = vpop.f32.mrf.mxu0
    %v198 = vadd.f32 %v92, %v197
    %v199 = vpop.f32.mrf.mxu0
    %v200 = vpop.f32.mrf.mxu0
    %v201 = vadd.f32 %v92, %v200
    %v202 = vpop.f32.mrf.mxu0
    %203 = vmatprep.mubr.bf16.mxu0 0
    %204 = vmatmul.mubr.bf16.gmra.mxu0 %v114
    %v205 = vpop.f32.mrf.mxu0
    %v206 = vadd.f32 %v92, %v205
    %v207 = vpop.f32.mrf.mxu0
    %v208 = vpop.f32.mrf.mxu0
    %v209 = vadd.f32 %v92, %v208
    %v210 = vpop.f32.mrf.mxu0
    %211 = vmatprep.mubr.bf16.mxu0 0
    %212 = vmatmul.mubr.bf16.gmra.mxu0 %v117
    %v213 = vpop.f32.mrf.mxu0
    %v214 = vadd.f32 %v92, %v213
    %v215 = vpop.f32.mrf.mxu0
    %v216 = vpop.f32.mrf.mxu0
    %v217 = vadd.f32 %v92, %v216
    %v218 = vpop.f32.mrf.mxu0
    %219 = vmatprep.mubr.bf16.mxu0 0
    %220 = vmatmul.mubr.bf16.gmra.mxu0 %v120
    %v221 = vpop.f32.mrf.mxu0
    %v222 = vadd.f32 %v92, %v221
    %v223 = vpop.f32.mrf.mxu0
    %v224 = vpop.f32.mrf.mxu0
    %v225 = vadd.f32 %v92, %v224
    %v226 = vpop.f32.mrf.mxu0
    %227 = vmatprep.mubr.bf16.mxu0 0
    %228 = vmatmul.mubr.bf16.gmra.mxu0 %v123
    %v229 = vpop.f32.mrf.mxu0
    %v230 = vadd.f32 %v92, %v229
    %v231 = vpop.f32.mrf.mxu0
    %v232 = vpop.f32.mrf.mxu0
    %v233 = vadd.f32 %v92, %v232
    %v234 = vpop.f32.mrf.mxu0
    %235 = vmatprep.mubr.bf16.mxu0 0
    %236 = vmatmul.mubr.bf16.gmra.mxu0 %v126
    %v237 = vpop.f32.mrf.mxu0
    %v238 = vadd.f32 %v92, %v237
    %v239 = vpop.f32.mrf.mxu0
    %v240 = vpop.f32.mrf.mxu0
    %v241 = vadd.f32 %v92, %v240
    %v242 = vpop.f32.mrf.mxu0
    %243 = vmatprep.mubr.bf16.mxu0 0
    %244 = vmatmul.mubr.bf16.gmra.mxu0 %v129
    %v245 = vpop.f32.mrf.mxu0
    %v246 = vadd.f32 %v92, %v245
    %v247 = vpop.f32.mrf.mxu0
    %v248 = vpop.f32.mrf.mxu0
    %v249 = vadd.f32 %v92, %v248
    %v250 = vpop.f32.mrf.mxu0
    %251 = vmatprep.mubr.bf16.mxu0 0
    %252 = vmatmul.mubr.bf16.gmra.mxu0 %v132
    %v253 = vpop.f32.mrf.mxu0
    %v254 = vadd.f32 %v92, %v253
    %v255 = vpop.f32.mrf.mxu0
    %v256 = vpop.f32.mrf.mxu0
    %v257 = vadd.f32 %v92, %v256
    %v258 = vpop.f32.mrf.mxu0
    %259 = vmatprep.mubr.bf16.mxu0 0
    %260 = vmatmul.mubr.bf16.gmra.mxu0 %v135
    %v261 = vpop.f32.mrf.mxu0
    %v262 = vadd.f32 %v92, %v261
    %v263 = vpop.f32.mrf.mxu0
    %v264 = vpop.f32.mrf.mxu0
    %v265 = vadd.f32 %v92, %v264
    %v266 = vpop.f32.mrf.mxu0
    %267 = vmatprep.mubr.bf16.mxu0 0
    %268 = vmatmul.mubr.bf16.gmra.mxu0 %v138
    %v269 = vpop.f32.mrf.mxu0
    %v270 = vadd.f32 %v92, %v269
    %v271 = vpop.f32.mrf.mxu0
    %v272 = vpop.f32.mrf.mxu0
    %v273 = vadd.f32 %v92, %v272
    %v274 = vpop.f32.mrf.mxu0
    %275 = vmatprep.mubr.bf16.mxu0 0
    %276 = vmatmul.mubr.bf16.gmra.mxu0 %v141
    %v277 = vpop.f32.mrf.mxu0
    %v278 = vadd.f32 %v92, %v277
    %v279 = vpop.f32.mrf.mxu0
    %v280 = vpop.f32.mrf.mxu0
    %v281 = vadd.f32 %v92, %v280
    %v282 = vpop.f32.mrf.mxu0
    %283 = vmatprep.mubr.bf16.mxu0 0
    %284 = vmatmul.mubr.bf16.gmra.mxu0 %v144
    %v285 = vpop.f32.mrf.mxu0
    %v286 = vadd.f32 %v92, %v285
    %v287 = vpop.f32.mrf.mxu0
    %v288 = vpop.f32.mrf.mxu0
    %v289 = vadd.f32 %v92, %v288
    %v290 = vpop.f32.mrf.mxu0
    %291 = vmatprep.mubr.bf16.mxu0 0
    %292 = vmatmul.mubr.bf16.gmra.mxu0 %v147
    %v293 = vpop.f32.mrf.mxu0
    %v294 = vadd.f32 %v92, %v293
    %v295 = vpop.f32.mrf.mxu0
    %v296 = vpop.f32.mrf.mxu0
    %v297 = vadd.f32 %v92, %v296
    %v298 = vpop.f32.mrf.mxu0
    %299 = vmatprep.mubr.bf16.mxu0 0
    %300 = vmatmul.mubr.bf16.gmra.mxu0 %v150
    %v301 = vpop.f32.mrf.mxu0
    %v302 = vadd.f32 %v92, %v301
    %v303 = vpop.f32.mrf.mxu0
    %v304 = vpop.f32.mrf.mxu0
    %v305 = vadd.f32 %v92, %v304
    %v306 = vpop.f32.mrf.mxu0
    %307 = vmatprep.mubr.bf16.mxu0 0
    %308 = vmatmul.mubr.bf16.gmra.mxu0 %v153
    %v309 = vpop.f32.mrf.mxu0
    %v310 = vadd.f32 %v92, %v309
    %v311 = vpop.f32.mrf.mxu0
    %v312 = vpop.f32.mrf.mxu0
    %v313 = vadd.f32 %v92, %v312
    %v314 = vpop.f32.mrf.mxu0
    %315 = vdwg.mxu0
    %v316 = vtanh.pop %v190
    %v317 = vtanh.pop %v193
    %v318 = vtanh.pop %v198
    %v319 = vtanh.pop %v201
    %v320 = vtanh.pop %v206
    %v321 = vtanh.pop %v209
    %v322 = vtanh.pop %v214
    %v323 = vtanh.pop %v217
    %v324 = vtanh.pop %v222
    %v325 = vtanh.pop %v225
    %v326 = vtanh.pop %v230
    %v327 = vtanh.pop %v233
    %v328 = vtanh.pop %v238
    %v329 = vtanh.pop %v241
    %v330 = vtanh.pop %v246
    %v331 = vtanh.pop %v249
    %v332 = vtanh.pop %v254
    %v333 = vtanh.pop %v257
    %v334 = vtanh.pop %v262
    %v335 = vtanh.pop %v265
    %v336 = vtanh.pop %v270
    %v337 = vtanh.pop %v273
    %v338 = vtanh.pop %v278
    %v339 = vtanh.pop %v281
    %v340 = vtanh.pop %v286
    %v341 = vtanh.pop %v289
    %v342 = vtanh.pop %v294
    %v343 = vtanh.pop %v297
    %v344 = vtanh.pop %v302
    %v345 = vtanh.pop %v305
    %v346 = vtanh.pop %v310
    %v347 = vtanh.pop %v313
    %v348 = vpack.c.bf16 %v317, %v316
    %v349 = vpack.c.bf16 %v319, %v318
    %v350 = vpack.c.bf16 %v321, %v320
    %v351 = vpack.c.bf16 %v323, %v322
    %v352 = vpack.c.bf16 %v325, %v324
    %v353 = vpack.c.bf16 %v327, %v326
    %v354 = vpack.c.bf16 %v329, %v328
    %v355 = vpack.c.bf16 %v331, %v330
    %v356 = vpack.c.bf16 %v333, %v332
    %v357 = vpack.c.bf16 %v335, %v334
    %v358 = vpack.c.bf16 %v337, %v336
    %v359 = vpack.c.bf16 %v339, %v338
    %v360 = vpack.c.bf16 %v341, %v340
    %v361 = vpack.c.bf16 %v343, %v342
    %v362 = vpack.c.bf16 %v345, %v344
    %v363 = vpack.c.bf16 %v347, %v346
    %v364 = vld [vmem:[%s3] sm:$0xf]
    %v365 = vld [vmem:[%s3 + $0x4] sm:$0xf]
    %v366 = vld [vmem:[%s4] sm:$0x1]
    %v368 = vlaneseq
    %v369 = vshrl.u32 %v368, 7
    %v370 = vsub.s32 0, %v369
    %v371 = vrot.slane %v366, %v370
    %v375 = vunpack.c.l.b16 %v364
    %v376 = vunpack.c.l.b16 %v365
    %v377 = vpack.c.b16 %v376, %v375
    %vm379 = vcmask 130048
    %v381 = vsel %vm379, %v348, 0
    %v384 = vsel %vm379, %v349, 0
    %v387 = vsel %vm379, %v350, 0
    %v390 = vsel %vm379, %v351, 0
    %v393 = vsel %vm379, %v352, 0
    %v396 = vsel %vm379, %v353, 0
    %v399 = vsel %vm379, %v354, 0
    %v402 = vsel %vm379, %v355, 0
    %v405 = vsel %vm379, %v356, 0
    %v408 = vsel %vm379, %v357, 0
    %v411 = vsel %vm379, %v358, 0
    %v414 = vsel %vm379, %v359, 0
    %v417 = vsel %vm379, %v360, 0
    %v420 = vsel %vm379, %v361, 0
    %v423 = vsel %vm379, %v362, 0
    %v426 = vsel %vm379, %v363, 0
    %428 = vmatprep.subr.bf16.mxu0 0
    %429 = vmatpush1.bf16.msra.mxu0 0
    %430 = vmatprep.subr.bf16.mxu0 0
    %431 = vmatpush1.bf16.msra.mxu0 0
    %432 = vmatprep.subr.bf16.mxu0 0
    %433 = vmatpush1.bf16.msra.mxu0 0
    %434 = vmatprep.subr.bf16.mxu0 0
    %435 = vmatpush1.bf16.msra.mxu0 0
    %436 = vmatprep.subr.bf16.mxu0 0
    %437 = vmatpush1.bf16.msra.mxu0 0
    %438 = vmatprep.subr.bf16.mxu0 0
    %439 = vmatpush1.bf16.msra.mxu0 0
    %440 = vmatprep.subr.bf16.mxu0 0
    %441 = vmatpush1.bf16.msra.mxu0 0
    %442 = vmatprep.subr.bf16.mxu0 0
    %443 = vmatpush1.bf16.msra.mxu0 %v377
    %444 = vmatprep.subr.bf16.mxu0 0
    %445 = vmatpush2.bf16.msra.mxu0 0
    %446 = vmatprep.subr.bf16.mxu0 0
    %447 = vmatpush2.bf16.msra.mxu0 0
    %448 = vmatprep.subr.bf16.mxu0 0
    %449 = vmatpush2.bf16.msra.mxu0 0
    %450 = vmatprep.subr.bf16.mxu0 0
    %451 = vmatpush2.bf16.msra.mxu0 0
    %452 = vmatprep.subr.bf16.mxu0 0
    %453 = vmatpush2.bf16.msra.mxu0 0
    %454 = vmatprep.subr.bf16.mxu0 0
    %455 = vmatpush2.bf16.msra.mxu0 0
    %456 = vmatprep.subr.bf16.mxu0 0
    %457 = vmatpush2.bf16.msra.mxu0 0
    %458 = vmatprep.subr.bf16.mxu0 0
    %459 = vmatpush2.bf16.msra.mxu0 0
    %460 = vmatprep.mubr.bf16.mxu0 0
    %461 = vmatmul.mubr.bf16.gmra.mxu0 %v381
    %v462 = vpop.f32.mrf.mxu0
    %v463 = vadd.f32 %v371, %v462
    %v464 = vpop.f32.mrf.mxu0
    %v465 = vpop.f32.mrf.mxu0
    %v466 = vadd.f32 %v371, %v465
    %v467 = vpop.f32.mrf.mxu0
    %468 = vmatprep.mubr.bf16.mxu0 0
    %469 = vmatmul.mubr.bf16.gmra.mxu0 %v384
    %v470 = vpop.f32.mrf.mxu0
    %v471 = vadd.f32 %v371, %v470
    %v472 = vpop.f32.mrf.mxu0
    %v473 = vpop.f32.mrf.mxu0
    %v474 = vadd.f32 %v371, %v473
    %v475 = vpop.f32.mrf.mxu0
    %476 = vmatprep.mubr.bf16.mxu0 0
    %477 = vmatmul.mubr.bf16.gmra.mxu0 %v387
    %v478 = vpop.f32.mrf.mxu0
    %v479 = vadd.f32 %v371, %v478
    %v480 = vpop.f32.mrf.mxu0
    %v481 = vpop.f32.mrf.mxu0
    %v482 = vadd.f32 %v371, %v481
    %v483 = vpop.f32.mrf.mxu0
    %484 = vmatprep.mubr.bf16.mxu0 0
    %485 = vmatmul.mubr.bf16.gmra.mxu0 %v390
    %v486 = vpop.f32.mrf.mxu0
    %v487 = vadd.f32 %v371, %v486
    %v488 = vpop.f32.mrf.mxu0
    %v489 = vpop.f32.mrf.mxu0
    %v490 = vadd.f32 %v371, %v489
    %v491 = vpop.f32.mrf.mxu0
    %492 = vmatprep.mubr.bf16.mxu0 0
    %493 = vmatmul.mubr.bf16.gmra.mxu0 %v393
    %v494 = vpop.f32.mrf.mxu0
    %v495 = vadd.f32 %v371, %v494
    %v496 = vpop.f32.mrf.mxu0
    %v497 = vpop.f32.mrf.mxu0
    %v498 = vadd.f32 %v371, %v497
    %v499 = vpop.f32.mrf.mxu0
    %500 = vmatprep.mubr.bf16.mxu0 0
    %501 = vmatmul.mubr.bf16.gmra.mxu0 %v396
    %v502 = vpop.f32.mrf.mxu0
    %v503 = vadd.f32 %v371, %v502
    %v504 = vpop.f32.mrf.mxu0
    %v505 = vpop.f32.mrf.mxu0
    %v506 = vadd.f32 %v371, %v505
    %v507 = vpop.f32.mrf.mxu0
    %508 = vmatprep.mubr.bf16.mxu0 0
    %509 = vmatmul.mubr.bf16.gmra.mxu0 %v399
    %v510 = vpop.f32.mrf.mxu0
    %v511 = vadd.f32 %v371, %v510
    %v512 = vpop.f32.mrf.mxu0
    %v513 = vpop.f32.mrf.mxu0
    %v514 = vadd.f32 %v371, %v513
    %v515 = vpop.f32.mrf.mxu0
    %516 = vmatprep.mubr.bf16.mxu0 0
    %517 = vmatmul.mubr.bf16.gmra.mxu0 %v402
    %v518 = vpop.f32.mrf.mxu0
    %v519 = vadd.f32 %v371, %v518
    %v520 = vpop.f32.mrf.mxu0
    %v521 = vpop.f32.mrf.mxu0
    %v522 = vadd.f32 %v371, %v521
    %v523 = vpop.f32.mrf.mxu0
    %524 = vmatprep.mubr.bf16.mxu0 0
    %525 = vmatmul.mubr.bf16.gmra.mxu0 %v405
    %v526 = vpop.f32.mrf.mxu0
    %v527 = vadd.f32 %v371, %v526
    %v528 = vpop.f32.mrf.mxu0
    %v529 = vpop.f32.mrf.mxu0
    %v530 = vadd.f32 %v371, %v529
    %v531 = vpop.f32.mrf.mxu0
    %532 = vmatprep.mubr.bf16.mxu0 0
    %533 = vmatmul.mubr.bf16.gmra.mxu0 %v408
    %v534 = vpop.f32.mrf.mxu0
    %v535 = vadd.f32 %v371, %v534
    %v536 = vpop.f32.mrf.mxu0
    %v537 = vpop.f32.mrf.mxu0
    %v538 = vadd.f32 %v371, %v537
    %v539 = vpop.f32.mrf.mxu0
    %540 = vmatprep.mubr.bf16.mxu0 0
    %541 = vmatmul.mubr.bf16.gmra.mxu0 %v411
    %v542 = vpop.f32.mrf.mxu0
    %v543 = vadd.f32 %v371, %v542
    %v544 = vpop.f32.mrf.mxu0
    %v545 = vpop.f32.mrf.mxu0
    %v546 = vadd.f32 %v371, %v545
    %v547 = vpop.f32.mrf.mxu0
    %548 = vmatprep.mubr.bf16.mxu0 0
    %549 = vmatmul.mubr.bf16.gmra.mxu0 %v414
    %v550 = vpop.f32.mrf.mxu0
    %v551 = vadd.f32 %v371, %v550
    %v552 = vpop.f32.mrf.mxu0
    %v553 = vpop.f32.mrf.mxu0
    %v554 = vadd.f32 %v371, %v553
    %v555 = vpop.f32.mrf.mxu0
    %556 = vmatprep.mubr.bf16.mxu0 0
    %557 = vmatmul.mubr.bf16.gmra.mxu0 %v417
    %v558 = vpop.f32.mrf.mxu0
    %v559 = vadd.f32 %v371, %v558
    %v560 = vpop.f32.mrf.mxu0
    %v561 = vpop.f32.mrf.mxu0
    %v562 = vadd.f32 %v371, %v561
    %v563 = vpop.f32.mrf.mxu0
    %564 = vmatprep.mubr.bf16.mxu0 0
    %565 = vmatmul.mubr.bf16.gmra.mxu0 %v420
    %v566 = vpop.f32.mrf.mxu0
    %v567 = vadd.f32 %v371, %v566
    %v568 = vpop.f32.mrf.mxu0
    %v569 = vpop.f32.mrf.mxu0
    %v570 = vadd.f32 %v371, %v569
    %v571 = vpop.f32.mrf.mxu0
    %572 = vmatprep.mubr.bf16.mxu0 0
    %573 = vmatmul.mubr.bf16.gmra.mxu0 %v423
    %v574 = vpop.f32.mrf.mxu0
    %v575 = vadd.f32 %v371, %v574
    %v576 = vpop.f32.mrf.mxu0
    %v577 = vpop.f32.mrf.mxu0
    %v578 = vadd.f32 %v371, %v577
    %v579 = vpop.f32.mrf.mxu0
    %580 = vmatprep.mubr.bf16.mxu0 0
    %581 = vmatmul.mubr.bf16.gmra.mxu0 %v426
    %v582 = vpop.f32.mrf.mxu0
    %v583 = vadd.f32 %v371, %v582
    %v584 = vpop.f32.mrf.mxu0
    %v585 = vpop.f32.mrf.mxu0
    %v586 = vadd.f32 %v371, %v585
    %v587 = vpop.f32.mrf.mxu0
    %588 = vdwg.mxu0
    %vm589 = vcmask 31744
    %v590 = vsel %vm589, %v463, -inf
    %v591 = vrot.slane %v590, 4
    %v592 = vmax.f32 %v590, %v591
    %v593 = vrot.slane %v592, 2
    %v594 = vmax.f32 %v592, %v593
    %v595 = vrot.slane %v594, 1
    %v596 = vmax.f32 %v594, %v595
    %v597 = vsel %vm589, %v466, -inf
    %v598 = vrot.slane %v597, 4
    %v599 = vmax.f32 %v597, %v598
    %v600 = vrot.slane %v599, 2
    %v601 = vmax.f32 %v599, %v600
    %v602 = vrot.slane %v601, 1
    %v603 = vmax.f32 %v601, %v602
    %v604 = vsel %vm589, %v471, -inf
    %v605 = vrot.slane %v604, 4
    %v606 = vmax.f32 %v604, %v605
    %v607 = vrot.slane %v606, 2
    %v608 = vmax.f32 %v606, %v607
    %v609 = vrot.slane %v608, 1
    %v610 = vmax.f32 %v608, %v609
    %v611 = vsel %vm589, %v474, -inf
    %v612 = vrot.slane %v611, 4
    %v613 = vmax.f32 %v611, %v612
    %v614 = vrot.slane %v613, 2
    %v615 = vmax.f32 %v613, %v614
    %v616 = vrot.slane %v615, 1
    %v617 = vmax.f32 %v615, %v616
    %v618 = vsel %vm589, %v479, -inf
    %v619 = vrot.slane %v618, 4
    %v620 = vmax.f32 %v618, %v619
    %v621 = vrot.slane %v620, 2
    %v622 = vmax.f32 %v620, %v621
    %v623 = vrot.slane %v622, 1
    %v624 = vmax.f32 %v622, %v623
    %v625 = vsel %vm589, %v482, -inf
    %v626 = vrot.slane %v625, 4
    %v627 = vmax.f32 %v625, %v626
    %v628 = vrot.slane %v627, 2
    %v629 = vmax.f32 %v627, %v628
    %v630 = vrot.slane %v629, 1
    %v631 = vmax.f32 %v629, %v630
    %v632 = vsel %vm589, %v487, -inf
    %v633 = vrot.slane %v632, 4
    %v634 = vmax.f32 %v632, %v633
    %v635 = vrot.slane %v634, 2
    %v636 = vmax.f32 %v634, %v635
    %v637 = vrot.slane %v636, 1
    %v638 = vmax.f32 %v636, %v637
    %v639 = vsel %vm589, %v490, -inf
    %v640 = vrot.slane %v639, 4
    %v641 = vmax.f32 %v639, %v640
    %v642 = vrot.slane %v641, 2
    %v643 = vmax.f32 %v641, %v642
    %v644 = vrot.slane %v643, 1
    %v645 = vmax.f32 %v643, %v644
    %v646 = vsel %vm589, %v495, -inf
    %v647 = vrot.slane %v646, 4
    %v648 = vmax.f32 %v646, %v647
    %v649 = vrot.slane %v648, 2
    %v650 = vmax.f32 %v648, %v649
    %v651 = vrot.slane %v650, 1
    %v652 = vmax.f32 %v650, %v651
    %v653 = vsel %vm589, %v498, -inf
    %v654 = vrot.slane %v653, 4
    %v655 = vmax.f32 %v653, %v654
    %v656 = vrot.slane %v655, 2
    %v657 = vmax.f32 %v655, %v656
    %v658 = vrot.slane %v657, 1
    %v659 = vmax.f32 %v657, %v658
    %v660 = vsel %vm589, %v503, -inf
    %v661 = vrot.slane %v660, 4
    %v662 = vmax.f32 %v660, %v661
    %v663 = vrot.slane %v662, 2
    %v664 = vmax.f32 %v662, %v663
    %v665 = vrot.slane %v664, 1
    %v666 = vmax.f32 %v664, %v665
    %v667 = vsel %vm589, %v506, -inf
    %v668 = vrot.slane %v667, 4
    %v669 = vmax.f32 %v667, %v668
    %v670 = vrot.slane %v669, 2
    %v671 = vmax.f32 %v669, %v670
    %v672 = vrot.slane %v671, 1
    %v673 = vmax.f32 %v671, %v672
    %v674 = vsel %vm589, %v511, -inf
    %v675 = vrot.slane %v674, 4
    %v676 = vmax.f32 %v674, %v675
    %v677 = vrot.slane %v676, 2
    %v678 = vmax.f32 %v676, %v677
    %v679 = vrot.slane %v678, 1
    %v680 = vmax.f32 %v678, %v679
    %v681 = vsel %vm589, %v514, -inf
    %v682 = vrot.slane %v681, 4
    %v683 = vmax.f32 %v681, %v682
    %v684 = vrot.slane %v683, 2
    %v685 = vmax.f32 %v683, %v684
    %v686 = vrot.slane %v685, 1
    %v687 = vmax.f32 %v685, %v686
    %v688 = vsel %vm589, %v519, -inf
    %v689 = vrot.slane %v688, 4
    %v690 = vmax.f32 %v688, %v689
    %v691 = vrot.slane %v690, 2
    %v692 = vmax.f32 %v690, %v691
    %v693 = vrot.slane %v692, 1
    %v694 = vmax.f32 %v692, %v693
    %v695 = vsel %vm589, %v522, -inf
    %v696 = vrot.slane %v695, 4
    %v697 = vmax.f32 %v695, %v696
    %v698 = vrot.slane %v697, 2
    %v699 = vmax.f32 %v697, %v698
    %v700 = vrot.slane %v699, 1
    %v701 = vmax.f32 %v699, %v700
    %v702 = vsel %vm589, %v527, -inf
    %v703 = vrot.slane %v702, 4
    %v704 = vmax.f32 %v702, %v703
    %v705 = vrot.slane %v704, 2
    %v706 = vmax.f32 %v704, %v705
    %v707 = vrot.slane %v706, 1
    %v708 = vmax.f32 %v706, %v707
    %v709 = vsel %vm589, %v530, -inf
    %v710 = vrot.slane %v709, 4
    %v711 = vmax.f32 %v709, %v710
    %v712 = vrot.slane %v711, 2
    %v713 = vmax.f32 %v711, %v712
    %v714 = vrot.slane %v713, 1
    %v715 = vmax.f32 %v713, %v714
    %v716 = vsel %vm589, %v535, -inf
    %v717 = vrot.slane %v716, 4
    %v718 = vmax.f32 %v716, %v717
    %v719 = vrot.slane %v718, 2
    %v720 = vmax.f32 %v718, %v719
    %v721 = vrot.slane %v720, 1
    %v722 = vmax.f32 %v720, %v721
    %v723 = vsel %vm589, %v538, -inf
    %v724 = vrot.slane %v723, 4
    %v725 = vmax.f32 %v723, %v724
    %v726 = vrot.slane %v725, 2
    %v727 = vmax.f32 %v725, %v726
    %v728 = vrot.slane %v727, 1
    %v729 = vmax.f32 %v727, %v728
    %v730 = vsel %vm589, %v543, -inf
    %v731 = vrot.slane %v730, 4
    %v732 = vmax.f32 %v730, %v731
    %v733 = vrot.slane %v732, 2
    %v734 = vmax.f32 %v732, %v733
    %v735 = vrot.slane %v734, 1
    %v736 = vmax.f32 %v734, %v735
    %v737 = vsel %vm589, %v546, -inf
    %v738 = vrot.slane %v737, 4
    %v739 = vmax.f32 %v737, %v738
    %v740 = vrot.slane %v739, 2
    %v741 = vmax.f32 %v739, %v740
    %v742 = vrot.slane %v741, 1
    %v743 = vmax.f32 %v741, %v742
    %v744 = vsel %vm589, %v551, -inf
    %v745 = vrot.slane %v744, 4
    %v746 = vmax.f32 %v744, %v745
    %v747 = vrot.slane %v746, 2
    %v748 = vmax.f32 %v746, %v747
    %v749 = vrot.slane %v748, 1
    %v750 = vmax.f32 %v748, %v749
    %v751 = vsel %vm589, %v554, -inf
    %v752 = vrot.slane %v751, 4
    %v753 = vmax.f32 %v751, %v752
    %v754 = vrot.slane %v753, 2
    %v755 = vmax.f32 %v753, %v754
    %v756 = vrot.slane %v755, 1
    %v757 = vmax.f32 %v755, %v756
    %v758 = vsel %vm589, %v559, -inf
    %v759 = vrot.slane %v758, 4
    %v760 = vmax.f32 %v758, %v759
    %v761 = vrot.slane %v760, 2
    %v762 = vmax.f32 %v760, %v761
    %v763 = vrot.slane %v762, 1
    %v764 = vmax.f32 %v762, %v763
    %v765 = vsel %vm589, %v562, -inf
    %v766 = vrot.slane %v765, 4
    %v767 = vmax.f32 %v765, %v766
    %v768 = vrot.slane %v767, 2
    %v769 = vmax.f32 %v767, %v768
    %v770 = vrot.slane %v769, 1
    %v771 = vmax.f32 %v769, %v770
    %v772 = vsel %vm589, %v567, -inf
    %v773 = vrot.slane %v772, 4
    %v774 = vmax.f32 %v772, %v773
    %v775 = vrot.slane %v774, 2
    %v776 = vmax.f32 %v774, %v775
    %v777 = vrot.slane %v776, 1
    %v778 = vmax.f32 %v776, %v777
    %v779 = vsel %vm589, %v570, -inf
    %v780 = vrot.slane %v779, 4
    %v781 = vmax.f32 %v779, %v780
    %v782 = vrot.slane %v781, 2
    %v783 = vmax.f32 %v781, %v782
    %v784 = vrot.slane %v783, 1
    %v785 = vmax.f32 %v783, %v784
    %v786 = vsel %vm589, %v575, -inf
    %v787 = vrot.slane %v786, 4
    %v788 = vmax.f32 %v786, %v787
    %v789 = vrot.slane %v788, 2
    %v790 = vmax.f32 %v788, %v789
    %v791 = vrot.slane %v790, 1
    %v792 = vmax.f32 %v790, %v791
    %v793 = vsel %vm589, %v578, -inf
    %v794 = vrot.slane %v793, 4
    %v795 = vmax.f32 %v793, %v794
    %v796 = vrot.slane %v795, 2
    %v797 = vmax.f32 %v795, %v796
    %v798 = vrot.slane %v797, 1
    %v799 = vmax.f32 %v797, %v798
    %v800 = vsel %vm589, %v583, -inf
    %v801 = vrot.slane %v800, 4
    %v802 = vmax.f32 %v800, %v801
    %v803 = vrot.slane %v802, 2
    %v804 = vmax.f32 %v802, %v803
    %v805 = vrot.slane %v804, 1
    %v806 = vmax.f32 %v804, %v805
    %v807 = vsel %vm589, %v586, -inf
    %v808 = vrot.slane %v807, 4
    %v809 = vmax.f32 %v807, %v808
    %v810 = vrot.slane %v809, 2
    %v811 = vmax.f32 %v809, %v810
    %v812 = vrot.slane %v811, 1
    %v813 = vmax.f32 %v811, %v812
    %v814 = vsub.f32 %v463, %v596
    %v815 = vsub.f32 %v466, %v603
    %v816 = vsub.f32 %v471, %v610
    %v817 = vsub.f32 %v474, %v617
    %v818 = vsub.f32 %v479, %v624
    %v819 = vsub.f32 %v482, %v631
    %v820 = vsub.f32 %v487, %v638
    %v821 = vsub.f32 %v490, %v645
    %v822 = vsub.f32 %v495, %v652
    %v823 = vsub.f32 %v498, %v659
    %v824 = vsub.f32 %v503, %v666
    %v825 = vsub.f32 %v506, %v673
    %v826 = vsub.f32 %v511, %v680
    %v827 = vsub.f32 %v514, %v687
    %v828 = vsub.f32 %v519, %v694
    %v829 = vsub.f32 %v522, %v701
    %v830 = vsub.f32 %v527, %v708
    %v831 = vsub.f32 %v530, %v715
    %v832 = vsub.f32 %v535, %v722
    %v833 = vsub.f32 %v538, %v729
    %v834 = vsub.f32 %v543, %v736
    %v835 = vsub.f32 %v546, %v743
    %v836 = vsub.f32 %v551, %v750
    %v837 = vsub.f32 %v554, %v757
    %v838 = vsub.f32 %v559, %v764
    %v839 = vsub.f32 %v562, %v771
    %v840 = vsub.f32 %v567, %v778
    %v841 = vsub.f32 %v570, %v785
    %v842 = vsub.f32 %v575, %v792
    %v843 = vsub.f32 %v578, %v799
    %v844 = vsub.f32 %v583, %v806
    %v845 = vsub.f32 %v586, %v813
    %v846 = vmul.f32 %v814, 1.442695
    %v847 = vpow.pop %v846
    %v848 = vmul.f32 %v815, 1.442695
    %v849 = vpow.pop %v848
    %v850 = vmul.f32 %v816, 1.442695
    %v851 = vpow.pop %v850
    %v852 = vmul.f32 %v817, 1.442695
    %v853 = vpow.pop %v852
    %v854 = vmul.f32 %v818, 1.442695
    %v855 = vpow.pop %v854
    %v856 = vmul.f32 %v819, 1.442695
    %v857 = vpow.pop %v856
    %v858 = vmul.f32 %v820, 1.442695
    %v859 = vpow.pop %v858
    %v860 = vmul.f32 %v821, 1.442695
    %v861 = vpow.pop %v860
    %v862 = vmul.f32 %v822, 1.442695
    %v863 = vpow.pop %v862
    %v864 = vmul.f32 %v823, 1.442695
    %v865 = vpow.pop %v864
    %v866 = vmul.f32 %v824, 1.442695
    %v867 = vpow.pop %v866
    %v868 = vmul.f32 %v825, 1.442695
    %v869 = vpow.pop %v868
    %v870 = vmul.f32 %v826, 1.442695
    %v871 = vpow.pop %v870
    %v872 = vmul.f32 %v827, 1.442695
    %v873 = vpow.pop %v872
    %v874 = vmul.f32 %v828, 1.442695
    %v875 = vpow.pop %v874
    %v876 = vmul.f32 %v829, 1.442695
    %v877 = vpow.pop %v876
    %v878 = vmul.f32 %v830, 1.442695
    %v879 = vpow.pop %v878
    %v880 = vmul.f32 %v831, 1.442695
    %v881 = vpow.pop %v880
    %v882 = vmul.f32 %v832, 1.442695
    %v883 = vpow.pop %v882
    %v884 = vmul.f32 %v833, 1.442695
    %v885 = vpow.pop %v884
    %v886 = vmul.f32 %v834, 1.442695
    %v887 = vpow.pop %v886
    %v888 = vmul.f32 %v835, 1.442695
    %v889 = vpow.pop %v888
    %v890 = vmul.f32 %v836, 1.442695
    %v891 = vpow.pop %v890
    %v892 = vmul.f32 %v837, 1.442695
    %v893 = vpow.pop %v892
    %v894 = vmul.f32 %v838, 1.442695
    %v895 = vpow.pop %v894
    %v896 = vmul.f32 %v839, 1.442695
    %v897 = vpow.pop %v896
    %v898 = vmul.f32 %v840, 1.442695
    %v899 = vpow.pop %v898
    %v900 = vmul.f32 %v841, 1.442695
    %v901 = vpow.pop %v900
    %v902 = vmul.f32 %v842, 1.442695
    %v903 = vpow.pop %v902
    %v904 = vmul.f32 %v843, 1.442695
    %v905 = vpow.pop %v904
    %v906 = vmul.f32 %v844, 1.442695
    %v907 = vpow.pop %v906
    %v908 = vmul.f32 %v845, 1.442695
    %v909 = vpow.pop %v908
    %v910 = vsel %vm589, %v847, 0.0
    %v911 = vrot.slane %v910, 4
    %v912 = vadd.f32 %v910, %v911
    %v913 = vrot.slane %v912, 2
    %v914 = vadd.f32 %v912, %v913
    %v915 = vrot.slane %v914, 1
    %v916 = vadd.f32 %v914, %v915
    %v917 = vsel %vm589, %v849, 0.0
    %v918 = vrot.slane %v917, 4
    %v919 = vadd.f32 %v917, %v918
    %v920 = vrot.slane %v919, 2
    %v921 = vadd.f32 %v919, %v920
    %v922 = vrot.slane %v921, 1
    %v923 = vadd.f32 %v921, %v922
    %v924 = vsel %vm589, %v851, 0.0
    %v925 = vrot.slane %v924, 4
    %v926 = vadd.f32 %v924, %v925
    %v927 = vrot.slane %v926, 2
    %v928 = vadd.f32 %v926, %v927
    %v929 = vrot.slane %v928, 1
    %v930 = vadd.f32 %v928, %v929
    %v931 = vsel %vm589, %v853, 0.0
    %v932 = vrot.slane %v931, 4
    %v933 = vadd.f32 %v931, %v932
    %v934 = vrot.slane %v933, 2
    %v935 = vadd.f32 %v933, %v934
    %v936 = vrot.slane %v935, 1
    %v937 = vadd.f32 %v935, %v936
    %v938 = vsel %vm589, %v855, 0.0
    %v939 = vrot.slane %v938, 4
    %v940 = vadd.f32 %v938, %v939
    %v941 = vrot.slane %v940, 2
    %v942 = vadd.f32 %v940, %v941
    %v943 = vrot.slane %v942, 1
    %v944 = vadd.f32 %v942, %v943
    %v945 = vsel %vm589, %v857, 0.0
    %v946 = vrot.slane %v945, 4
    %v947 = vadd.f32 %v945, %v946
    %v948 = vrot.slane %v947, 2
    %v949 = vadd.f32 %v947, %v948
    %v950 = vrot.slane %v949, 1
    %v951 = vadd.f32 %v949, %v950
    %v952 = vsel %vm589, %v859, 0.0
    %v953 = vrot.slane %v952, 4
    %v954 = vadd.f32 %v952, %v953
    %v955 = vrot.slane %v954, 2
    %v956 = vadd.f32 %v954, %v955
    %v957 = vrot.slane %v956, 1
    %v958 = vadd.f32 %v956, %v957
    %v959 = vsel %vm589, %v861, 0.0
    %v960 = vrot.slane %v959, 4
    %v961 = vadd.f32 %v959, %v960
    %v962 = vrot.slane %v961, 2
    %v963 = vadd.f32 %v961, %v962
    %v964 = vrot.slane %v963, 1
    %v965 = vadd.f32 %v963, %v964
    %v966 = vsel %vm589, %v863, 0.0
    %v967 = vrot.slane %v966, 4
    %v968 = vadd.f32 %v966, %v967
    %v969 = vrot.slane %v968, 2
    %v970 = vadd.f32 %v968, %v969
    %v971 = vrot.slane %v970, 1
    %v972 = vadd.f32 %v970, %v971
    %v973 = vsel %vm589, %v865, 0.0
    %v974 = vrot.slane %v973, 4
    %v975 = vadd.f32 %v973, %v974
    %v976 = vrot.slane %v975, 2
    %v977 = vadd.f32 %v975, %v976
    %v978 = vrot.slane %v977, 1
    %v979 = vadd.f32 %v977, %v978
    %v980 = vsel %vm589, %v867, 0.0
    %v981 = vrot.slane %v980, 4
    %v982 = vadd.f32 %v980, %v981
    %v983 = vrot.slane %v982, 2
    %v984 = vadd.f32 %v982, %v983
    %v985 = vrot.slane %v984, 1
    %v986 = vadd.f32 %v984, %v985
    %v987 = vsel %vm589, %v869, 0.0
    %v988 = vrot.slane %v987, 4
    %v989 = vadd.f32 %v987, %v988
    %v990 = vrot.slane %v989, 2
    %v991 = vadd.f32 %v989, %v990
    %v992 = vrot.slane %v991, 1
    %v993 = vadd.f32 %v991, %v992
    %v994 = vsel %vm589, %v871, 0.0
    %v995 = vrot.slane %v994, 4
    %v996 = vadd.f32 %v994, %v995
    %v997 = vrot.slane %v996, 2
    %v998 = vadd.f32 %v996, %v997
    %v999 = vrot.slane %v998, 1
    %v1000 = vadd.f32 %v998, %v999
    %v1001 = vsel %vm589, %v873, 0.0
    %v1002 = vrot.slane %v1001, 4
    %v1003 = vadd.f32 %v1001, %v1002
    %v1004 = vrot.slane %v1003, 2
    %v1005 = vadd.f32 %v1003, %v1004
    %v1006 = vrot.slane %v1005, 1
    %v1007 = vadd.f32 %v1005, %v1006
    %v1008 = vsel %vm589, %v875, 0.0
    %v1009 = vrot.slane %v1008, 4
    %v1010 = vadd.f32 %v1008, %v1009
    %v1011 = vrot.slane %v1010, 2
    %v1012 = vadd.f32 %v1010, %v1011
    %v1013 = vrot.slane %v1012, 1
    %v1014 = vadd.f32 %v1012, %v1013
    %v1015 = vsel %vm589, %v877, 0.0
    %v1016 = vrot.slane %v1015, 4
    %v1017 = vadd.f32 %v1015, %v1016
    %v1018 = vrot.slane %v1017, 2
    %v1019 = vadd.f32 %v1017, %v1018
    %v1020 = vrot.slane %v1019, 1
    %v1021 = vadd.f32 %v1019, %v1020
    %v1022 = vsel %vm589, %v879, 0.0
    %v1023 = vrot.slane %v1022, 4
    %v1024 = vadd.f32 %v1022, %v1023
    %v1025 = vrot.slane %v1024, 2
    %v1026 = vadd.f32 %v1024, %v1025
    %v1027 = vrot.slane %v1026, 1
    %v1028 = vadd.f32 %v1026, %v1027
    %v1029 = vsel %vm589, %v881, 0.0
    %v1030 = vrot.slane %v1029, 4
    %v1031 = vadd.f32 %v1029, %v1030
    %v1032 = vrot.slane %v1031, 2
    %v1033 = vadd.f32 %v1031, %v1032
    %v1034 = vrot.slane %v1033, 1
    %v1035 = vadd.f32 %v1033, %v1034
    %v1036 = vsel %vm589, %v883, 0.0
    %v1037 = vrot.slane %v1036, 4
    %v1038 = vadd.f32 %v1036, %v1037
    %v1039 = vrot.slane %v1038, 2
    %v1040 = vadd.f32 %v1038, %v1039
    %v1041 = vrot.slane %v1040, 1
    %v1042 = vadd.f32 %v1040, %v1041
    %v1043 = vsel %vm589, %v885, 0.0
    %v1044 = vrot.slane %v1043, 4
    %v1045 = vadd.f32 %v1043, %v1044
    %v1046 = vrot.slane %v1045, 2
    %v1047 = vadd.f32 %v1045, %v1046
    %v1048 = vrot.slane %v1047, 1
    %v1049 = vadd.f32 %v1047, %v1048
    %v1050 = vsel %vm589, %v887, 0.0
    %v1051 = vrot.slane %v1050, 4
    %v1052 = vadd.f32 %v1050, %v1051
    %v1053 = vrot.slane %v1052, 2
    %v1054 = vadd.f32 %v1052, %v1053
    %v1055 = vrot.slane %v1054, 1
    %v1056 = vadd.f32 %v1054, %v1055
    %v1057 = vsel %vm589, %v889, 0.0
    %v1058 = vrot.slane %v1057, 4
    %v1059 = vadd.f32 %v1057, %v1058
    %v1060 = vrot.slane %v1059, 2
    %v1061 = vadd.f32 %v1059, %v1060
    %v1062 = vrot.slane %v1061, 1
    %v1063 = vadd.f32 %v1061, %v1062
    %v1064 = vsel %vm589, %v891, 0.0
    %v1065 = vrot.slane %v1064, 4
    %v1066 = vadd.f32 %v1064, %v1065
    %v1067 = vrot.slane %v1066, 2
    %v1068 = vadd.f32 %v1066, %v1067
    %v1069 = vrot.slane %v1068, 1
    %v1070 = vadd.f32 %v1068, %v1069
    %v1071 = vsel %vm589, %v893, 0.0
    %v1072 = vrot.slane %v1071, 4
    %v1073 = vadd.f32 %v1071, %v1072
    %v1074 = vrot.slane %v1073, 2
    %v1075 = vadd.f32 %v1073, %v1074
    %v1076 = vrot.slane %v1075, 1
    %v1077 = vadd.f32 %v1075, %v1076
    %v1078 = vsel %vm589, %v895, 0.0
    %v1079 = vrot.slane %v1078, 4
    %v1080 = vadd.f32 %v1078, %v1079
    %v1081 = vrot.slane %v1080, 2
    %v1082 = vadd.f32 %v1080, %v1081
    %v1083 = vrot.slane %v1082, 1
    %v1084 = vadd.f32 %v1082, %v1083
    %v1085 = vsel %vm589, %v897, 0.0
    %v1086 = vrot.slane %v1085, 4
    %v1087 = vadd.f32 %v1085, %v1086
    %v1088 = vrot.slane %v1087, 2
    %v1089 = vadd.f32 %v1087, %v1088
    %v1090 = vrot.slane %v1089, 1
    %v1091 = vadd.f32 %v1089, %v1090
    %v1092 = vsel %vm589, %v899, 0.0
    %v1093 = vrot.slane %v1092, 4
    %v1094 = vadd.f32 %v1092, %v1093
    %v1095 = vrot.slane %v1094, 2
    %v1096 = vadd.f32 %v1094, %v1095
    %v1097 = vrot.slane %v1096, 1
    %v1098 = vadd.f32 %v1096, %v1097
    %v1099 = vsel %vm589, %v901, 0.0
    %v1100 = vrot.slane %v1099, 4
    %v1101 = vadd.f32 %v1099, %v1100
    %v1102 = vrot.slane %v1101, 2
    %v1103 = vadd.f32 %v1101, %v1102
    %v1104 = vrot.slane %v1103, 1
    %v1105 = vadd.f32 %v1103, %v1104
    %v1106 = vsel %vm589, %v903, 0.0
    %v1107 = vrot.slane %v1106, 4
    %v1108 = vadd.f32 %v1106, %v1107
    %v1109 = vrot.slane %v1108, 2
    %v1110 = vadd.f32 %v1108, %v1109
    %v1111 = vrot.slane %v1110, 1
    %v1112 = vadd.f32 %v1110, %v1111
    %v1113 = vsel %vm589, %v905, 0.0
    %v1114 = vrot.slane %v1113, 4
    %v1115 = vadd.f32 %v1113, %v1114
    %v1116 = vrot.slane %v1115, 2
    %v1117 = vadd.f32 %v1115, %v1116
    %v1118 = vrot.slane %v1117, 1
    %v1119 = vadd.f32 %v1117, %v1118
    %v1120 = vsel %vm589, %v907, 0.0
    %v1121 = vrot.slane %v1120, 4
    %v1122 = vadd.f32 %v1120, %v1121
    %v1123 = vrot.slane %v1122, 2
    %v1124 = vadd.f32 %v1122, %v1123
    %v1125 = vrot.slane %v1124, 1
    %v1126 = vadd.f32 %v1124, %v1125
    %v1127 = vsel %vm589, %v909, 0.0
    %v1128 = vrot.slane %v1127, 4
    %v1129 = vadd.f32 %v1127, %v1128
    %v1130 = vrot.slane %v1129, 2
    %v1131 = vadd.f32 %v1129, %v1130
    %v1132 = vrot.slane %v1131, 1
    %v1133 = vadd.f32 %v1131, %v1132
    %v1134 = vrcp.pop %v916
    %v1135 = vmul.f32 1.0, %v1134
    %v1136 = vrcp.pop %v923
    %v1137 = vmul.f32 1.0, %v1136
    %v1138 = vrcp.pop %v930
    %v1139 = vmul.f32 1.0, %v1138
    %v1140 = vrcp.pop %v937
    %v1141 = vmul.f32 1.0, %v1140
    %v1142 = vrcp.pop %v944
    %v1143 = vmul.f32 1.0, %v1142
    %v1144 = vrcp.pop %v951
    %v1145 = vmul.f32 1.0, %v1144
    %v1146 = vrcp.pop %v958
    %v1147 = vmul.f32 1.0, %v1146
    %v1148 = vrcp.pop %v965
    %v1149 = vmul.f32 1.0, %v1148
    %v1150 = vrcp.pop %v972
    %v1151 = vmul.f32 1.0, %v1150
    %v1152 = vrcp.pop %v979
    %v1153 = vmul.f32 1.0, %v1152
    %v1154 = vrcp.pop %v986
    %v1155 = vmul.f32 1.0, %v1154
    %v1156 = vrcp.pop %v993
    %v1157 = vmul.f32 1.0, %v1156
    %v1158 = vrcp.pop %v1000
    %v1159 = vmul.f32 1.0, %v1158
    %v1160 = vrcp.pop %v1007
    %v1161 = vmul.f32 1.0, %v1160
    %v1162 = vrcp.pop %v1014
    %v1163 = vmul.f32 1.0, %v1162
    %v1164 = vrcp.pop %v1021
    %v1165 = vmul.f32 1.0, %v1164
    %v1166 = vrcp.pop %v1028
    %v1167 = vmul.f32 1.0, %v1166
    %v1168 = vrcp.pop %v1035
    %v1169 = vmul.f32 1.0, %v1168
    %v1170 = vrcp.pop %v1042
    %v1171 = vmul.f32 1.0, %v1170
    %v1172 = vrcp.pop %v1049
    %v1173 = vmul.f32 1.0, %v1172
    %v1174 = vrcp.pop %v1056
    %v1175 = vmul.f32 1.0, %v1174
    %v1176 = vrcp.pop %v1063
    %v1177 = vmul.f32 1.0, %v1176
    %v1178 = vrcp.pop %v1070
    %v1179 = vmul.f32 1.0, %v1178
    %v1180 = vrcp.pop %v1077
    %v1181 = vmul.f32 1.0, %v1180
    %v1182 = vrcp.pop %v1084
    %v1183 = vmul.f32 1.0, %v1182
    %v1184 = vrcp.pop %v1091
    %v1185 = vmul.f32 1.0, %v1184
    %v1186 = vrcp.pop %v1098
    %v1187 = vmul.f32 1.0, %v1186
    %v1188 = vrcp.pop %v1105
    %v1189 = vmul.f32 1.0, %v1188
    %v1190 = vrcp.pop %v1112
    %v1191 = vmul.f32 1.0, %v1190
    %v1192 = vrcp.pop %v1119
    %v1193 = vmul.f32 1.0, %v1192
    %v1194 = vrcp.pop %v1126
    %v1195 = vmul.f32 1.0, %v1194
    %v1196 = vrcp.pop %v1133
    %v1197 = vmul.f32 1.0, %v1196
    %v1198 = vmul.f32 %v847, %v1135
    %v1199 = vmul.f32 %v849, %v1137
    %v1200 = vmul.f32 %v851, %v1139
    %v1201 = vmul.f32 %v853, %v1141
    %v1202 = vmul.f32 %v855, %v1143
    %v1203 = vmul.f32 %v857, %v1145
    %v1204 = vmul.f32 %v859, %v1147
    %v1205 = vmul.f32 %v861, %v1149
    %v1206 = vmul.f32 %v863, %v1151
    %v1207 = vmul.f32 %v865, %v1153
    %v1208 = vmul.f32 %v867, %v1155
    %v1209 = vmul.f32 %v869, %v1157
    %v1210 = vmul.f32 %v871, %v1159
    %v1211 = vmul.f32 %v873, %v1161
    %v1212 = vmul.f32 %v875, %v1163
    %v1213 = vmul.f32 %v877, %v1165
    %v1214 = vmul.f32 %v879, %v1167
    %v1215 = vmul.f32 %v881, %v1169
    %v1216 = vmul.f32 %v883, %v1171
    %v1217 = vmul.f32 %v885, %v1173
    %v1218 = vmul.f32 %v887, %v1175
    %v1219 = vmul.f32 %v889, %v1177
    %v1220 = vmul.f32 %v891, %v1179
    %v1221 = vmul.f32 %v893, %v1181
    %v1222 = vmul.f32 %v895, %v1183
    %v1223 = vmul.f32 %v897, %v1185
    %v1224 = vmul.f32 %v899, %v1187
    %v1225 = vmul.f32 %v901, %v1189
    %v1226 = vmul.f32 %v903, %v1191
    %v1227 = vmul.f32 %v905, %v1193
    %v1228 = vmul.f32 %v907, %v1195
    %v1229 = vmul.f32 %v909, %v1197
    %1230 = vst.msk [vmem:[%s5] sm:$0xff] %vm589, %v1198
    %1231 = vst.msk [vmem:[%s5 + $0x8] sm:$0xff] %vm589, %v1199
    %1232 = vst.msk [vmem:[%s5 + $0x10] sm:$0xff] %vm589, %v1200
    %1233 = vst.msk [vmem:[%s5 + $0x18] sm:$0xff] %vm589, %v1201
    %1234 = vst.msk [vmem:[%s5 + $0x20] sm:$0xff] %vm589, %v1202
    %1235 = vst.msk [vmem:[%s5 + $0x28] sm:$0xff] %vm589, %v1203
    %1236 = vst.msk [vmem:[%s5 + $0x30] sm:$0xff] %vm589, %v1204
    %1237 = vst.msk [vmem:[%s5 + $0x38] sm:$0xff] %vm589, %v1205
    %1238 = vst.msk [vmem:[%s5 + $0x40] sm:$0xff] %vm589, %v1206
    %1239 = vst.msk [vmem:[%s5 + $0x48] sm:$0xff] %vm589, %v1207
    %1240 = vst.msk [vmem:[%s5 + $0x50] sm:$0xff] %vm589, %v1208
    %1241 = vst.msk [vmem:[%s5 + $0x58] sm:$0xff] %vm589, %v1209
    %1242 = vst.msk [vmem:[%s5 + $0x60] sm:$0xff] %vm589, %v1210
    %1243 = vst.msk [vmem:[%s5 + $0x68] sm:$0xff] %vm589, %v1211
    %1244 = vst.msk [vmem:[%s5 + $0x70] sm:$0xff] %vm589, %v1212
    %1245 = vst.msk [vmem:[%s5 + $0x78] sm:$0xff] %vm589, %v1213
    %1246 = vst.msk [vmem:[%s5 + $0x80] sm:$0xff] %vm589, %v1214
    %1247 = vst.msk [vmem:[%s5 + $0x88] sm:$0xff] %vm589, %v1215
    %1248 = vst.msk [vmem:[%s5 + $0x90] sm:$0xff] %vm589, %v1216
    %1249 = vst.msk [vmem:[%s5 + $0x98] sm:$0xff] %vm589, %v1217
    %1250 = vst.msk [vmem:[%s5 + $0xa0] sm:$0xff] %vm589, %v1218
    %1251 = vst.msk [vmem:[%s5 + $0xa8] sm:$0xff] %vm589, %v1219
    %1252 = vst.msk [vmem:[%s5 + $0xb0] sm:$0xff] %vm589, %v1220
    %1253 = vst.msk [vmem:[%s5 + $0xb8] sm:$0xff] %vm589, %v1221
    %1254 = vst.msk [vmem:[%s5 + $0xc0] sm:$0xff] %vm589, %v1222
    %1255 = vst.msk [vmem:[%s5 + $0xc8] sm:$0xff] %vm589, %v1223
    %1256 = vst.msk [vmem:[%s5 + $0xd0] sm:$0xff] %vm589, %v1224
    %1257 = vst.msk [vmem:[%s5 + $0xd8] sm:$0xff] %vm589, %v1225
    %1258 = vst.msk [vmem:[%s5 + $0xe0] sm:$0xff] %vm589, %v1226
    %1259 = vst.msk [vmem:[%s5 + $0xe8] sm:$0xff] %vm589, %v1227
    %1260 = vst.msk [vmem:[%s5 + $0xf0] sm:$0xff] %vm589, %v1228
    %1261 = vst.msk [vmem:[%s5 + $0xf8] sm:$0xff] %vm589, %v1229
    // Predicated region
    $region26: #{tpu_custom_call.1} parent=1 // pred_check
      _
    $region27: #{tpu_custom_call.1} parent=1 // pred_check_branch
      %1263 = sbr.rel (0) target = $region29
    $region28: #{tpu_custom_call.1} parent=1 // pred_region
      _
    $region29: #{tpu_custom_call.1} parent=1 // pred_fallthru
      _
    // Predicated region
    $region30: #{tpu_custom_call.1} parent=1 // pred_check
      _
    $region31: #{tpu_custom_call.1} parent=1 // pred_check_branch
      %1265 = sbr.rel (0) target = $region33
    $region32: #{tpu_custom_call.1} parent=1 // pred_region
      _
    $region33: #{tpu_custom_call.1} parent=1 // pred_fallthru
      _
    %1266 = vsyncpa [#allocation3], 1

</llo_original>
